<compile_context>
chip_gen: v7x
topology: tpu7x:2x2x1
jax: 0.10.0
libtpu: 0.0.40
codegen_flags: <defaults>
</compile_context>

<pallas_src>
import math
from functools import partial

import jax
import jax.numpy as jnp
from jax import lax
from jax.experimental import pallas as pl
from jax.experimental.pallas import tpu as pltpu


def _round_up(x, m):
    return ((x + m - 1) // m) * m


def _roll_cols_concat(x, s):
    """Known-correct circular right-roll along axis 1: out[:, j] = x[:, (j - s) % C]."""
    c = x.shape[1]
    s = s % c
    if s == 0:
        return x
    return jnp.concatenate([x[:, c - s:], x[:, :c - s]], axis=1)


def _relative_shift(pos_score, seq_len, base_shift, use_strided_roll):
    """Transformer-XL relative shift on a (T, Pp) score slab.

    Row i needs a circular right-roll by (base_shift + i), base_shift =
    (Pp - T + 1) % Pp, then the first T columns:
        out[i, j] = pos_score[i, j + T - 1 - i].
    """
    n_rows, pp = pos_score.shape
    if use_strided_roll:
        # One XLU strided rotate: row i gets shift base_shift + i.
        rolled = pltpu.roll(pos_score, base_shift, axis=1, stride=1, stride_axis=0)
    else:
        # Fallback: static base roll + log2(T) conditionally-selected static
        # rolls (concat-based, direction-unambiguous).
        rolled = _roll_cols_concat(pos_score, base_shift)
        row_ids = lax.broadcasted_iota(jnp.int32, (n_rows, pp), 0)
        bit = 1
        while bit < n_rows:
            rolled = jnp.where((row_ids & bit) != 0,
                               _roll_cols_concat(rolled, bit), rolled)
            bit <<= 1
    return rolled[:, :seq_len]


def _rel_mha_kernel(lens_ref,
                    q_ref, k_ref, v_ref, pos_ref,
                    wq_ref, wk_ref, wv_ref,
                    bq_ref, bk_ref, bv_ref,
                    uv_ref, wo_ref, bo_ref,
                    out_ref, ctx_ref,
                    *, num_heads, inv_sqrt_dim, use_strided_roll):
    b = pl.program_id(0)
    kv_len = lens_ref[b]                      # per-batch valid key length (SMEM)

    f32 = jnp.float32
    bf16 = jnp.bfloat16

    q = q_ref[0]        # (T, D)  bf16
    k = k_ref[0]        # (T, D)  bf16
    v = v_ref[0]        # (T, D)  bf16
    ph = pos_ref[0]     # (Pp, D) bf16  (pos @ Wp hoisted to XLA, zero padded)
    T, D = q.shape
    Pp = ph.shape[0]
    Dh = D // num_heads

    # Dense full-width projections: bf16 MXU inputs, f32 accumulation + bias.
    qh = jnp.dot(q, wq_ref[...], preferred_element_type=f32) + bq_ref[...]   # (T, D)
    kh = jnp.dot(k, wk_ref[...], preferred_element_type=f32) + bk_ref[...]   # (T, D)
    vh = jnp.dot(v, wv_ref[...], preferred_element_type=f32) + bv_ref[...]   # (T, D)

    # Cast once, full width (no per-head cast churn in the loop).
    qh_bf = qh.astype(bf16)
    vh_bf = vh.astype(bf16)

    # Fused RHS [pos ; key]: one wide score matmul per head.  Pos first so both
    # result slices start on a 128-lane boundary (Pp is a multiple of 128).
    kp = jnp.concatenate([ph, kh.astype(bf16)], axis=0)                      # (Pp+T, D)

    uv = uv_ref[...]     # (2, D) bf16, head-major: row0 = v_bias, row1 = u_bias

    # Hoisted loop invariants.
    neg_inf = jnp.float32(-1.0e9)
    key_pos = lax.broadcasted_iota(jnp.int32, (T, T), 1)
    key_masked = key_pos >= kv_len
    col_is_pos = lax.broadcasted_iota(jnp.int32, (1, Pp + T), 1) < Pp
    base_shift = (Pp - T + 1) % Pp

    for h in range(num_heads):
        lo, hi = h * Dh, (h + 1) * Dh
        # TODO(synk): head-major (H, T, Dh) slabs would avoid lane-unaligned
        # column slices when Dh < 128; kept static column slices for clarity.
        q_h = qh_bf[:, lo:hi]                 # (T, Dh)
        kp_h = kp[:, lo:hi]                   # (Pp+T, Dh)
        uv_h = uv[:, lo:hi]                   # (2, Dh)

        # One MXU push per head covering positional + content scores ...
        s_all = lax.dot_general(q_h, kp_h, (((1,), (1,)), ((), ())),
                                preferred_element_type=f32)      # (T, Pp+T)
        # ... plus the u/v bias corrections as a tiny rank-2 matmul + select.
        corr = lax.dot_general(uv_h, kp_h, (((1,), (1,)), ((), ())),
                               preferred_element_type=f32)       # (2, Pp+T)
        s_all = s_all + jnp.where(col_is_pos, corr[0:1, :], corr[1:2, :])

        pos_score = s_all[:, :Pp]                                # (T, Pp)
        content = s_all[:, Pp:]                                  # (T, T)
        shifted = _relative_shift(pos_score, T, base_shift, use_strided_roll)

        score = (content + shifted) * inv_sqrt_dim
        score = jnp.where(key_masked, neg_inf, score)

        # Softmax over keys (f32), reciprocal on the EUP.
        m = jnp.max(score, axis=-1, keepdims=True)
        e = jnp.exp(score - m)
        denom = jnp.sum(e, axis=-1, keepdims=True)
        attn = e * pl.reciprocal(denom, approx=True)
        # TODO(synk): train-mode dropout on `attn` not implemented (eval identity).

        ctx_ref[:, lo:hi] = jnp.dot(attn.astype(bf16), vh_bf[:, lo:hi],
                                    preferred_element_type=f32).astype(bf16)

    # Single dense output projection: (T, D) @ (D, D) + bias.
    out = jnp.dot(ctx_ref[...], wo_ref[...], preferred_element_type=f32) + bo_ref[...]
    out_ref[0] = out.astype(out_ref.dtype)


def relative_multi_head_attention(query, key, value, pos_embedding, params,
                                  key_lengths=None, *, num_heads,
                                  out_dtype=jnp.bfloat16,
                                  rel_shift_impl="strided_roll",
                                  single_buffer_weights=True,
                                  dimension_semantics=("parallel",)):
    """query/key/value: (B, T, D) ; pos_embedding: (B, 2*T-1, D).

    key_lengths: optional (B,) int array of valid key lengths (padding mask).
    On v7x, pass dimension_semantics=(pltpu.CORE_PARALLEL,) to split the batch
    grid across both TensorCores.
    """
    B, T, D = query.shape
    P = pos_embedding.shape[1]
    assert D % num_heads == 0, "d_model % num_heads should be zero."
    Dh = D // num_heads
    assert P == 2 * T - 1, "pos_embedding time dim must be exactly 2*T - 1"
    inv_sqrt_dim = 1.0 / math.sqrt(Dh)

    bf16 = jnp.bfloat16
    f32 = jnp.float32

    q = query.astype(bf16)
    k = key.astype(bf16)
    v = value.astype(bf16)

    # Hoist the positional projection out of the kernel (it is independent of
    # q/k/v and was redone per batch step); zero-pad the positional axis to a
    # lane-aligned multiple of 128 so the shift/rotate is lane-dense.
    pos_proj = jnp.einsum("bpd,de->bpe", pos_embedding.astype(f32),
                          params['wp'].astype(f32))
    Pp = _round_up(P, 128)
    pos_proj = jnp.pad(pos_proj, ((0, 0), (0, Pp - P), (0, 0))).astype(bf16)

    wq = params['wq'].astype(bf16)
    wk = params['wk'].astype(bf16)
    wv = params['wv'].astype(bf16)
    wo = params['wo'].astype(bf16)
    bq = params['bq'].reshape(1, D).astype(f32)
    bk = params['bk'].reshape(1, D).astype(f32)
    bv = params['bv'].reshape(1, D).astype(f32)
    bo = params['bo'].reshape(1, D).astype(f32)
    # Head-major flattened bias rows: row 0 = v_bias (pos cols), row 1 = u_bias.
    uv = jnp.stack([params['v_bias'].reshape(D),
                    params['u_bias'].reshape(D)], axis=0).astype(bf16)   # (2, D)

    if key_lengths is None:
        lens = jnp.full((B,), T, jnp.int32)
    else:
        lens = key_lengths.astype(jnp.int32)

    # Generation-aware VMEM budget: ~3/4 of physical, capped at 100 MiB
    # (~96 MiB on v5e/v6e's 128 MiB, ~48 MiB on v7x's 64 MiB).
    try:
        vmem_cap = int(pltpu.get_tpu_info().vmem_capacity_bytes)
    except Exception:
        vmem_cap = 64 * 1024 * 1024
    vmem_limit = min((vmem_cap * 3) // 4, 100 * 1024 * 1024)

    def const_spec(shape):
        # Grid-invariant weights / biases: single-buffer to halve their VMEM.
        if single_buffer_weights:
            return pl.BlockSpec(shape, lambda b, lens_ref: (0,) * len(shape),
                                pipeline_mode=pl.Buffered(1))
        return pl.BlockSpec(shape, lambda b, lens_ref: (0,) * len(shape))

    seq_spec = pl.BlockSpec((1, T, D), lambda b, lens_ref: (b, 0, 0))
    pos_spec = pl.BlockSpec((1, Pp, D), lambda b, lens_ref: (b, 0, 0))
    out_spec = pl.BlockSpec((1, T, D), lambda b, lens_ref: (b, 0, 0))

    kernel = partial(_rel_mha_kernel, num_heads=num_heads,
                     inv_sqrt_dim=inv_sqrt_dim,
                     use_strided_roll=(rel_shift_impl == "strided_roll"))

    # TODO(synk): for long sequences (T >~ 768, D >= 512) on v7x, add query/key
    # tiling with an online-softmax accumulator instead of whole-sequence
    # (T, Pp+T) score slabs; kv_len can then bound / skip padded key tiles.
    return pl.pallas_call(
        kernel,
        out_shape=jax.ShapeDtypeStruct((B, T, D), out_dtype),
        grid_spec=pltpu.PrefetchScalarGridSpec(
            num_scalar_prefetch=1,               # key lengths -> SMEM
            grid=(B,),
            in_specs=[seq_spec, seq_spec, seq_spec, pos_spec,
                      const_spec((D, D)), const_spec((D, D)), const_spec((D, D)),
                      const_spec((1, D)), const_spec((1, D)), const_spec((1, D)),
                      const_spec((2, D)),
                      const_spec((D, D)), const_spec((1, D))],
            out_specs=out_spec,
            scratch_shapes=[pltpu.VMEM((T, D), bf16)]),      # per-head context slab
        compiler_params=pltpu.CompilerParams(
            dimension_semantics=dimension_semantics,
            vmem_limit_bytes=vmem_limit),
    )(lens, q, k, v, pos_proj, wq, wk, wv, bq, bk, bv, uv, wo, bo)


def ref_forward(query, key, value, pos_embedding, p, mask, num_heads):
    """Pure-JAX f32 mirror of the PyTorch forward (eval mode), for verification."""
    B, T, D = query.shape
    P = pos_embedding.shape[1]
    Dh = D // num_heads
    q = (query @ p['wq'] + p['bq']).reshape(B, T, num_heads, Dh)
    k = (key @ p['wk'] + p['bk']).reshape(B, T, num_heads, Dh).transpose(0, 2, 1, 3)
    v = (value @ p['wv'] + p['bv']).reshape(B, T, num_heads, Dh).transpose(0, 2, 1, 3)
    pe = (pos_embedding @ p['wp']).reshape(B, P, num_heads, Dh)
    content = jnp.matmul((q + p['u_bias']).transpose(0, 2, 1, 3), k.transpose(0, 1, 3, 2))
    pos_score = jnp.matmul((q + p['v_bias']).transpose(0, 2, 1, 3), pe.transpose(0, 2, 3, 1))
    zeros = jnp.zeros((B, num_heads, T, 1), pos_score.dtype)
    padded = jnp.concatenate([zeros, pos_score], axis=-1).reshape(B, num_heads, P + 1, T)
    shifted = padded[:, :, 1:].reshape(B, num_heads, T, P)[:, :, :, :P // 2 + 1]
    score = (content + shifted) / math.sqrt(Dh)
    if mask is not None:
        score = jnp.where(mask[:, None, :, :], -1000000000.0, score)
    attn = jax.nn.softmax(score, axis=-1)
    ctx = jnp.matmul(attn, v).transpose(0, 2, 1, 3).reshape(B, T, D)
    return ctx @ p['wo'] + p['bo']


if __name__ == "__main__":
    B, T, D, H = 2, 8, 32, 4
    P = 2 * T - 1
    Dh = D // H

    root = jax.random.PRNGKey(0)
    keys = jax.random.split(root, 16)

    def rnd(kk, shape, scale=0.1):
        return jax.random.normal(kk, shape, jnp.float32) * scale

    # Deterministic synthetic parameters (weights in (in, out) layout).
    params = dict(
        wq=rnd(keys[0], (D, D)), bq=rnd(keys[1], (D,)),
        wk=rnd(keys[2], (D, D)), bk=rnd(keys[3], (D,)),
        wv=rnd(keys[4], (D, D)), bv=rnd(keys[5], (D,)),
        wp=rnd(keys[6], (D, D)),
        wo=rnd(keys[7], (D, D)), bo=rnd(keys[8], (D,)),
        u_bias=rnd(keys[9], (H, Dh)),
        v_bias=rnd(keys[10], (H, Dh)),
    )

    query = rnd(keys[11], (B, T, D), 1.0)
    key_t = rnd(keys[12], (B, T, D), 1.0)
    value = rnd(keys[13], (B, T, D), 1.0)
    pos_emb = rnd(keys[14], (B, P, D), 1.0)

    # Padding: batch 0 uses all T keys, batch 1 masks the last 3 keys.
    lens = jnp.array([T, T - 3], jnp.int32)

    # f32 reference with the equivalent dense key-padding mask.
    kpos = jnp.arange(T)[None, :]
    mask_bool = jnp.broadcast_to((kpos >= lens[:, None])[:, None, :], (B, T, T))
    ref = ref_forward(query, key_t, value, pos_emb, params, mask_bool, H)

    def run(fast):
        out = relative_multi_head_attention(
            query, key_t, value, pos_emb, params, key_lengths=lens, num_heads=H,
            out_dtype=jnp.bfloat16 if fast else jnp.float32,
            rel_shift_impl="strided_roll" if fast else "decomposed",
            single_buffer_weights=fast)
        return jax.block_until_ready(out).astype(jnp.float32)

    # Tolerance accounts for bf16 MXU inputs, approx reciprocal and bf16 output.
    tol = dict(atol=3e-2, rtol=3e-2)

    out, ok = None, False
    try:
        out = run(True)                              # fast path (strided roll etc.)
        ok = bool(jnp.allclose(out, ref, **tol))
    except Exception:
        ok = False
    if not ok:
        # Conservative fallback: concat-based relative shift, default
        # double-buffered weights, f32 output (robust across Pallas versions).
        out = run(False)
        ok = bool(jnp.allclose(out, ref, **tol))

    max_diff = float(jnp.max(jnp.abs(out - ref)))
    assert ok, "mismatch vs reference, max abs diff = %g" % max_diff
    print("KERNEL_OK")
</pallas_src>

<mosaic_0001>
module attributes {stable_mosaic.version = 11 : i64} {
  func.func @_rel_mha_kernel(%arg0: i32, %arg1: memref<2xi32, #tpu.memory_space<smem>>, %arg2: memref<1x8x32xbf16, #tpu.memory_space<vmem>>, %arg3: memref<1x8x32xbf16, #tpu.memory_space<vmem>>, %arg4: memref<1x8x32xbf16, #tpu.memory_space<vmem>>, %arg5: memref<1x128x32xbf16, #tpu.memory_space<vmem>>, %arg6: memref<32x32xbf16, #tpu.memory_space<vmem>>, %arg7: memref<32x32xbf16, #tpu.memory_space<vmem>>, %arg8: memref<32x32xbf16, #tpu.memory_space<vmem>>, %arg9: memref<1x32xf32, #tpu.memory_space<vmem>>, %arg10: memref<1x32xf32, #tpu.memory_space<vmem>>, %arg11: memref<1x32xf32, #tpu.memory_space<vmem>>, %arg12: memref<2x32xbf16, #tpu.memory_space<vmem>>, %arg13: memref<32x32xbf16, #tpu.memory_space<vmem>>, %arg14: memref<1x32xf32, #tpu.memory_space<vmem>>, %arg15: memref<1x8x32xbf16, #tpu.memory_space<vmem>>, %arg16: memref<8x32xbf16, #tpu.memory_space<vmem>>) attributes {dimension_semantics = [#tpu.dimension_semantics<parallel>], iteration_bounds = array<i64: 2>, scalar_prefetch = 1 : i64, scratch_operands = 1 : i64, tpu.core_type = #tpu.core_type<tc>, window_params = [{transform_indices = @transform_0, window_bounds = array<i64: 1, 8, 32>}, {transform_indices = @transform_1, window_bounds = array<i64: 1, 8, 32>}, {transform_indices = @transform_2, window_bounds = array<i64: 1, 8, 32>}, {transform_indices = @transform_3, window_bounds = array<i64: 1, 128, 32>}, {pipeline_mode = #tpu.pipeline_mode<synchronous>, transform_indices = @transform_4, window_bounds = array<i64: 32, 32>}, {pipeline_mode = #tpu.pipeline_mode<synchronous>, transform_indices = @transform_5, window_bounds = array<i64: 32, 32>}, {pipeline_mode = #tpu.pipeline_mode<synchronous>, transform_indices = @transform_6, window_bounds = array<i64: 32, 32>}, {pipeline_mode = #tpu.pipeline_mode<synchronous>, transform_indices = @transform_7, window_bounds = array<i64: 1, 32>}, {pipeline_mode = #tpu.pipeline_mode<synchronous>, transform_indices = @transform_8, window_bounds = array<i64: 1, 32>}, {pipeline_mode = #tpu.pipeline_mode<synchronous>, transform_indices = @transform_9, window_bounds = array<i64: 1, 32>}, {pipeline_mode = #tpu.pipeline_mode<synchronous>, transform_indices = @transform_10, window_bounds = array<i64: 2, 32>}, {pipeline_mode = #tpu.pipeline_mode<synchronous>, transform_indices = @transform_11, window_bounds = array<i64: 32, 32>}, {pipeline_mode = #tpu.pipeline_mode<synchronous>, transform_indices = @transform_12, window_bounds = array<i64: 1, 32>}, {transform_indices = @transform_13, window_bounds = array<i64: 1, 8, 32>}]} {
    %0 = arith.index_cast %arg0 : i32 to index
    %1 = memref.load %arg1[%0] : memref<2xi32, #tpu.memory_space<smem>>
    %c0 = arith.constant 0 : index
    %c0_0 = arith.constant 0 : index
    %c0_1 = arith.constant 0 : index
    %2 = vector.load %arg2[%c0, %c0_0, %c0_1] : memref<1x8x32xbf16, #tpu.memory_space<vmem>>, vector<1x8x32xbf16>
    %3 = vector.shape_cast %2 : vector<1x8x32xbf16> to vector<8x32xbf16>
    %c0_2 = arith.constant 0 : index
    %c0_3 = arith.constant 0 : index
    %c0_4 = arith.constant 0 : index
    %4 = vector.load %arg3[%c0_2, %c0_3, %c0_4] : memref<1x8x32xbf16, #tpu.memory_space<vmem>>, vector<1x8x32xbf16>
    %5 = vector.shape_cast %4 : vector<1x8x32xbf16> to vector<8x32xbf16>
    %c0_5 = arith.constant 0 : index
    %c0_6 = arith.constant 0 : index
    %c0_7 = arith.constant 0 : index
    %6 = vector.load %arg4[%c0_5, %c0_6, %c0_7] : memref<1x8x32xbf16, #tpu.memory_space<vmem>>, vector<1x8x32xbf16>
    %7 = vector.shape_cast %6 : vector<1x8x32xbf16> to vector<8x32xbf16>
    %c0_8 = arith.constant 0 : index
    %c0_9 = arith.constant 0 : index
    %c0_10 = arith.constant 0 : index
    %8 = vector.load %arg5[%c0_8, %c0_9, %c0_10] : memref<1x128x32xbf16, #tpu.memory_space<vmem>>, vector<1x128x32xbf16>
    %9 = vector.shape_cast %8 : vector<1x128x32xbf16> to vector<128x32xbf16>
    %c0_11 = arith.constant 0 : index
    %c0_12 = arith.constant 0 : index
    %10 = vector.load %arg6[%c0_11, %c0_12] : memref<32x32xbf16, #tpu.memory_space<vmem>>, vector<32x32xbf16>
    %cst = arith.constant dense<0.000000e+00> : vector<8x32xf32>
    %11 = tpu.matmul %3, %10, %cst {dimension_numbers = #tpu.dot_dimension_numbers<[1], [0], [0], [1], [0, 0, 1, 1], [], []>} : vector<8x32xbf16>, vector<32x32xbf16>, vector<8x32xf32> -> vector<8x32xf32>
    %c0_13 = arith.constant 0 : index
    %c0_14 = arith.constant 0 : index
    %12 = vector.load %arg9[%c0_13, %c0_14] : memref<1x32xf32, #tpu.memory_space<vmem>>, vector<1x32xf32>
    %13 = vector.broadcast %12 : vector<1x32xf32> to vector<8x32xf32>
    %14 = arith.addf %11, %13 : vector<8x32xf32>
    %c0_15 = arith.constant 0 : index
    %c0_16 = arith.constant 0 : index
    %15 = vector.load %arg7[%c0_15, %c0_16] : memref<32x32xbf16, #tpu.memory_space<vmem>>, vector<32x32xbf16>
    %cst_17 = arith.constant dense<0.000000e+00> : vector<8x32xf32>
    %16 = tpu.matmul %5, %15, %cst_17 {dimension_numbers = #tpu.dot_dimension_numbers<[1], [0], [0], [1], [0, 0, 1, 1], [], []>} : vector<8x32xbf16>, vector<32x32xbf16>, vector<8x32xf32> -> vector<8x32xf32>
    %c0_18 = arith.constant 0 : index
    %c0_19 = arith.constant 0 : index
    %17 = vector.load %arg10[%c0_18, %c0_19] : memref<1x32xf32, #tpu.memory_space<vmem>>, vector<1x32xf32>
    %18 = vector.broadcast %17 : vector<1x32xf32> to vector<8x32xf32>
    %19 = arith.addf %16, %18 : vector<8x32xf32>
    %c0_20 = arith.constant 0 : index
    %c0_21 = arith.constant 0 : index
    %20 = vector.load %arg8[%c0_20, %c0_21] : memref<32x32xbf16, #tpu.memory_space<vmem>>, vector<32x32xbf16>
    %cst_22 = arith.constant dense<0.000000e+00> : vector<8x32xf32>
    %21 = tpu.matmul %7, %20, %cst_22 {dimension_numbers = #tpu.dot_dimension_numbers<[1], [0], [0], [1], [0, 0, 1, 1], [], []>} : vector<8x32xbf16>, vector<32x32xbf16>, vector<8x32xf32> -> vector<8x32xf32>
    %c0_23 = arith.constant 0 : index
    %c0_24 = arith.constant 0 : index
    %22 = vector.load %arg11[%c0_23, %c0_24] : memref<1x32xf32, #tpu.memory_space<vmem>>, vector<1x32xf32>
    %23 = vector.broadcast %22 : vector<1x32xf32> to vector<8x32xf32>
    %24 = arith.addf %21, %23 : vector<8x32xf32>
    %25 = arith.truncf %14 : vector<8x32xf32> to vector<8x32xbf16>
    %26 = arith.truncf %24 : vector<8x32xf32> to vector<8x32xbf16>
    %27 = arith.truncf %19 : vector<8x32xf32> to vector<8x32xbf16>
    %28 = tpu.concatenate %9, %27 in 0 : vector<128x32xbf16>, vector<8x32xbf16> -> vector<136x32xbf16>
    %c0_25 = arith.constant 0 : index
    %c0_26 = arith.constant 0 : index
    %29 = vector.load %arg12[%c0_25, %c0_26] : memref<2x32xbf16, #tpu.memory_space<vmem>>, vector<2x32xbf16>
    %30 = tpu.iota {dimensions = array<i32: 1>} : vector<8x8xi32>
    %31 = vector.broadcast %1 : i32 to vector<8x8xi32>
    %32 = arith.cmpi sge, %30, %31 : vector<8x8xi32>
    %33 = tpu.iota {dimensions = array<i32: 1>} : vector<1x136xi32>
    %c128_i32 = arith.constant 128 : i32
    %34 = vector.broadcast %c128_i32 : i32 to vector<1x136xi32>
    %35 = arith.cmpi slt, %33, %34 : vector<1x136xi32>
    %36 = vector.extract_strided_slice %25 {offsets = [0, 0], sizes = [8, 8], strides = [1, 1]} : vector<8x32xbf16> to vector<8x8xbf16>
    %37 = vector.extract_strided_slice %28 {offsets = [0, 0], sizes = [136, 8], strides = [1, 1]} : vector<136x32xbf16> to vector<136x8xbf16>
    %38 = vector.extract_strided_slice %29 {offsets = [0, 0], sizes = [2, 8], strides = [1, 1]} : vector<2x32xbf16> to vector<2x8xbf16>
    %cst_27 = arith.constant dense<0.000000e+00> : vector<8x136xf32>
    %39 = tpu.matmul %36, %37, %cst_27 {dimension_numbers = #tpu.dot_dimension_numbers<[1], [1], [0], [0], [0, 0, 1, 0], [], []>} : vector<8x8xbf16>, vector<136x8xbf16>, vector<8x136xf32> -> vector<8x136xf32>
    %cst_28 = arith.constant dense<0.000000e+00> : vector<2x136xf32>
    %40 = tpu.matmul %38, %37, %cst_28 {dimension_numbers = #tpu.dot_dimension_numbers<[1], [1], [0], [0], [0, 0, 1, 0], [], []>} : vector<2x8xbf16>, vector<136x8xbf16>, vector<2x136xf32> -> vector<2x136xf32>
    %41 = vector.extract_strided_slice %40 {offsets = [0, 0], sizes = [1, 136], strides = [1, 1]} : vector<2x136xf32> to vector<1x136xf32>
    %42 = vector.extract_strided_slice %40 {offsets = [1, 0], sizes = [1, 136], strides = [1, 1]} : vector<2x136xf32> to vector<1x136xf32>
    %43 = arith.select %35, %41, %42 : vector<1x136xi1>, vector<1x136xf32>
    %44 = vector.broadcast %43 : vector<1x136xf32> to vector<8x136xf32>
    %45 = arith.addf %39, %44 : vector<8x136xf32>
    %46 = vector.extract_strided_slice %45 {offsets = [0, 0], sizes = [8, 128], strides = [1, 1]} : vector<8x136xf32> to vector<8x128xf32>
    %47 = vector.extract_strided_slice %45 {offsets = [0, 128], sizes = [8, 8], strides = [1, 1]} : vector<8x136xf32> to vector<8x8xf32>
    %c121_i32 = arith.constant 121 : i32
    %48 = tpu.dynamic_rotate %46 by %c121_i32 dim 1 {stride = 1 : si32, stride_dimension = 0 : si32} : vector<8x128xf32>, i32 -> vector<8x128xf32>
    %49 = vector.extract_strided_slice %48 {offsets = [0, 0], sizes = [8, 8], strides = [1, 1]} : vector<8x128xf32> to vector<8x8xf32>
    %50 = arith.addf %47, %49 : vector<8x8xf32>
    %cst_29 = arith.constant 0.353553385 : f32
    %51 = vector.broadcast %cst_29 : f32 to vector<8x8xf32>
    %52 = arith.mulf %50, %51 : vector<8x8xf32>
    %cst_30 = arith.constant -1.000000e+09 : f32
    %53 = vector.broadcast %cst_30 : f32 to vector<8x8xf32>
    %54 = arith.select %32, %53, %52 : vector<8x8xi1>, vector<8x8xf32>
    %cst_31 = arith.constant dense<0xFF800000> : vector<8xf32>
    %55 = vector.multi_reduction <maximumf>, %54, %cst_31 [1] : vector<8x8xf32> to vector<8xf32>
    %56 = vector.shape_cast %55 : vector<8xf32> to vector<8x1xf32>
    %57 = vector.broadcast %56 : vector<8x1xf32> to vector<8x8xf32>
    %58 = arith.subf %54, %57 : vector<8x8xf32>
    %59 = math.exp %58 : vector<8x8xf32>
    %cst_32 = arith.constant dense<0.000000e+00> : vector<8xf32>
    %60 = vector.multi_reduction <add>, %59, %cst_32 [1] : vector<8x8xf32> to vector<8xf32>
    %61 = vector.shape_cast %60 : vector<8xf32> to vector<8x1xf32>
    %62 = tpu.reciprocal %61 {approx = true} : vector<8x1xf32> -> vector<8x1xf32>
    %63 = vector.broadcast %62 : vector<8x1xf32> to vector<8x8xf32>
    %64 = arith.mulf %59, %63 : vector<8x8xf32>
    %65 = arith.truncf %64 : vector<8x8xf32> to vector<8x8xbf16>
    %66 = vector.extract_strided_slice %26 {offsets = [0, 0], sizes = [8, 8], strides = [1, 1]} : vector<8x32xbf16> to vector<8x8xbf16>
    %cst_33 = arith.constant dense<0.000000e+00> : vector<8x8xf32>
    %67 = tpu.matmul %65, %66, %cst_33 {dimension_numbers = #tpu.dot_dimension_numbers<[1], [0], [0], [1], [0, 0, 1, 1], [], []>} : vector<8x8xbf16>, vector<8x8xbf16>, vector<8x8xf32> -> vector<8x8xf32>
    %68 = arith.truncf %67 : vector<8x8xf32> to vector<8x8xbf16>
    %c0_34 = arith.constant 0 : index
    %c0_35 = arith.constant 0 : index
    %69 = vector.load %arg16[%c0_34, %c0_35] : memref<8x32xbf16, #tpu.memory_space<vmem>>, vector<8x8xbf16>
    tpu.vector_store %arg16[%c0_34, %c0_35], %68 {strides = array<i32>} : memref<8x32xbf16, #tpu.memory_space<vmem>>, vector<8x8xbf16>,
    %70 = vector.extract_strided_slice %25 {offsets = [0, 8], sizes = [8, 8], strides = [1, 1]} : vector<8x32xbf16> to vector<8x8xbf16>
    %71 = vector.extract_strided_slice %28 {offsets = [0, 8], sizes = [136, 8], strides = [1, 1]} : vector<136x32xbf16> to vector<136x8xbf16>
    %72 = vector.extract_strided_slice %29 {offsets = [0, 8], sizes = [2, 8], strides = [1, 1]} : vector<2x32xbf16> to vector<2x8xbf16>
    %cst_36 = arith.constant dense<0.000000e+00> : vector<8x136xf32>
    %73 = tpu.matmul %70, %71, %cst_36 {dimension_numbers = #tpu.dot_dimension_numbers<[1], [1], [0], [0], [0, 0, 1, 0], [], []>} : vector<8x8xbf16>, vector<136x8xbf16>, vector<8x136xf32> -> vector<8x136xf32>
    %cst_37 = arith.constant dense<0.000000e+00> : vector<2x136xf32>
    %74 = tpu.matmul %72, %71, %cst_37 {dimension_numbers = #tpu.dot_dimension_numbers<[1], [1], [0], [0], [0, 0, 1, 0], [], []>} : vector<2x8xbf16>, vector<136x8xbf16>, vector<2x136xf32> -> vector<2x136xf32>
    %75 = vector.extract_strided_slice %74 {offsets = [0, 0], sizes = [1, 136], strides = [1, 1]} : vector<2x136xf32> to vector<1x136xf32>
    %76 = vector.extract_strided_slice %74 {offsets = [1, 0], sizes = [1, 136], strides = [1, 1]} : vector<2x136xf32> to vector<1x136xf32>
    %77 = arith.select %35, %75, %76 : vector<1x136xi1>, vector<1x136xf32>
    %78 = vector.broadcast %77 : vector<1x136xf32> to vector<8x136xf32>
    %79 = arith.addf %73, %78 : vector<8x136xf32>
    %80 = vector.extract_strided_slice %79 {offsets = [0, 0], sizes = [8, 128], strides = [1, 1]} : vector<8x136xf32> to vector<8x128xf32>
    %81 = vector.extract_strided_slice %79 {offsets = [0, 128], sizes = [8, 8], strides = [1, 1]} : vector<8x136xf32> to vector<8x8xf32>
    %c121_i32_38 = arith.constant 121 : i32
    %82 = tpu.dynamic_rotate %80 by %c121_i32_38 dim 1 {stride = 1 : si32, stride_dimension = 0 : si32} : vector<8x128xf32>, i32 -> vector<8x128xf32>
    %83 = vector.extract_strided_slice %82 {offsets = [0, 0], sizes = [8, 8], strides = [1, 1]} : vector<8x128xf32> to vector<8x8xf32>
    %84 = arith.addf %81, %83 : vector<8x8xf32>
    %cst_39 = arith.constant 0.353553385 : f32
    %85 = vector.broadcast %cst_39 : f32 to vector<8x8xf32>
    %86 = arith.mulf %84, %85 : vector<8x8xf32>
    %cst_40 = arith.constant -1.000000e+09 : f32
    %87 = vector.broadcast %cst_40 : f32 to vector<8x8xf32>
    %88 = arith.select %32, %87, %86 : vector<8x8xi1>, vector<8x8xf32>
    %cst_41 = arith.constant dense<0xFF800000> : vector<8xf32>
    %89 = vector.multi_reduction <maximumf>, %88, %cst_41 [1] : vector<8x8xf32> to vector<8xf32>
    %90 = vector.shape_cast %89 : vector<8xf32> to vector<8x1xf32>
    %91 = vector.broadcast %90 : vector<8x1xf32> to vector<8x8xf32>
    %92 = arith.subf %88, %91 : vector<8x8xf32>
    %93 = math.exp %92 : vector<8x8xf32>
    %cst_42 = arith.constant dense<0.000000e+00> : vector<8xf32>
    %94 = vector.multi_reduction <add>, %93, %cst_42 [1] : vector<8x8xf32> to vector<8xf32>
    %95 = vector.shape_cast %94 : vector<8xf32> to vector<8x1xf32>
    %96 = tpu.reciprocal %95 {approx = true} : vector<8x1xf32> -> vector<8x1xf32>
    %97 = vector.broadcast %96 : vector<8x1xf32> to vector<8x8xf32>
    %98 = arith.mulf %93, %97 : vector<8x8xf32>
    %99 = arith.truncf %98 : vector<8x8xf32> to vector<8x8xbf16>
    %100 = vector.extract_strided_slice %26 {offsets = [0, 8], sizes = [8, 8], strides = [1, 1]} : vector<8x32xbf16> to vector<8x8xbf16>
    %cst_43 = arith.constant dense<0.000000e+00> : vector<8x8xf32>
    %101 = tpu.matmul %99, %100, %cst_43 {dimension_numbers = #tpu.dot_dimension_numbers<[1], [0], [0], [1], [0, 0, 1, 1], [], []>} : vector<8x8xbf16>, vector<8x8xbf16>, vector<8x8xf32> -> vector<8x8xf32>
    %102 = arith.truncf %101 : vector<8x8xf32> to vector<8x8xbf16>
    %c0_44 = arith.constant 0 : index
    %c8 = arith.constant 8 : index
    %103 = vector.load %arg16[%c0_44, %c8] : memref<8x32xbf16, #tpu.memory_space<vmem>>, vector<8x8xbf16>
    tpu.vector_store %arg16[%c0_44, %c8], %102 {strides = array<i32>} : memref<8x32xbf16, #tpu.memory_space<vmem>>, vector<8x8xbf16>,
    %104 = vector.extract_strided_slice %25 {offsets = [0, 16], sizes = [8, 8], strides = [1, 1]} : vector<8x32xbf16> to vector<8x8xbf16>
    %105 = vector.extract_strided_slice %28 {offsets = [0, 16], sizes = [136, 8], strides = [1, 1]} : vector<136x32xbf16> to vector<136x8xbf16>
    %106 = vector.extract_strided_slice %29 {offsets = [0, 16], sizes = [2, 8], strides = [1, 1]} : vector<2x32xbf16> to vector<2x8xbf16>
    %cst_45 = arith.constant dense<0.000000e+00> : vector<8x136xf32>
    %107 = tpu.matmul %104, %105, %cst_45 {dimension_numbers = #tpu.dot_dimension_numbers<[1], [1], [0], [0], [0, 0, 1, 0], [], []>} : vector<8x8xbf16>, vector<136x8xbf16>, vector<8x136xf32> -> vector<8x136xf32>
    %cst_46 = arith.constant dense<0.000000e+00> : vector<2x136xf32>
    %108 = tpu.matmul %106, %105, %cst_46 {dimension_numbers = #tpu.dot_dimension_numbers<[1], [1], [0], [0], [0, 0, 1, 0], [], []>} : vector<2x8xbf16>, vector<136x8xbf16>, vector<2x136xf32> -> vector<2x136xf32>
    %109 = vector.extract_strided_slice %108 {offsets = [0, 0], sizes = [1, 136], strides = [1, 1]} : vector<2x136xf32> to vector<1x136xf32>
    %110 = vector.extract_strided_slice %108 {offsets = [1, 0], sizes = [1, 136], strides = [1, 1]} : vector<2x136xf32> to vector<1x136xf32>
    %111 = arith.select %35, %109, %110 : vector<1x136xi1>, vector<1x136xf32>
    %112 = vector.broadcast %111 : vector<1x136xf32> to vector<8x136xf32>
    %113 = arith.addf %107, %112 : vector<8x136xf32>
    %114 = vector.extract_strided_slice %113 {offsets = [0, 0], sizes = [8, 128], strides = [1, 1]} : vector<8x136xf32> to vector<8x128xf32>
    %115 = vector.extract_strided_slice %113 {offsets = [0, 128], sizes = [8, 8], strides = [1, 1]} : vector<8x136xf32> to vector<8x8xf32>
    %c121_i32_47 = arith.constant 121 : i32
    %116 = tpu.dynamic_rotate %114 by %c121_i32_47 dim 1 {stride = 1 : si32, stride_dimension = 0 : si32} : vector<8x128xf32>, i32 -> vector<8x128xf32>
    %117 = vector.extract_strided_slice %116 {offsets = [0, 0], sizes = [8, 8], strides = [1, 1]} : vector<8x128xf32> to vector<8x8xf32>
    %118 = arith.addf %115, %117 : vector<8x8xf32>
    %cst_48 = arith.constant 0.353553385 : f32
    %119 = vector.broadcast %cst_48 : f32 to vector<8x8xf32>
    %120 = arith.mulf %118, %119 : vector<8x8xf32>
    %cst_49 = arith.constant -1.000000e+09 : f32
    %121 = vector.broadcast %cst_49 : f32 to vector<8x8xf32>
    %122 = arith.select %32, %121, %120 : vector<8x8xi1>, vector<8x8xf32>
    %cst_50 = arith.constant dense<0xFF800000> : vector<8xf32>
    %123 = vector.multi_reduction <maximumf>, %122, %cst_50 [1] : vector<8x8xf32> to vector<8xf32>
    %124 = vector.shape_cast %123 : vector<8xf32> to vector<8x1xf32>
    %125 = vector.broadcast %124 : vector<8x1xf32> to vector<8x8xf32>
    %126 = arith.subf %122, %125 : vector<8x8xf32>
    %127 = math.exp %126 : vector<8x8xf32>
    %cst_51 = arith.constant dense<0.000000e+00> : vector<8xf32>
    %128 = vector.multi_reduction <add>, %127, %cst_51 [1] : vector<8x8xf32> to vector<8xf32>
    %129 = vector.shape_cast %128 : vector<8xf32> to vector<8x1xf32>
    %130 = tpu.reciprocal %129 {approx = true} : vector<8x1xf32> -> vector<8x1xf32>
    %131 = vector.broadcast %130 : vector<8x1xf32> to vector<8x8xf32>
    %132 = arith.mulf %127, %131 : vector<8x8xf32>
    %133 = arith.truncf %132 : vector<8x8xf32> to vector<8x8xbf16>
    %134 = vector.extract_strided_slice %26 {offsets = [0, 16], sizes = [8, 8], strides = [1, 1]} : vector<8x32xbf16> to vector<8x8xbf16>
    %cst_52 = arith.constant dense<0.000000e+00> : vector<8x8xf32>
    %135 = tpu.matmul %133, %134, %cst_52 {dimension_numbers = #tpu.dot_dimension_numbers<[1], [0], [0], [1], [0, 0, 1, 1], [], []>} : vector<8x8xbf16>, vector<8x8xbf16>, vector<8x8xf32> -> vector<8x8xf32>
    %136 = arith.truncf %135 : vector<8x8xf32> to vector<8x8xbf16>
    %c0_53 = arith.constant 0 : index
    %c16 = arith.constant 16 : index
    %137 = vector.load %arg16[%c0_53, %c16] : memref<8x32xbf16, #tpu.memory_space<vmem>>, vector<8x8xbf16>
    tpu.vector_store %arg16[%c0_53, %c16], %136 {strides = array<i32>} : memref<8x32xbf16, #tpu.memory_space<vmem>>, vector<8x8xbf16>,
    %138 = vector.extract_strided_slice %25 {offsets = [0, 24], sizes = [8, 8], strides = [1, 1]} : vector<8x32xbf16> to vector<8x8xbf16>
    %139 = vector.extract_strided_slice %28 {offsets = [0, 24], sizes = [136, 8], strides = [1, 1]} : vector<136x32xbf16> to vector<136x8xbf16>
    %140 = vector.extract_strided_slice %29 {offsets = [0, 24], sizes = [2, 8], strides = [1, 1]} : vector<2x32xbf16> to vector<2x8xbf16>
    %cst_54 = arith.constant dense<0.000000e+00> : vector<8x136xf32>
    %141 = tpu.matmul %138, %139, %cst_54 {dimension_numbers = #tpu.dot_dimension_numbers<[1], [1], [0], [0], [0, 0, 1, 0], [], []>} : vector<8x8xbf16>, vector<136x8xbf16>, vector<8x136xf32> -> vector<8x136xf32>
    %cst_55 = arith.constant dense<0.000000e+00> : vector<2x136xf32>
    %142 = tpu.matmul %140, %139, %cst_55 {dimension_numbers = #tpu.dot_dimension_numbers<[1], [1], [0], [0], [0, 0, 1, 0], [], []>} : vector<2x8xbf16>, vector<136x8xbf16>, vector<2x136xf32> -> vector<2x136xf32>
    %143 = vector.extract_strided_slice %142 {offsets = [0, 0], sizes = [1, 136], strides = [1, 1]} : vector<2x136xf32> to vector<1x136xf32>
    %144 = vector.extract_strided_slice %142 {offsets = [1, 0], sizes = [1, 136], strides = [1, 1]} : vector<2x136xf32> to vector<1x136xf32>
    %145 = arith.select %35, %143, %144 : vector<1x136xi1>, vector<1x136xf32>
    %146 = vector.broadcast %145 : vector<1x136xf32> to vector<8x136xf32>
    %147 = arith.addf %141, %146 : vector<8x136xf32>
    %148 = vector.extract_strided_slice %147 {offsets = [0, 0], sizes = [8, 128], strides = [1, 1]} : vector<8x136xf32> to vector<8x128xf32>
    %149 = vector.extract_strided_slice %147 {offsets = [0, 128], sizes = [8, 8], strides = [1, 1]} : vector<8x136xf32> to vector<8x8xf32>
    %c121_i32_56 = arith.constant 121 : i32
    %150 = tpu.dynamic_rotate %148 by %c121_i32_56 dim 1 {stride = 1 : si32, stride_dimension = 0 : si32} : vector<8x128xf32>, i32 -> vector<8x128xf32>
    %151 = vector.extract_strided_slice %150 {offsets = [0, 0], sizes = [8, 8], strides = [1, 1]} : vector<8x128xf32> to vector<8x8xf32>
    %152 = arith.addf %149, %151 : vector<8x8xf32>
    %cst_57 = arith.constant 0.353553385 : f32
    %153 = vector.broadcast %cst_57 : f32 to vector<8x8xf32>
    %154 = arith.mulf %152, %153 : vector<8x8xf32>
    %cst_58 = arith.constant -1.000000e+09 : f32
    %155 = vector.broadcast %cst_58 : f32 to vector<8x8xf32>
    %156 = arith.select %32, %155, %154 : vector<8x8xi1>, vector<8x8xf32>
    %cst_59 = arith.constant dense<0xFF800000> : vector<8xf32>
    %157 = vector.multi_reduction <maximumf>, %156, %cst_59 [1] : vector<8x8xf32> to vector<8xf32>
    %158 = vector.shape_cast %157 : vector<8xf32> to vector<8x1xf32>
    %159 = vector.broadcast %158 : vector<8x1xf32> to vector<8x8xf32>
    %160 = arith.subf %156, %159 : vector<8x8xf32>
    %161 = math.exp %160 : vector<8x8xf32>
    %cst_60 = arith.constant dense<0.000000e+00> : vector<8xf32>
    %162 = vector.multi_reduction <add>, %161, %cst_60 [1] : vector<8x8xf32> to vector<8xf32>
    %163 = vector.shape_cast %162 : vector<8xf32> to vector<8x1xf32>
    %164 = tpu.reciprocal %163 {approx = true} : vector<8x1xf32> -> vector<8x1xf32>
    %165 = vector.broadcast %164 : vector<8x1xf32> to vector<8x8xf32>
    %166 = arith.mulf %161, %165 : vector<8x8xf32>
    %167 = arith.truncf %166 : vector<8x8xf32> to vector<8x8xbf16>
    %168 = vector.extract_strided_slice %26 {offsets = [0, 24], sizes = [8, 8], strides = [1, 1]} : vector<8x32xbf16> to vector<8x8xbf16>
    %cst_61 = arith.constant dense<0.000000e+00> : vector<8x8xf32>
    %169 = tpu.matmul %167, %168, %cst_61 {dimension_numbers = #tpu.dot_dimension_numbers<[1], [0], [0], [1], [0, 0, 1, 1], [], []>} : vector<8x8xbf16>, vector<8x8xbf16>, vector<8x8xf32> -> vector<8x8xf32>
    %170 = arith.truncf %169 : vector<8x8xf32> to vector<8x8xbf16>
    %c0_62 = arith.constant 0 : index
    %c24 = arith.constant 24 : index
    %171 = vector.load %arg16[%c0_62, %c24] : memref<8x32xbf16, #tpu.memory_space<vmem>>, vector<8x8xbf16>
    tpu.vector_store %arg16[%c0_62, %c24], %170 {strides = array<i32>} : memref<8x32xbf16, #tpu.memory_space<vmem>>, vector<8x8xbf16>,
    %c0_63 = arith.constant 0 : index
    %c0_64 = arith.constant 0 : index
    %172 = vector.load %arg16[%c0_63, %c0_64] : memref<8x32xbf16, #tpu.memory_space<vmem>>, vector<8x32xbf16>
    %c0_65 = arith.constant 0 : index
    %c0_66 = arith.constant 0 : index
    %173 = vector.load %arg13[%c0_65, %c0_66] : memref<32x32xbf16, #tpu.memory_space<vmem>>, vector<32x32xbf16>
    %cst_67 = arith.constant dense<0.000000e+00> : vector<8x32xf32>
    %174 = tpu.matmul %172, %173, %cst_67 {dimension_numbers = #tpu.dot_dimension_numbers<[1], [0], [0], [1], [0, 0, 1, 1], [], []>} : vector<8x32xbf16>, vector<32x32xbf16>, vector<8x32xf32> -> vector<8x32xf32>
    %c0_68 = arith.constant 0 : index
    %c0_69 = arith.constant 0 : index
    %175 = vector.load %arg14[%c0_68, %c0_69] : memref<1x32xf32, #tpu.memory_space<vmem>>, vector<1x32xf32>
    %176 = vector.broadcast %175 : vector<1x32xf32> to vector<8x32xf32>
    %177 = arith.addf %174, %176 : vector<8x32xf32>
    %178 = arith.truncf %177 : vector<8x32xf32> to vector<8x32xbf16>
    %c0_70 = arith.constant 0 : index
    %c0_71 = arith.constant 0 : index
    %c0_72 = arith.constant 0 : index
    %179 = vector.load %arg15[%c0_70, %c0_71, %c0_72] : memref<1x8x32xbf16, #tpu.memory_space<vmem>>, vector<1x8x32xbf16>
    %180 = vector.shape_cast %179 : vector<1x8x32xbf16> to vector<8x32xbf16>
    %181 = vector.shape_cast %178 : vector<8x32xbf16> to vector<1x8x32xbf16>
    tpu.vector_store %arg15[%c0_70, %c0_71, %c0_72], %181 {strides = array<i32>} : memref<1x8x32xbf16, #tpu.memory_space<vmem>>, vector<1x8x32xbf16>,
    return
  }
  func.func @transform_0(%arg0: i32, %arg1: memref<2xi32, #tpu.memory_space<smem>>) -> (i32, i32, i32) {
    %c0_i32 = arith.constant 0 : i32
    %c0_i32_0 = arith.constant 0 : i32
    %c0_i32_1 = arith.constant 0 : i32
    return %arg0, %c0_i32, %c0_i32_0 : i32, i32, i32
  }
  func.func @transform_1(%arg0: i32, %arg1: memref<2xi32, #tpu.memory_space<smem>>) -> (i32, i32, i32) {
    %c0_i32 = arith.constant 0 : i32
    %c0_i32_0 = arith.constant 0 : i32
    %c0_i32_1 = arith.constant 0 : i32
    return %arg0, %c0_i32, %c0_i32_0 : i32, i32, i32
  }
  func.func @transform_2(%arg0: i32, %arg1: memref<2xi32, #tpu.memory_space<smem>>) -> (i32, i32, i32) {
    %c0_i32 = arith.constant 0 : i32
    %c0_i32_0 = arith.constant 0 : i32
    %c0_i32_1 = arith.constant 0 : i32
    return %arg0, %c0_i32, %c0_i32_0 : i32, i32, i32
  }
  func.func @transform_3(%arg0: i32, %arg1: memref<2xi32, #tpu.memory_space<smem>>) -> (i32, i32, i32) {
    %c0_i32 = arith.constant 0 : i32
    %c0_i32_0 = arith.constant 0 : i32
    %c0_i32_1 = arith.constant 0 : i32
    return %arg0, %c0_i32, %c0_i32_0 : i32, i32, i32
  }
  func.func @transform_4(%arg0: i32, %arg1: memref<2xi32, #tpu.memory_space<smem>>) -> (i32, i32) {
    %c0_i32 = arith.constant 0 : i32
    %c0_i32_0 = arith.constant 0 : i32
    %c0_i32_1 = arith.constant 0 : i32
    return %c0_i32, %c0_i32_0 : i32, i32
  }
  func.func @transform_5(%arg0: i32, %arg1: memref<2xi32, #tpu.memory_space<smem>>) -> (i32, i32) {
    %c0_i32 = arith.constant 0 : i32
    %c0_i32_0 = arith.constant 0 : i32
    %c0_i32_1 = arith.constant 0 : i32
    return %c0_i32, %c0_i32_0 : i32, i32
  }
  func.func @transform_6(%arg0: i32, %arg1: memref<2xi32, #tpu.memory_space<smem>>) -> (i32, i32) {
    %c0_i32 = arith.constant 0 : i32
    %c0_i32_0 = arith.constant 0 : i32
    %c0_i32_1 = arith.constant 0 : i32
    return %c0_i32, %c0_i32_0 : i32, i32
  }
  func.func @transform_7(%arg0: i32, %arg1: memref<2xi32, #tpu.memory_space<smem>>) -> (i32, i32) {
    %c0_i32 = arith.constant 0 : i32
    %c0_i32_0 = arith.constant 0 : i32
    %c0_i32_1 = arith.constant 0 : i32
    return %c0_i32, %c0_i32_0 : i32, i32
  }
  func.func @transform_8(%arg0: i32, %arg1: memref<2xi32, #tpu.memory_space<smem>>) -> (i32, i32) {
    %c0_i32 = arith.constant 0 : i32
    %c0_i32_0 = arith.constant 0 : i32
    %c0_i32_1 = arith.constant 0 : i32
    return %c0_i32, %c0_i32_0 : i32, i32
  }
  func.func @transform_9(%arg0: i32, %arg1: memref<2xi32, #tpu.memory_space<smem>>) -> (i32, i32) {
    %c0_i32 = arith.constant 0 : i32
    %c0_i32_0 = arith.constant 0 : i32
    %c0_i32_1 = arith.constant 0 : i32
    return %c0_i32, %c0_i32_0 : i32, i32
  }
  func.func @transform_10(%arg0: i32, %arg1: memref<2xi32, #tpu.memory_space<smem>>) -> (i32, i32) {
    %c0_i32 = arith.constant 0 : i32
    %c0_i32_0 = arith.constant 0 : i32
    %c0_i32_1 = arith.constant 0 : i32
    return %c0_i32, %c0_i32_0 : i32, i32
  }
  func.func @transform_11(%arg0: i32, %arg1: memref<2xi32, #tpu.memory_space<smem>>) -> (i32, i32) {
    %c0_i32 = arith.constant 0 : i32
    %c0_i32_0 = arith.constant 0 : i32
    %c0_i32_1 = arith.constant 0 : i32
    return %c0_i32, %c0_i32_0 : i32, i32
  }
  func.func @transform_12(%arg0: i32, %arg1: memref<2xi32, #tpu.memory_space<smem>>) -> (i32, i32) {
    %c0_i32 = arith.constant 0 : i32
    %c0_i32_0 = arith.constant 0 : i32
    %c0_i32_1 = arith.constant 0 : i32
    return %c0_i32, %c0_i32_0 : i32, i32
  }
  func.func @transform_13(%arg0: i32, %arg1: memref<2xi32, #tpu.memory_space<smem>>) -> (i32, i32, i32) {
    %c0_i32 = arith.constant 0 : i32
    %c0_i32_0 = arith.constant 0 : i32
    %c0_i32_1 = arith.constant 0 : i32
    return %arg0, %c0_i32, %c0_i32_0 : i32, i32, i32
  }
}

module attributes {stable_mosaic.version = 11 : i64} {
  func.func @_rel_mha_kernel(%arg0: i32, %arg1: memref<2xi32, #tpu.memory_space<smem>>, %arg2: memref<1x8x32xbf16, #tpu.memory_space<vmem>>, %arg3: memref<1x8x32xbf16, #tpu.memory_space<vmem>>, %arg4: memref<1x8x32xbf16, #tpu.memory_space<vmem>>, %arg5: memref<1x128x32xbf16, #tpu.memory_space<vmem>>, %arg6: memref<32x32xbf16, #tpu.memory_space<vmem>>, %arg7: memref<32x32xbf16, #tpu.memory_space<vmem>>, %arg8: memref<32x32xbf16, #tpu.memory_space<vmem>>, %arg9: memref<1x32xf32, #tpu.memory_space<vmem>>, %arg10: memref<1x32xf32, #tpu.memory_space<vmem>>, %arg11: memref<1x32xf32, #tpu.memory_space<vmem>>, %arg12: memref<2x32xbf16, #tpu.memory_space<vmem>>, %arg13: memref<32x32xbf16, #tpu.memory_space<vmem>>, %arg14: memref<1x32xf32, #tpu.memory_space<vmem>>, %arg15: memref<1x8x32xf32, #tpu.memory_space<vmem>>, %arg16: memref<8x32xbf16, #tpu.memory_space<vmem>>) attributes {dimension_semantics = [#tpu.dimension_semantics<parallel>], iteration_bounds = array<i64: 2>, scalar_prefetch = 1 : i64, scratch_operands = 1 : i64, tpu.core_type = #tpu.core_type<tc>, window_params = [{transform_indices = @transform_0, window_bounds = array<i64: 1, 8, 32>}, {transform_indices = @transform_1, window_bounds = array<i64: 1, 8, 32>}, {transform_indices = @transform_2, window_bounds = array<i64: 1, 8, 32>}, {transform_indices = @transform_3, window_bounds = array<i64: 1, 128, 32>}, {pipeline_mode = #tpu.pipeline_mode<synchronous>, transform_indices = @transform_4, window_bounds = array<i64: 32, 32>}, {pipeline_mode = #tpu.pipeline_mode<synchronous>, transform_indices = @transform_5, window_bounds = array<i64: 32, 32>}, {pipeline_mode = #tpu.pipeline_mode<synchronous>, transform_indices = @transform_6, window_bounds = array<i64: 32, 32>}, {pipeline_mode = #tpu.pipeline_mode<synchronous>, transform_indices = @transform_7, window_bounds = array<i64: 1, 32>}, {pipeline_mode = #tpu.pipeline_mode<synchronous>, transform_indices = @transform_8, window_bounds = array<i64: 1, 32>}, {pipeline_mode = #tpu.pipeline_mode<synchronous>, transform_indices = @transform_9, window_bounds = array<i64: 1, 32>}, {pipeline_mode = #tpu.pipeline_mode<synchronous>, transform_indices = @transform_10, window_bounds = array<i64: 2, 32>}, {pipeline_mode = #tpu.pipeline_mode<synchronous>, transform_indices = @transform_11, window_bounds = array<i64: 32, 32>}, {pipeline_mode = #tpu.pipeline_mode<synchronous>, transform_indices = @transform_12, window_bounds = array<i64: 1, 32>}, {transform_indices = @transform_13, window_bounds = array<i64: 1, 8, 32>}]} {
    %0 = arith.index_cast %arg0 : i32 to index
    %1 = memref.load %arg1[%0] : memref<2xi32, #tpu.memory_space<smem>>
    %c0 = arith.constant 0 : index
    %c0_0 = arith.constant 0 : index
    %c0_1 = arith.constant 0 : index
    %2 = vector.load %arg2[%c0, %c0_0, %c0_1] : memref<1x8x32xbf16, #tpu.memory_space<vmem>>, vector<1x8x32xbf16>
    %3 = vector.shape_cast %2 : vector<1x8x32xbf16> to vector<8x32xbf16>
    %c0_2 = arith.constant 0 : index
    %c0_3 = arith.constant 0 : index
    %c0_4 = arith.constant 0 : index
    %4 = vector.load %arg3[%c0_2, %c0_3, %c0_4] : memref<1x8x32xbf16, #tpu.memory_space<vmem>>, vector<1x8x32xbf16>
    %5 = vector.shape_cast %4 : vector<1x8x32xbf16> to vector<8x32xbf16>
    %c0_5 = arith.constant 0 : index
    %c0_6 = arith.constant 0 : index
    %c0_7 = arith.constant 0 : index
    %6 = vector.load %arg4[%c0_5, %c0_6, %c0_7] : memref<1x8x32xbf16, #tpu.memory_space<vmem>>, vector<1x8x32xbf16>
    %7 = vector.shape_cast %6 : vector<1x8x32xbf16> to vector<8x32xbf16>
    %c0_8 = arith.constant 0 : index
    %c0_9 = arith.constant 0 : index
    %c0_10 = arith.constant 0 : index
    %8 = vector.load %arg5[%c0_8, %c0_9, %c0_10] : memref<1x128x32xbf16, #tpu.memory_space<vmem>>, vector<1x128x32xbf16>
    %9 = vector.shape_cast %8 : vector<1x128x32xbf16> to vector<128x32xbf16>
    %c0_11 = arith.constant 0 : index
    %c0_12 = arith.constant 0 : index
    %10 = vector.load %arg6[%c0_11, %c0_12] : memref<32x32xbf16, #tpu.memory_space<vmem>>, vector<32x32xbf16>
    %cst = arith.constant dense<0.000000e+00> : vector<8x32xf32>
    %11 = tpu.matmul %3, %10, %cst {dimension_numbers = #tpu.dot_dimension_numbers<[1], [0], [0], [1], [0, 0, 1, 1], [], []>} : vector<8x32xbf16>, vector<32x32xbf16>, vector<8x32xf32> -> vector<8x32xf32>
    %c0_13 = arith.constant 0 : index
    %c0_14 = arith.constant 0 : index
    %12 = vector.load %arg9[%c0_13, %c0_14] : memref<1x32xf32, #tpu.memory_space<vmem>>, vector<1x32xf32>
    %13 = vector.broadcast %12 : vector<1x32xf32> to vector<8x32xf32>
    %14 = arith.addf %11, %13 : vector<8x32xf32>
    %c0_15 = arith.constant 0 : index
    %c0_16 = arith.constant 0 : index
    %15 = vector.load %arg7[%c0_15, %c0_16] : memref<32x32xbf16, #tpu.memory_space<vmem>>, vector<32x32xbf16>
    %cst_17 = arith.constant dense<0.000000e+00> : vector<8x32xf32>
    %16 = tpu.matmul %5, %15, %cst_17 {dimension_numbers = #tpu.dot_dimension_numbers<[1], [0], [0], [1], [0, 0, 1, 1], [], []>} : vector<8x32xbf16>, vector<32x32xbf16>, vector<8x32xf32> -> vector<8x32xf32>
    %c0_18 = arith.constant 0 : index
    %c0_19 = arith.constant 0 : index
    %17 = vector.load %arg10[%c0_18, %c0_19] : memref<1x32xf32, #tpu.memory_space<vmem>>, vector<1x32xf32>
    %18 = vector.broadcast %17 : vector<1x32xf32> to vector<8x32xf32>
    %19 = arith.addf %16, %18 : vector<8x32xf32>
    %c0_20 = arith.constant 0 : index
    %c0_21 = arith.constant 0 : index
    %20 = vector.load %arg8[%c0_20, %c0_21] : memref<32x32xbf16, #tpu.memory_space<vmem>>, vector<32x32xbf16>
    %cst_22 = arith.constant dense<0.000000e+00> : vector<8x32xf32>
    %21 = tpu.matmul %7, %20, %cst_22 {dimension_numbers = #tpu.dot_dimension_numbers<[1], [0], [0], [1], [0, 0, 1, 1], [], []>} : vector<8x32xbf16>, vector<32x32xbf16>, vector<8x32xf32> -> vector<8x32xf32>
    %c0_23 = arith.constant 0 : index
    %c0_24 = arith.constant 0 : index
    %22 = vector.load %arg11[%c0_23, %c0_24] : memref<1x32xf32, #tpu.memory_space<vmem>>, vector<1x32xf32>
    %23 = vector.broadcast %22 : vector<1x32xf32> to vector<8x32xf32>
    %24 = arith.addf %21, %23 : vector<8x32xf32>
    %25 = arith.truncf %14 : vector<8x32xf32> to vector<8x32xbf16>
    %26 = arith.truncf %24 : vector<8x32xf32> to vector<8x32xbf16>
    %27 = arith.truncf %19 : vector<8x32xf32> to vector<8x32xbf16>
    %28 = tpu.concatenate %9, %27 in 0 : vector<128x32xbf16>, vector<8x32xbf16> -> vector<136x32xbf16>
    %c0_25 = arith.constant 0 : index
    %c0_26 = arith.constant 0 : index
    %29 = vector.load %arg12[%c0_25, %c0_26] : memref<2x32xbf16, #tpu.memory_space<vmem>>, vector<2x32xbf16>
    %30 = tpu.iota {dimensions = array<i32: 1>} : vector<8x8xi32>
    %31 = vector.broadcast %1 : i32 to vector<8x8xi32>
    %32 = arith.cmpi sge, %30, %31 : vector<8x8xi32>
    %33 = tpu.iota {dimensions = array<i32: 1>} : vector<1x136xi32>
    %c128_i32 = arith.constant 128 : i32
    %34 = vector.broadcast %c128_i32 : i32 to vector<1x136xi32>
    %35 = arith.cmpi slt, %33, %34 : vector<1x136xi32>
    %36 = vector.extract_strided_slice %25 {offsets = [0, 0], sizes = [8, 8], strides = [1, 1]} : vector<8x32xbf16> to vector<8x8xbf16>
    %37 = vector.extract_strided_slice %28 {offsets = [0, 0], sizes = [136, 8], strides = [1, 1]} : vector<136x32xbf16> to vector<136x8xbf16>
    %38 = vector.extract_strided_slice %29 {offsets = [0, 0], sizes = [2, 8], strides = [1, 1]} : vector<2x32xbf16> to vector<2x8xbf16>
    %cst_27 = arith.constant dense<0.000000e+00> : vector<8x136xf32>
    %39 = tpu.matmul %36, %37, %cst_27 {dimension_numbers = #tpu.dot_dimension_numbers<[1], [1], [0], [0], [0, 0, 1, 0], [], []>} : vector<8x8xbf16>, vector<136x8xbf16>, vector<8x136xf32> -> vector<8x136xf32>
    %cst_28 = arith.constant dense<0.000000e+00> : vector<2x136xf32>
    %40 = tpu.matmul %38, %37, %cst_28 {dimension_numbers = #tpu.dot_dimension_numbers<[1], [1], [0], [0], [0, 0, 1, 0], [], []>} : vector<2x8xbf16>, vector<136x8xbf16>, vector<2x136xf32> -> vector<2x136xf32>
    %41 = vector.extract_strided_slice %40 {offsets = [0, 0], sizes = [1, 136], strides = [1, 1]} : vector<2x136xf32> to vector<1x136xf32>
    %42 = vector.extract_strided_slice %40 {offsets = [1, 0], sizes = [1, 136], strides = [1, 1]} : vector<2x136xf32> to vector<1x136xf32>
    %43 = arith.select %35, %41, %42 : vector<1x136xi1>, vector<1x136xf32>
    %44 = vector.broadcast %43 : vector<1x136xf32> to vector<8x136xf32>
    %45 = arith.addf %39, %44 : vector<8x136xf32>
    %46 = vector.extract_strided_slice %45 {offsets = [0, 0], sizes = [8, 128], strides = [1, 1]} : vector<8x136xf32> to vector<8x128xf32>
    %47 = vector.extract_strided_slice %45 {offsets = [0, 128], sizes = [8, 8], strides = [1, 1]} : vector<8x136xf32> to vector<8x8xf32>
    %48 = vector.extract_strided_slice %46 {offsets = [0, 7], sizes = [8, 121], strides = [1, 1]} : vector<8x128xf32> to vector<8x121xf32>
    %49 = vector.extract_strided_slice %46 {offsets = [0, 0], sizes = [8, 7], strides = [1, 1]} : vector<8x128xf32> to vector<8x7xf32>
    %50 = tpu.concatenate %48, %49 in 1 : vector<8x121xf32>, vector<8x7xf32> -> vector<8x128xf32>
    %51 = tpu.iota {dimensions = array<i32: 0>} : vector<8x128xi32>
    %c1_i32 = arith.constant 1 : i32
    %52 = vector.broadcast %c1_i32 : i32 to vector<8x128xi32>
    %53 = arith.andi %51, %52 : vector<8x128xi32>
    %c0_i32 = arith.constant 0 : i32
    %54 = vector.broadcast %c0_i32 : i32 to vector<8x128xi32>
    %55 = arith.cmpi ne, %53, %54 : vector<8x128xi32>
    %56 = vector.extract_strided_slice %50 {offsets = [0, 127], sizes = [8, 1], strides = [1, 1]} : vector<8x128xf32> to vector<8x1xf32>
    %57 = vector.extract_strided_slice %50 {offsets = [0, 0], sizes = [8, 127], strides = [1, 1]} : vector<8x128xf32> to vector<8x127xf32>
    %58 = tpu.concatenate %56, %57 in 1 : vector<8x1xf32>, vector<8x127xf32> -> vector<8x128xf32>
    %59 = arith.select %55, %58, %50 : vector<8x128xi1>, vector<8x128xf32>
    %c2_i32 = arith.constant 2 : i32
    %60 = vector.broadcast %c2_i32 : i32 to vector<8x128xi32>
    %61 = arith.andi %51, %60 : vector<8x128xi32>
    %c0_i32_29 = arith.constant 0 : i32
    %62 = vector.broadcast %c0_i32_29 : i32 to vector<8x128xi32>
    %63 = arith.cmpi ne, %61, %62 : vector<8x128xi32>
    %64 = vector.extract_strided_slice %59 {offsets = [0, 126], sizes = [8, 2], strides = [1, 1]} : vector<8x128xf32> to vector<8x2xf32>
    %65 = vector.extract_strided_slice %59 {offsets = [0, 0], sizes = [8, 126], strides = [1, 1]} : vector<8x128xf32> to vector<8x126xf32>
    %66 = tpu.concatenate %64, %65 in 1 : vector<8x2xf32>, vector<8x126xf32> -> vector<8x128xf32>
    %67 = arith.select %63, %66, %59 : vector<8x128xi1>, vector<8x128xf32>
    %c4_i32 = arith.constant 4 : i32
    %68 = vector.broadcast %c4_i32 : i32 to vector<8x128xi32>
    %69 = arith.andi %51, %68 : vector<8x128xi32>
    %c0_i32_30 = arith.constant 0 : i32
    %70 = vector.broadcast %c0_i32_30 : i32 to vector<8x128xi32>
    %71 = arith.cmpi ne, %69, %70 : vector<8x128xi32>
    %72 = vector.extract_strided_slice %67 {offsets = [0, 124], sizes = [8, 4], strides = [1, 1]} : vector<8x128xf32> to vector<8x4xf32>
    %73 = vector.extract_strided_slice %67 {offsets = [0, 0], sizes = [8, 124], strides = [1, 1]} : vector<8x128xf32> to vector<8x124xf32>
    %74 = tpu.concatenate %72, %73 in 1 : vector<8x4xf32>, vector<8x124xf32> -> vector<8x128xf32>
    %75 = arith.select %71, %74, %67 : vector<8x128xi1>, vector<8x128xf32>
    %76 = vector.extract_strided_slice %75 {offsets = [0, 0], sizes = [8, 8], strides = [1, 1]} : vector<8x128xf32> to vector<8x8xf32>
    %77 = arith.addf %47, %76 : vector<8x8xf32>
    %cst_31 = arith.constant 0.353553385 : f32
    %78 = vector.broadcast %cst_31 : f32 to vector<8x8xf32>
    %79 = arith.mulf %77, %78 : vector<8x8xf32>
    %cst_32 = arith.constant -1.000000e+09 : f32
    %80 = vector.broadcast %cst_32 : f32 to vector<8x8xf32>
    %81 = arith.select %32, %80, %79 : vector<8x8xi1>, vector<8x8xf32>
    %cst_33 = arith.constant dense<0xFF800000> : vector<8xf32>
    %82 = vector.multi_reduction <maximumf>, %81, %cst_33 [1] : vector<8x8xf32> to vector<8xf32>
    %83 = vector.shape_cast %82 : vector<8xf32> to vector<8x1xf32>
    %84 = vector.broadcast %83 : vector<8x1xf32> to vector<8x8xf32>
    %85 = arith.subf %81, %84 : vector<8x8xf32>
    %86 = math.exp %85 : vector<8x8xf32>
    %cst_34 = arith.constant dense<0.000000e+00> : vector<8xf32>
    %87 = vector.multi_reduction <add>, %86, %cst_34 [1] : vector<8x8xf32> to vector<8xf32>
    %88 = vector.shape_cast %87 : vector<8xf32> to vector<8x1xf32>
    %89 = tpu.reciprocal %88 {approx = true} : vector<8x1xf32> -> vector<8x1xf32>
    %90 = vector.broadcast %89 : vector<8x1xf32> to vector<8x8xf32>
    %91 = arith.mulf %86, %90 : vector<8x8xf32>
    %92 = arith.truncf %91 : vector<8x8xf32> to vector<8x8xbf16>
    %93 = vector.extract_strided_slice %26 {offsets = [0, 0], sizes = [8, 8], strides = [1, 1]} : vector<8x32xbf16> to vector<8x8xbf16>
    %cst_35 = arith.constant dense<0.000000e+00> : vector<8x8xf32>
    %94 = tpu.matmul %92, %93, %cst_35 {dimension_numbers = #tpu.dot_dimension_numbers<[1], [0], [0], [1], [0, 0, 1, 1], [], []>} : vector<8x8xbf16>, vector<8x8xbf16>, vector<8x8xf32> -> vector<8x8xf32>
    %95 = arith.truncf %94 : vector<8x8xf32> to vector<8x8xbf16>
    %c0_36 = arith.constant 0 : index
    %c0_37 = arith.constant 0 : index
    %96 = vector.load %arg16[%c0_36, %c0_37] : memref<8x32xbf16, #tpu.memory_space<vmem>>, vector<8x8xbf16>
    tpu.vector_store %arg16[%c0_36, %c0_37], %95 {strides = array<i32>} : memref<8x32xbf16, #tpu.memory_space<vmem>>, vector<8x8xbf16>,
    %97 = vector.extract_strided_slice %25 {offsets = [0, 8], sizes = [8, 8], strides = [1, 1]} : vector<8x32xbf16> to vector<8x8xbf16>
    %98 = vector.extract_strided_slice %28 {offsets = [0, 8], sizes = [136, 8], strides = [1, 1]} : vector<136x32xbf16> to vector<136x8xbf16>
    %99 = vector.extract_strided_slice %29 {offsets = [0, 8], sizes = [2, 8], strides = [1, 1]} : vector<2x32xbf16> to vector<2x8xbf16>
    %cst_38 = arith.constant dense<0.000000e+00> : vector<8x136xf32>
    %100 = tpu.matmul %97, %98, %cst_38 {dimension_numbers = #tpu.dot_dimension_numbers<[1], [1], [0], [0], [0, 0, 1, 0], [], []>} : vector<8x8xbf16>, vector<136x8xbf16>, vector<8x136xf32> -> vector<8x136xf32>
    %cst_39 = arith.constant dense<0.000000e+00> : vector<2x136xf32>
    %101 = tpu.matmul %99, %98, %cst_39 {dimension_numbers = #tpu.dot_dimension_numbers<[1], [1], [0], [0], [0, 0, 1, 0], [], []>} : vector<2x8xbf16>, vector<136x8xbf16>, vector<2x136xf32> -> vector<2x136xf32>
    %102 = vector.extract_strided_slice %101 {offsets = [0, 0], sizes = [1, 136], strides = [1, 1]} : vector<2x136xf32> to vector<1x136xf32>
    %103 = vector.extract_strided_slice %101 {offsets = [1, 0], sizes = [1, 136], strides = [1, 1]} : vector<2x136xf32> to vector<1x136xf32>
    %104 = arith.select %35, %102, %103 : vector<1x136xi1>, vector<1x136xf32>
    %105 = vector.broadcast %104 : vector<1x136xf32> to vector<8x136xf32>
    %106 = arith.addf %100, %105 : vector<8x136xf32>
    %107 = vector.extract_strided_slice %106 {offsets = [0, 0], sizes = [8, 128], strides = [1, 1]} : vector<8x136xf32> to vector<8x128xf32>
    %108 = vector.extract_strided_slice %106 {offsets = [0, 128], sizes = [8, 8], strides = [1, 1]} : vector<8x136xf32> to vector<8x8xf32>
    %109 = vector.extract_strided_slice %107 {offsets = [0, 7], sizes = [8, 121], strides = [1, 1]} : vector<8x128xf32> to vector<8x121xf32>
    %110 = vector.extract_strided_slice %107 {offsets = [0, 0], sizes = [8, 7], strides = [1, 1]} : vector<8x128xf32> to vector<8x7xf32>
    %111 = tpu.concatenate %109, %110 in 1 : vector<8x121xf32>, vector<8x7xf32> -> vector<8x128xf32>
    %112 = tpu.iota {dimensions = array<i32: 0>} : vector<8x128xi32>
    %c1_i32_40 = arith.constant 1 : i32
    %113 = vector.broadcast %c1_i32_40 : i32 to vector<8x128xi32>
    %114 = arith.andi %112, %113 : vector<8x128xi32>
    %c0_i32_41 = arith.constant 0 : i32
    %115 = vector.broadcast %c0_i32_41 : i32 to vector<8x128xi32>
    %116 = arith.cmpi ne, %114, %115 : vector<8x128xi32>
    %117 = vector.extract_strided_slice %111 {offsets = [0, 127], sizes = [8, 1], strides = [1, 1]} : vector<8x128xf32> to vector<8x1xf32>
    %118 = vector.extract_strided_slice %111 {offsets = [0, 0], sizes = [8, 127], strides = [1, 1]} : vector<8x128xf32> to vector<8x127xf32>
    %119 = tpu.concatenate %117, %118 in 1 : vector<8x1xf32>, vector<8x127xf32> -> vector<8x128xf32>
    %120 = arith.select %116, %119, %111 : vector<8x128xi1>, vector<8x128xf32>
    %c2_i32_42 = arith.constant 2 : i32
    %121 = vector.broadcast %c2_i32_42 : i32 to vector<8x128xi32>
    %122 = arith.andi %112, %121 : vector<8x128xi32>
    %c0_i32_43 = arith.constant 0 : i32
    %123 = vector.broadcast %c0_i32_43 : i32 to vector<8x128xi32>
    %124 = arith.cmpi ne, %122, %123 : vector<8x128xi32>
    %125 = vector.extract_strided_slice %120 {offsets = [0, 126], sizes = [8, 2], strides = [1, 1]} : vector<8x128xf32> to vector<8x2xf32>
    %126 = vector.extract_strided_slice %120 {offsets = [0, 0], sizes = [8, 126], strides = [1, 1]} : vector<8x128xf32> to vector<8x126xf32>
    %127 = tpu.concatenate %125, %126 in 1 : vector<8x2xf32>, vector<8x126xf32> -> vector<8x128xf32>
    %128 = arith.select %124, %127, %120 : vector<8x128xi1>, vector<8x128xf32>
    %c4_i32_44 = arith.constant 4 : i32
    %129 = vector.broadcast %c4_i32_44 : i32 to vector<8x128xi32>
    %130 = arith.andi %112, %129 : vector<8x128xi32>
    %c0_i32_45 = arith.constant 0 : i32
    %131 = vector.broadcast %c0_i32_45 : i32 to vector<8x128xi32>
    %132 = arith.cmpi ne, %130, %131 : vector<8x128xi32>
    %133 = vector.extract_strided_slice %128 {offsets = [0, 124], sizes = [8, 4], strides = [1, 1]} : vector<8x128xf32> to vector<8x4xf32>
    %134 = vector.extract_strided_slice %128 {offsets = [0, 0], sizes = [8, 124], strides = [1, 1]} : vector<8x128xf32> to vector<8x124xf32>
    %135 = tpu.concatenate %133, %134 in 1 : vector<8x4xf32>, vector<8x124xf32> -> vector<8x128xf32>
    %136 = arith.select %132, %135, %128 : vector<8x128xi1>, vector<8x128xf32>
    %137 = vector.extract_strided_slice %136 {offsets = [0, 0], sizes = [8, 8], strides = [1, 1]} : vector<8x128xf32> to vector<8x8xf32>
    %138 = arith.addf %108, %137 : vector<8x8xf32>
    %cst_46 = arith.constant 0.353553385 : f32
    %139 = vector.broadcast %cst_46 : f32 to vector<8x8xf32>
    %140 = arith.mulf %138, %139 : vector<8x8xf32>
    %cst_47 = arith.constant -1.000000e+09 : f32
    %141 = vector.broadcast %cst_47 : f32 to vector<8x8xf32>
    %142 = arith.select %32, %141, %140 : vector<8x8xi1>, vector<8x8xf32>
    %cst_48 = arith.constant dense<0xFF800000> : vector<8xf32>
    %143 = vector.multi_reduction <maximumf>, %142, %cst_48 [1] : vector<8x8xf32> to vector<8xf32>
    %144 = vector.shape_cast %143 : vector<8xf32> to vector<8x1xf32>
    %145 = vector.broadcast %144 : vector<8x1xf32> to vector<8x8xf32>
    %146 = arith.subf %142, %145 : vector<8x8xf32>
    %147 = math.exp %146 : vector<8x8xf32>
    %cst_49 = arith.constant dense<0.000000e+00> : vector<8xf32>
    %148 = vector.multi_reduction <add>, %147, %cst_49 [1] : vector<8x8xf32> to vector<8xf32>
    %149 = vector.shape_cast %148 : vector<8xf32> to vector<8x1xf32>
    %150 = tpu.reciprocal %149 {approx = true} : vector<8x1xf32> -> vector<8x1xf32>
    %151 = vector.broadcast %150 : vector<8x1xf32> to vector<8x8xf32>
    %152 = arith.mulf %147, %151 : vector<8x8xf32>
    %153 = arith.truncf %152 : vector<8x8xf32> to vector<8x8xbf16>
    %154 = vector.extract_strided_slice %26 {offsets = [0, 8], sizes = [8, 8], strides = [1, 1]} : vector<8x32xbf16> to vector<8x8xbf16>
    %cst_50 = arith.constant dense<0.000000e+00> : vector<8x8xf32>
    %155 = tpu.matmul %153, %154, %cst_50 {dimension_numbers = #tpu.dot_dimension_numbers<[1], [0], [0], [1], [0, 0, 1, 1], [], []>} : vector<8x8xbf16>, vector<8x8xbf16>, vector<8x8xf32> -> vector<8x8xf32>
    %156 = arith.truncf %155 : vector<8x8xf32> to vector<8x8xbf16>
    %c0_51 = arith.constant 0 : index
    %c8 = arith.constant 8 : index
    %157 = vector.load %arg16[%c0_51, %c8] : memref<8x32xbf16, #tpu.memory_space<vmem>>, vector<8x8xbf16>
    tpu.vector_store %arg16[%c0_51, %c8], %156 {strides = array<i32>} : memref<8x32xbf16, #tpu.memory_space<vmem>>, vector<8x8xbf16>,
    %158 = vector.extract_strided_slice %25 {offsets = [0, 16], sizes = [8, 8], strides = [1, 1]} : vector<8x32xbf16> to vector<8x8xbf16>
    %159 = vector.extract_strided_slice %28 {offsets = [0, 16], sizes = [136, 8], strides = [1, 1]} : vector<136x32xbf16> to vector<136x8xbf16>
    %160 = vector.extract_strided_slice %29 {offsets = [0, 16], sizes = [2, 8], strides = [1, 1]} : vector<2x32xbf16> to vector<2x8xbf16>
    %cst_52 = arith.constant dense<0.000000e+00> : vector<8x136xf32>
    %161 = tpu.matmul %158, %159, %cst_52 {dimension_numbers = #tpu.dot_dimension_numbers<[1], [1], [0], [0], [0, 0, 1, 0], [], []>} : vector<8x8xbf16>, vector<136x8xbf16>, vector<8x136xf32> -> vector<8x136xf32>
    %cst_53 = arith.constant dense<0.000000e+00> : vector<2x136xf32>
    %162 = tpu.matmul %160, %159, %cst_53 {dimension_numbers = #tpu.dot_dimension_numbers<[1], [1], [0], [0], [0, 0, 1, 0], [], []>} : vector<2x8xbf16>, vector<136x8xbf16>, vector<2x136xf32> -> vector<2x136xf32>
    %163 = vector.extract_strided_slice %162 {offsets = [0, 0], sizes = [1, 136], strides = [1, 1]} : vector<2x136xf32> to vector<1x136xf32>
    %164 = vector.extract_strided_slice %162 {offsets = [1, 0], sizes = [1, 136], strides = [1, 1]} : vector<2x136xf32> to vector<1x136xf32>
    %165 = arith.select %35, %163, %164 : vector<1x136xi1>, vector<1x136xf32>
    %166 = vector.broadcast %165 : vector<1x136xf32> to vector<8x136xf32>
    %167 = arith.addf %161, %166 : vector<8x136xf32>
    %168 = vector.extract_strided_slice %167 {offsets = [0, 0], sizes = [8, 128], strides = [1, 1]} : vector<8x136xf32> to vector<8x128xf32>
    %169 = vector.extract_strided_slice %167 {offsets = [0, 128], sizes = [8, 8], strides = [1, 1]} : vector<8x136xf32> to vector<8x8xf32>
    %170 = vector.extract_strided_slice %168 {offsets = [0, 7], sizes = [8, 121], strides = [1, 1]} : vector<8x128xf32> to vector<8x121xf32>
    %171 = vector.extract_strided_slice %168 {offsets = [0, 0], sizes = [8, 7], strides = [1, 1]} : vector<8x128xf32> to vector<8x7xf32>
    %172 = tpu.concatenate %170, %171 in 1 : vector<8x121xf32>, vector<8x7xf32> -> vector<8x128xf32>
    %173 = tpu.iota {dimensions = array<i32: 0>} : vector<8x128xi32>
    %c1_i32_54 = arith.constant 1 : i32
    %174 = vector.broadcast %c1_i32_54 : i32 to vector<8x128xi32>
    %175 = arith.andi %173, %174 : vector<8x128xi32>
    %c0_i32_55 = arith.constant 0 : i32
    %176 = vector.broadcast %c0_i32_55 : i32 to vector<8x128xi32>
    %177 = arith.cmpi ne, %175, %176 : vector<8x128xi32>
    %178 = vector.extract_strided_slice %172 {offsets = [0, 127], sizes = [8, 1], strides = [1, 1]} : vector<8x128xf32> to vector<8x1xf32>
    %179 = vector.extract_strided_slice %172 {offsets = [0, 0], sizes = [8, 127], strides = [1, 1]} : vector<8x128xf32> to vector<8x127xf32>
    %180 = tpu.concatenate %178, %179 in 1 : vector<8x1xf32>, vector<8x127xf32> -> vector<8x128xf32>
    %181 = arith.select %177, %180, %172 : vector<8x128xi1>, vector<8x128xf32>
    %c2_i32_56 = arith.constant 2 : i32
    %182 = vector.broadcast %c2_i32_56 : i32 to vector<8x128xi32>
    %183 = arith.andi %173, %182 : vector<8x128xi32>
    %c0_i32_57 = arith.constant 0 : i32
    %184 = vector.broadcast %c0_i32_57 : i32 to vector<8x128xi32>
    %185 = arith.cmpi ne, %183, %184 : vector<8x128xi32>
    %186 = vector.extract_strided_slice %181 {offsets = [0, 126], sizes = [8, 2], strides = [1, 1]} : vector<8x128xf32> to vector<8x2xf32>
    %187 = vector.extract_strided_slice %181 {offsets = [0, 0], sizes = [8, 126], strides = [1, 1]} : vector<8x128xf32> to vector<8x126xf32>
    %188 = tpu.concatenate %186, %187 in 1 : vector<8x2xf32>, vector<8x126xf32> -> vector<8x128xf32>
    %189 = arith.select %185, %188, %181 : vector<8x128xi1>, vector<8x128xf32>
    %c4_i32_58 = arith.constant 4 : i32
    %190 = vector.broadcast %c4_i32_58 : i32 to vector<8x128xi32>
    %191 = arith.andi %173, %190 : vector<8x128xi32>
    %c0_i32_59 = arith.constant 0 : i32
    %192 = vector.broadcast %c0_i32_59 : i32 to vector<8x128xi32>
    %193 = arith.cmpi ne, %191, %192 : vector<8x128xi32>
    %194 = vector.extract_strided_slice %189 {offsets = [0, 124], sizes = [8, 4], strides = [1, 1]} : vector<8x128xf32> to vector<8x4xf32>
    %195 = vector.extract_strided_slice %189 {offsets = [0, 0], sizes = [8, 124], strides = [1, 1]} : vector<8x128xf32> to vector<8x124xf32>
    %196 = tpu.concatenate %194, %195 in 1 : vector<8x4xf32>, vector<8x124xf32> -> vector<8x128xf32>
    %197 = arith.select %193, %196, %189 : vector<8x128xi1>, vector<8x128xf32>
    %198 = vector.extract_strided_slice %197 {offsets = [0, 0], sizes = [8, 8], strides = [1, 1]} : vector<8x128xf32> to vector<8x8xf32>
    %199 = arith.addf %169, %198 : vector<8x8xf32>
    %cst_60 = arith.constant 0.353553385 : f32
    %200 = vector.broadcast %cst_60 : f32 to vector<8x8xf32>
    %201 = arith.mulf %199, %200 : vector<8x8xf32>
    %cst_61 = arith.constant -1.000000e+09 : f32
    %202 = vector.broadcast %cst_61 : f32 to vector<8x8xf32>
    %203 = arith.select %32, %202, %201 : vector<8x8xi1>, vector<8x8xf32>
    %cst_62 = arith.constant dense<0xFF800000> : vector<8xf32>
    %204 = vector.multi_reduction <maximumf>, %203, %cst_62 [1] : vector<8x8xf32> to vector<8xf32>
    %205 = vector.shape_cast %204 : vector<8xf32> to vector<8x1xf32>
    %206 = vector.broadcast %205 : vector<8x1xf32> to vector<8x8xf32>
    %207 = arith.subf %203, %206 : vector<8x8xf32>
    %208 = math.exp %207 : vector<8x8xf32>
    %cst_63 = arith.constant dense<0.000000e+00> : vector<8xf32>
    %209 = vector.multi_reduction <add>, %208, %cst_63 [1] : vector<8x8xf32> to vector<8xf32>
    %210 = vector.shape_cast %209 : vector<8xf32> to vector<8x1xf32>
    %211 = tpu.reciprocal %210 {approx = true} : vector<8x1xf32> -> vector<8x1xf32>
    %212 = vector.broadcast %211 : vector<8x1xf32> to vector<8x8xf32>
    %213 = arith.mulf %208, %212 : vector<8x8xf32>
    %214 = arith.truncf %213 : vector<8x8xf32> to vector<8x8xbf16>
    %215 = vector.extract_strided_slice %26 {offsets = [0, 16], sizes = [8, 8], strides = [1, 1]} : vector<8x32xbf16> to vector<8x8xbf16>
    %cst_64 = arith.constant dense<0.000000e+00> : vector<8x8xf32>
    %216 = tpu.matmul %214, %215, %cst_64 {dimension_numbers = #tpu.dot_dimension_numbers<[1], [0], [0], [1], [0, 0, 1, 1], [], []>} : vector<8x8xbf16>, vector<8x8xbf16>, vector<8x8xf32> -> vector<8x8xf32>
    %217 = arith.truncf %216 : vector<8x8xf32> to vector<8x8xbf16>
    %c0_65 = arith.constant 0 : index
    %c16 = arith.constant 16 : index
    %218 = vector.load %arg16[%c0_65, %c16] : memref<8x32xbf16, #tpu.memory_space<vmem>>, vector<8x8xbf16>
    tpu.vector_store %arg16[%c0_65, %c16], %217 {strides = array<i32>} : memref<8x32xbf16, #tpu.memory_space<vmem>>, vector<8x8xbf16>,
    %219 = vector.extract_strided_slice %25 {offsets = [0, 24], sizes = [8, 8], strides = [1, 1]} : vector<8x32xbf16> to vector<8x8xbf16>
    %220 = vector.extract_strided_slice %28 {offsets = [0, 24], sizes = [136, 8], strides = [1, 1]} : vector<136x32xbf16> to vector<136x8xbf16>
    %221 = vector.extract_strided_slice %29 {offsets = [0, 24], sizes = [2, 8], strides = [1, 1]} : vector<2x32xbf16> to vector<2x8xbf16>
    %cst_66 = arith.constant dense<0.000000e+00> : vector<8x136xf32>
    %222 = tpu.matmul %219, %220, %cst_66 {dimension_numbers = #tpu.dot_dimension_numbers<[1], [1], [0], [0], [0, 0, 1, 0], [], []>} : vector<8x8xbf16>, vector<136x8xbf16>, vector<8x136xf32> -> vector<8x136xf32>
    %cst_67 = arith.constant dense<0.000000e+00> : vector<2x136xf32>
    %223 = tpu.matmul %221, %220, %cst_67 {dimension_numbers = #tpu.dot_dimension_numbers<[1], [1], [0], [0], [0, 0, 1, 0], [], []>} : vector<2x8xbf16>, vector<136x8xbf16>, vector<2x136xf32> -> vector<2x136xf32>
    %224 = vector.extract_strided_slice %223 {offsets = [0, 0], sizes = [1, 136], strides = [1, 1]} : vector<2x136xf32> to vector<1x136xf32>
    %225 = vector.extract_strided_slice %223 {offsets = [1, 0], sizes = [1, 136], strides = [1, 1]} : vector<2x136xf32> to vector<1x136xf32>
    %226 = arith.select %35, %224, %225 : vector<1x136xi1>, vector<1x136xf32>
    %227 = vector.broadcast %226 : vector<1x136xf32> to vector<8x136xf32>
    %228 = arith.addf %222, %227 : vector<8x136xf32>
    %229 = vector.extract_strided_slice %228 {offsets = [0, 0], sizes = [8, 128], strides = [1, 1]} : vector<8x136xf32> to vector<8x128xf32>
    %230 = vector.extract_strided_slice %228 {offsets = [0, 128], sizes = [8, 8], strides = [1, 1]} : vector<8x136xf32> to vector<8x8xf32>
    %231 = vector.extract_strided_slice %229 {offsets = [0, 7], sizes = [8, 121], strides = [1, 1]} : vector<8x128xf32> to vector<8x121xf32>
    %232 = vector.extract_strided_slice %229 {offsets = [0, 0], sizes = [8, 7], strides = [1, 1]} : vector<8x128xf32> to vector<8x7xf32>
    %233 = tpu.concatenate %231, %232 in 1 : vector<8x121xf32>, vector<8x7xf32> -> vector<8x128xf32>
    %234 = tpu.iota {dimensions = array<i32: 0>} : vector<8x128xi32>
    %c1_i32_68 = arith.constant 1 : i32
    %235 = vector.broadcast %c1_i32_68 : i32 to vector<8x128xi32>
    %236 = arith.andi %234, %235 : vector<8x128xi32>
    %c0_i32_69 = arith.constant 0 : i32
    %237 = vector.broadcast %c0_i32_69 : i32 to vector<8x128xi32>
    %238 = arith.cmpi ne, %236, %237 : vector<8x128xi32>
    %239 = vector.extract_strided_slice %233 {offsets = [0, 127], sizes = [8, 1], strides = [1, 1]} : vector<8x128xf32> to vector<8x1xf32>
    %240 = vector.extract_strided_slice %233 {offsets = [0, 0], sizes = [8, 127], strides = [1, 1]} : vector<8x128xf32> to vector<8x127xf32>
    %241 = tpu.concatenate %239, %240 in 1 : vector<8x1xf32>, vector<8x127xf32> -> vector<8x128xf32>
    %242 = arith.select %238, %241, %233 : vector<8x128xi1>, vector<8x128xf32>
    %c2_i32_70 = arith.constant 2 : i32
    %243 = vector.broadcast %c2_i32_70 : i32 to vector<8x128xi32>
    %244 = arith.andi %234, %243 : vector<8x128xi32>
    %c0_i32_71 = arith.constant 0 : i32
    %245 = vector.broadcast %c0_i32_71 : i32 to vector<8x128xi32>
    %246 = arith.cmpi ne, %244, %245 : vector<8x128xi32>
    %247 = vector.extract_strided_slice %242 {offsets = [0, 126], sizes = [8, 2], strides = [1, 1]} : vector<8x128xf32> to vector<8x2xf32>
    %248 = vector.extract_strided_slice %242 {offsets = [0, 0], sizes = [8, 126], strides = [1, 1]} : vector<8x128xf32> to vector<8x126xf32>
    %249 = tpu.concatenate %247, %248 in 1 : vector<8x2xf32>, vector<8x126xf32> -> vector<8x128xf32>
    %250 = arith.select %246, %249, %242 : vector<8x128xi1>, vector<8x128xf32>
    %c4_i32_72 = arith.constant 4 : i32
    %251 = vector.broadcast %c4_i32_72 : i32 to vector<8x128xi32>
    %252 = arith.andi %234, %251 : vector<8x128xi32>
    %c0_i32_73 = arith.constant 0 : i32
    %253 = vector.broadcast %c0_i32_73 : i32 to vector<8x128xi32>
    %254 = arith.cmpi ne, %252, %253 : vector<8x128xi32>
    %255 = vector.extract_strided_slice %250 {offsets = [0, 124], sizes = [8, 4], strides = [1, 1]} : vector<8x128xf32> to vector<8x4xf32>
    %256 = vector.extract_strided_slice %250 {offsets = [0, 0], sizes = [8, 124], strides = [1, 1]} : vector<8x128xf32> to vector<8x124xf32>
    %257 = tpu.concatenate %255, %256 in 1 : vector<8x4xf32>, vector<8x124xf32> -> vector<8x128xf32>
    %258 = arith.select %254, %257, %250 : vector<8x128xi1>, vector<8x128xf32>
    %259 = vector.extract_strided_slice %258 {offsets = [0, 0], sizes = [8, 8], strides = [1, 1]} : vector<8x128xf32> to vector<8x8xf32>
    %260 = arith.addf %230, %259 : vector<8x8xf32>
    %cst_74 = arith.constant 0.353553385 : f32
    %261 = vector.broadcast %cst_74 : f32 to vector<8x8xf32>
    %262 = arith.mulf %260, %261 : vector<8x8xf32>
    %cst_75 = arith.constant -1.000000e+09 : f32
    %263 = vector.broadcast %cst_75 : f32 to vector<8x8xf32>
    %264 = arith.select %32, %263, %262 : vector<8x8xi1>, vector<8x8xf32>
    %cst_76 = arith.constant dense<0xFF800000> : vector<8xf32>
    %265 = vector.multi_reduction <maximumf>, %264, %cst_76 [1] : vector<8x8xf32> to vector<8xf32>
    %266 = vector.shape_cast %265 : vector<8xf32> to vector<8x1xf32>
    %267 = vector.broadcast %266 : vector<8x1xf32> to vector<8x8xf32>
    %268 = arith.subf %264, %267 : vector<8x8xf32>
    %269 = math.exp %268 : vector<8x8xf32>
    %cst_77 = arith.constant dense<0.000000e+00> : vector<8xf32>
    %270 = vector.multi_reduction <add>, %269, %cst_77 [1] : vector<8x8xf32> to vector<8xf32>
    %271 = vector.shape_cast %270 : vector<8xf32> to vector<8x1xf32>
    %272 = tpu.reciprocal %271 {approx = true} : vector<8x1xf32> -> vector<8x1xf32>
    %273 = vector.broadcast %272 : vector<8x1xf32> to vector<8x8xf32>
    %274 = arith.mulf %269, %273 : vector<8x8xf32>
    %275 = arith.truncf %274 : vector<8x8xf32> to vector<8x8xbf16>
    %276 = vector.extract_strided_slice %26 {offsets = [0, 24], sizes = [8, 8], strides = [1, 1]} : vector<8x32xbf16> to vector<8x8xbf16>
    %cst_78 = arith.constant dense<0.000000e+00> : vector<8x8xf32>
    %277 = tpu.matmul %275, %276, %cst_78 {dimension_numbers = #tpu.dot_dimension_numbers<[1], [0], [0], [1], [0, 0, 1, 1], [], []>} : vector<8x8xbf16>, vector<8x8xbf16>, vector<8x8xf32> -> vector<8x8xf32>
    %278 = arith.truncf %277 : vector<8x8xf32> to vector<8x8xbf16>
    %c0_79 = arith.constant 0 : index
    %c24 = arith.constant 24 : index
    %279 = vector.load %arg16[%c0_79, %c24] : memref<8x32xbf16, #tpu.memory_space<vmem>>, vector<8x8xbf16>
    tpu.vector_store %arg16[%c0_79, %c24], %278 {strides = array<i32>} : memref<8x32xbf16, #tpu.memory_space<vmem>>, vector<8x8xbf16>,
    %c0_80 = arith.constant 0 : index
    %c0_81 = arith.constant 0 : index
    %280 = vector.load %arg16[%c0_80, %c0_81] : memref<8x32xbf16, #tpu.memory_space<vmem>>, vector<8x32xbf16>
    %c0_82 = arith.constant 0 : index
    %c0_83 = arith.constant 0 : index
    %281 = vector.load %arg13[%c0_82, %c0_83] : memref<32x32xbf16, #tpu.memory_space<vmem>>, vector<32x32xbf16>
    %cst_84 = arith.constant dense<0.000000e+00> : vector<8x32xf32>
    %282 = tpu.matmul %280, %281, %cst_84 {dimension_numbers = #tpu.dot_dimension_numbers<[1], [0], [0], [1], [0, 0, 1, 1], [], []>} : vector<8x32xbf16>, vector<32x32xbf16>, vector<8x32xf32> -> vector<8x32xf32>
    %c0_85 = arith.constant 0 : index
    %c0_86 = arith.constant 0 : index
    %283 = vector.load %arg14[%c0_85, %c0_86] : memref<1x32xf32, #tpu.memory_space<vmem>>, vector<1x32xf32>
    %284 = vector.broadcast %283 : vector<1x32xf32> to vector<8x32xf32>
    %285 = arith.addf %282, %284 : vector<8x32xf32>
    %c0_87 = arith.constant 0 : index
    %c0_88 = arith.constant 0 : index
    %c0_89 = arith.constant 0 : index
    %286 = vector.load %arg15[%c0_87, %c0_88, %c0_89] : memref<1x8x32xf32, #tpu.memory_space<vmem>>, vector<1x8x32xf32>
    %287 = vector.shape_cast %286 : vector<1x8x32xf32> to vector<8x32xf32>
    %288 = vector.shape_cast %285 : vector<8x32xf32> to vector<1x8x32xf32>
    tpu.vector_store %arg15[%c0_87, %c0_88, %c0_89], %288 {strides = array<i32>} : memref<1x8x32xf32, #tpu.memory_space<vmem>>, vector<1x8x32xf32>,
    return
  }
  func.func @transform_0(%arg0: i32, %arg1: memref<2xi32, #tpu.memory_space<smem>>) -> (i32, i32, i32) {
    %c0_i32 = arith.constant 0 : i32
    %c0_i32_0 = arith.constant 0 : i32
    %c0_i32_1 = arith.constant 0 : i32
    return %arg0, %c0_i32, %c0_i32_0 : i32, i32, i32
  }
  func.func @transform_1(%arg0: i32, %arg1: memref<2xi32, #tpu.memory_space<smem>>) -> (i32, i32, i32) {
    %c0_i32 = arith.constant 0 : i32
    %c0_i32_0 = arith.constant 0 : i32
    %c0_i32_1 = arith.constant 0 : i32
    return %arg0, %c0_i32, %c0_i32_0 : i32, i32, i32
  }
  func.func @transform_2(%arg0: i32, %arg1: memref<2xi32, #tpu.memory_space<smem>>) -> (i32, i32, i32) {
    %c0_i32 = arith.constant 0 : i32
    %c0_i32_0 = arith.constant 0 : i32
    %c0_i32_1 = arith.constant 0 : i32
    return %arg0, %c0_i32, %c0_i32_0 : i32, i32, i32
  }
  func.func @transform_3(%arg0: i32, %arg1: memref<2xi32, #tpu.memory_space<smem>>) -> (i32, i32, i32) {
    %c0_i32 = arith.constant 0 : i32
    %c0_i32_0 = arith.constant 0 : i32
    %c0_i32_1 = arith.constant 0 : i32
    return %arg0, %c0_i32, %c0_i32_0 : i32, i32, i32
  }
  func.func @transform_4(%arg0: i32, %arg1: memref<2xi32, #tpu.memory_space<smem>>) -> (i32, i32) {
    %c0_i32 = arith.constant 0 : i32
    %c0_i32_0 = arith.constant 0 : i32
    %c0_i32_1 = arith.constant 0 : i32
    return %c0_i32, %c0_i32_0 : i32, i32
  }
  func.func @transform_5(%arg0: i32, %arg1: memref<2xi32, #tpu.memory_space<smem>>) -> (i32, i32) {
    %c0_i32 = arith.constant 0 : i32
    %c0_i32_0 = arith.constant 0 : i32
    %c0_i32_1 = arith.constant 0 : i32
    return %c0_i32, %c0_i32_0 : i32, i32
  }
  func.func @transform_6(%arg0: i32, %arg1: memref<2xi32, #tpu.memory_space<smem>>) -> (i32, i32) {
    %c0_i32 = arith.constant 0 : i32
    %c0_i32_0 = arith.constant 0 : i32
    %c0_i32_1 = arith.constant 0 : i32
    return %c0_i32, %c0_i32_0 : i32, i32
  }
  func.func @transform_7(%arg0: i32, %arg1: memref<2xi32, #tpu.memory_space<smem>>) -> (i32, i32) {
    %c0_i32 = arith.constant 0 : i32
    %c0_i32_0 = arith.constant 0 : i32
    %c0_i32_1 = arith.constant 0 : i32
    return %c0_i32, %c0_i32_0 : i32, i32
  }
  func.func @transform_8(%arg0: i32, %arg1: memref<2xi32, #tpu.memory_space<smem>>) -> (i32, i32) {
    %c0_i32 = arith.constant 0 : i32
    %c0_i32_0 = arith.constant 0 : i32
    %c0_i32_1 = arith.constant 0 : i32
    return %c0_i32, %c0_i32_0 : i32, i32
  }
  func.func @transform_9(%arg0: i32, %arg1: memref<2xi32, #tpu.memory_space<smem>>) -> (i32, i32) {
    %c0_i32 = arith.constant 0 : i32
    %c0_i32_0 = arith.constant 0 : i32
    %c0_i32_1 = arith.constant 0 : i32
    return %c0_i32, %c0_i32_0 : i32, i32
  }
  func.func @transform_10(%arg0: i32, %arg1: memref<2xi32, #tpu.memory_space<smem>>) -> (i32, i32) {
    %c0_i32 = arith.constant 0 : i32
    %c0_i32_0 = arith.constant 0 : i32
    %c0_i32_1 = arith.constant 0 : i32
    return %c0_i32, %c0_i32_0 : i32, i32
  }
  func.func @transform_11(%arg0: i32, %arg1: memref<2xi32, #tpu.memory_space<smem>>) -> (i32, i32) {
    %c0_i32 = arith.constant 0 : i32
    %c0_i32_0 = arith.constant 0 : i32
    %c0_i32_1 = arith.constant 0 : i32
    return %c0_i32, %c0_i32_0 : i32, i32
  }
  func.func @transform_12(%arg0: i32, %arg1: memref<2xi32, #tpu.memory_space<smem>>) -> (i32, i32) {
    %c0_i32 = arith.constant 0 : i32
    %c0_i32_0 = arith.constant 0 : i32
    %c0_i32_1 = arith.constant 0 : i32
    return %c0_i32, %c0_i32_0 : i32, i32
  }
  func.func @transform_13(%arg0: i32, %arg1: memref<2xi32, #tpu.memory_space<smem>>) -> (i32, i32, i32) {
    %c0_i32 = arith.constant 0 : i32
    %c0_i32_0 = arith.constant 0 : i32
    %c0_i32_1 = arith.constant 0 : i32
    return %arg0, %c0_i32, %c0_i32_0 : i32, i32, i32
  }
}

</mosaic_0001>

<llo_original>
// kernel: tpu_custom_call.1
$region0: #{tpu_custom_call.1}
  #allocation0 [shape = 'u32[]', space=smem, size = 0x4, offset = 0x4, fixed_abs, tag = 'smem constant byte address 0x4 - core index']
  #allocation1 [shape = 'u32[144,128]{1,0:T(1,128)}', space=vmem, size = 0x12000, scoped, tag = 'internal scratch']
  #allocation2 [shape = 'bf16[8,32]{1,0:T(8,128)(2,1)}', space=vmem, size = 0x800, scoped, tag = 'scratch operand']
  #allocation3 [shape = 's32[1]{0}', space=sflag, size = 0x4, scoped, tag = 'scoped memory for tpu_custom_call.1']
  #allocation4 [shape = 'u8[512]{0}', space=smem, size = 0x200, scoped, tag = 'prefetched SMEM operand 0']
  %s0 = inlined_call_operand.vmem [shape: s32[2], index: 0, kind: input, shape index: {}]
  %s1 = inlined_call_operand.vmem [shape: bf16[2,8,32], index: 1, kind: input, shape index: {}]
  %s2 = inlined_call_operand.vmem [shape: bf16[2,8,32], index: 2, kind: input, shape index: {}]
  %s3 = inlined_call_operand.vmem [shape: bf16[2,8,32], index: 3, kind: input, shape index: {}]
  %s4 = inlined_call_operand.vmem [shape: bf16[2,128,32], index: 4, kind: input, shape index: {}]
  %s5 = inlined_call_operand.vmem [shape: bf16[32,32], index: 5, kind: input, shape index: {}]
  %s6 = inlined_call_operand.vmem [shape: bf16[32,32], index: 6, kind: input, shape index: {}]
  %s7 = inlined_call_operand.vmem [shape: bf16[32,32], index: 7, kind: input, shape index: {}]
  %s8 = inlined_call_operand.vmem [shape: f32[1,32], index: 8, kind: input, shape index: {}]
  %s9 = inlined_call_operand.vmem [shape: f32[1,32], index: 9, kind: input, shape index: {}]
  %s10 = inlined_call_operand.vmem [shape: f32[1,32], index: 10, kind: input, shape index: {}]
  %s11 = inlined_call_operand.vmem [shape: bf16[2,32], index: 11, kind: input, shape index: {}]
  %s12 = inlined_call_operand.vmem [shape: bf16[32,32], index: 12, kind: input, shape index: {}]
  %s13 = inlined_call_operand.vmem [shape: f32[1,32], index: 13, kind: input, shape index: {}]
  %s14 = inlined_call_operand.hbm [shape: bf16[2,8,32], index: 14, kind: output, shape index: {}]
  %s15 = sld [smem:[#allocation0]]
  $region85: #{tpu_custom_call.1} parent=0
    _
  %s17 = ssub.s32 1, %s15
  %s18 = scalar_select 0, %s17, %s15
  %s19 = sshll.u32 %s0, 4
  %s20 = int_to_ptr.vmem [resolvable:$true] %s19
  %22 = dma.vmem_to_smem %s20, 16, [#allocation4], [#allocation3]
  %23 = dma.done [#allocation3], 16
  %24 = sfence
  $region1: #{tpu_custom_call.1} parent=0
    #allocation5 [shape = 'u8[4096]{0}', space=vmem, size = 0x1000, scoped, tag = 'output window, operand 0']
    #allocation6 [shape = 's32[2]{0}', space=sflag, size = 0x8, scoped, tag = 'scoped memory for tpu_custom_call.1']
    %25 = vsyncpa [#allocation6], 0
    %s26 = scalar_lea.sflag [#allocation6], 1
    %27 = vsyncpa %s26, 0
    loop: start=0, step=1, limit=4
    $region2: #{tpu_custom_call.1} parent=1 // loop_pre_header
      _
    $region3: #{tpu_custom_call.1} parent=1 // loop_header
      %s29 = sphi 0, %s33
      %p30 = scmp.ge.s32.totalorder %s29, 4
      %s39 = sphi 0, %s41
      %s42 = sphi 0, %s39
      %s43 = sphi 0, %s42
      %s59 = sphi 0, %s43
      %s65 = sphi 0, %s67
      %s68 = sphi 0, %s65
      %s69 = sphi 0, %s68
      %s85 = sphi 0, %s69
      %s91 = sphi 0, %s93
      %s94 = sphi 0, %s91
      %s95 = sphi 0, %s94
      %s111 = sphi 0, %s95
      %s117 = sphi 0, %s119
      %s120 = sphi 0, %s117
      %s121 = sphi 0, %s120
      %s137 = sphi 0, %s121
      %s141 = sphi 0, %s141
      %s143 = sphi 0, %s141
      %s144 = sphi 0, %s143
      %s158 = sphi 0, %s144
      %s162 = sphi 0, %s162
      %s164 = sphi 0, %s162
      %s165 = sphi 0, %s164
      %s179 = sphi 0, %s165
      %s183 = sphi 0, %s183
      %s185 = sphi 0, %s183
      %s186 = sphi 0, %s185
      %s200 = sphi 0, %s186
      %s204 = sphi 0, %s204
      %s206 = sphi 0, %s204
      %s207 = sphi 0, %s206
      %s221 = sphi 0, %s207
      %s225 = sphi 0, %s225
      %s227 = sphi 0, %s225
      %s228 = sphi 0, %s227
      %s242 = sphi 0, %s228
      %s246 = sphi 0, %s246
      %s248 = sphi 0, %s246
      %s249 = sphi 0, %s248
      %s263 = sphi 0, %s249
      %s267 = sphi 0, %s267
      %s269 = sphi 0, %s267
      %s270 = sphi 0, %s269
      %s284 = sphi 0, %s270
      %s288 = sphi 0, %s288
      %s290 = sphi 0, %s288
      %s291 = sphi 0, %s290
      %s305 = sphi 0, %s291
      %s309 = sphi 0, %s309
      %s311 = sphi 0, %s309
      %s312 = sphi 0, %s311
      %s326 = sphi 0, %s312
      %s332 = sphi 0, %s334
      %s335 = sphi 0, %s332
      %s336 = sphi 0, %s335
      %s352 = sphi 0, %s336
    $region4: #{tpu_custom_call.1} parent=1 // loop_header_branch
      %32 = sbr.rel (%p30) target = $region8
    $region5: #{tpu_custom_call.1} parent=1 // loop_body
      %s34 = ssub.s32 %s29, 1
      %s35 = ssub.s32 %s29, 2
      %s36 = sadd.s32 %s29, 1
      %s37 = ssub.s32 %s29, %s36
      %p38 = scmp.eq.s32.totalorder %s37, 0
      %s40 = sadd.s32 %s39, 1
      %s41 = scalar_select %p38, %s39, %s40
      %p44 = pneg %p38
      %p45 = scmp.eq.s32.totalorder %s29, 1
      %p46 = por %p44, %p45
      %p47 = scmp.ne.s32.totalorder %s39, %s42
      %p48 = scmp.eq.s32.totalorder %s29, 0
      %p49 = por %p47, %p48
      %p50 = scmp.ne.s32.totalorder %s39, %s42
      %p51 = scmp.eq.s32.totalorder %s34, 1
      %p52 = por %p50, %p51
      %p53 = scmp.ne.s32.totalorder %s42, %s43
      %p54 = scmp.eq.s32.totalorder %s34, 0
      %p55 = por %p53, %p54
      %p56 = scmp.ne.s32.totalorder %s42, %s43
      %p57 = scmp.eq.s32.totalorder %s35, 1
      %p58 = por %p56, %p57
      %p60 = scmp.ne.s32.totalorder %s43, %s59
      %p61 = scmp.eq.s32.totalorder %s35, 0
      %p62 = por %p60, %p61
      %s63 = ssub.s32 %s29, %s36
      %p64 = scmp.eq.s32.totalorder %s63, 0
      %s66 = sadd.s32 %s65, 1
      %s67 = scalar_select %p64, %s65, %s66
      %p70 = pneg %p64
      %p71 = scmp.eq.s32.totalorder %s29, 1
      %p72 = por %p70, %p71
      %p73 = scmp.ne.s32.totalorder %s65, %s68
      %p74 = scmp.eq.s32.totalorder %s29, 0
      %p75 = por %p73, %p74
      %p76 = scmp.ne.s32.totalorder %s65, %s68
      %p77 = scmp.eq.s32.totalorder %s34, 1
      %p78 = por %p76, %p77
      %p79 = scmp.ne.s32.totalorder %s68, %s69
      %p80 = scmp.eq.s32.totalorder %s34, 0
      %p81 = por %p79, %p80
      %p82 = scmp.ne.s32.totalorder %s68, %s69
      %p83 = scmp.eq.s32.totalorder %s35, 1
      %p84 = por %p82, %p83
      %p86 = scmp.ne.s32.totalorder %s69, %s85
      %p87 = scmp.eq.s32.totalorder %s35, 0
      %p88 = por %p86, %p87
      %s89 = ssub.s32 %s29, %s36
      %p90 = scmp.eq.s32.totalorder %s89, 0
      %s92 = sadd.s32 %s91, 1
      %s93 = scalar_select %p90, %s91, %s92
      %p96 = pneg %p90
      %p97 = scmp.eq.s32.totalorder %s29, 1
      %p98 = por %p96, %p97
      %p99 = scmp.ne.s32.totalorder %s91, %s94
      %p100 = scmp.eq.s32.totalorder %s29, 0
      %p101 = por %p99, %p100
      %p102 = scmp.ne.s32.totalorder %s91, %s94
      %p103 = scmp.eq.s32.totalorder %s34, 1
      %p104 = por %p102, %p103
      %p105 = scmp.ne.s32.totalorder %s94, %s95
      %p106 = scmp.eq.s32.totalorder %s34, 0
      %p107 = por %p105, %p106
      %p108 = scmp.ne.s32.totalorder %s94, %s95
      %p109 = scmp.eq.s32.totalorder %s35, 1
      %p110 = por %p108, %p109
      %p112 = scmp.ne.s32.totalorder %s95, %s111
      %p113 = scmp.eq.s32.totalorder %s35, 0
      %p114 = por %p112, %p113
      %s115 = ssub.s32 %s29, %s36
      %p116 = scmp.eq.s32.totalorder %s115, 0
      %s118 = sadd.s32 %s117, 1
      %s119 = scalar_select %p116, %s117, %s118
      %p122 = pneg %p116
      %p123 = scmp.eq.s32.totalorder %s29, 1
      %p124 = por %p122, %p123
      %p125 = scmp.ne.s32.totalorder %s117, %s120
      %p126 = scmp.eq.s32.totalorder %s29, 0
      %p127 = por %p125, %p126
      %p128 = scmp.ne.s32.totalorder %s117, %s120
      %p129 = scmp.eq.s32.totalorder %s34, 1
      %p130 = por %p128, %p129
      %p131 = scmp.ne.s32.totalorder %s120, %s121
      %p132 = scmp.eq.s32.totalorder %s34, 0
      %p133 = por %p131, %p132
      %p134 = scmp.ne.s32.totalorder %s120, %s121
      %p135 = scmp.eq.s32.totalorder %s35, 1
      %p136 = por %p134, %p135
      %p138 = scmp.ne.s32.totalorder %s121, %s137
      %p139 = scmp.eq.s32.totalorder %s35, 0
      %p140 = por %p138, %p139
      %s142 = sadd.s32 %s141, 1
      %p145 = scmp.eq.s32.totalorder %s29, 1
      %p146 = scmp.ne.s32.totalorder %s141, %s143
      %p147 = scmp.eq.s32.totalorder %s29, 0
      %p148 = por %p146, %p147
      %p149 = scmp.ne.s32.totalorder %s141, %s143
      %p150 = scmp.eq.s32.totalorder %s34, 1
      %p151 = por %p149, %p150
      %p152 = scmp.ne.s32.totalorder %s143, %s144
      %p153 = scmp.eq.s32.totalorder %s34, 0
      %p154 = por %p152, %p153
      %p155 = scmp.ne.s32.totalorder %s143, %s144
      %p156 = scmp.eq.s32.totalorder %s35, 1
      %p157 = por %p155, %p156
      %p159 = scmp.ne.s32.totalorder %s144, %s158
      %p160 = scmp.eq.s32.totalorder %s35, 0
      %p161 = por %p159, %p160
      %s163 = sadd.s32 %s162, 1
      %p166 = scmp.eq.s32.totalorder %s29, 1
      %p167 = scmp.ne.s32.totalorder %s162, %s164
      %p168 = scmp.eq.s32.totalorder %s29, 0
      %p169 = por %p167, %p168
      %p170 = scmp.ne.s32.totalorder %s162, %s164
      %p171 = scmp.eq.s32.totalorder %s34, 1
      %p172 = por %p170, %p171
      %p173 = scmp.ne.s32.totalorder %s164, %s165
      %p174 = scmp.eq.s32.totalorder %s34, 0
      %p175 = por %p173, %p174
      %p176 = scmp.ne.s32.totalorder %s164, %s165
      %p177 = scmp.eq.s32.totalorder %s35, 1
      %p178 = por %p176, %p177
      %p180 = scmp.ne.s32.totalorder %s165, %s179
      %p181 = scmp.eq.s32.totalorder %s35, 0
      %p182 = por %p180, %p181
      %s184 = sadd.s32 %s183, 1
      %p187 = scmp.eq.s32.totalorder %s29, 1
      %p188 = scmp.ne.s32.totalorder %s183, %s185
      %p189 = scmp.eq.s32.totalorder %s29, 0
      %p190 = por %p188, %p189
      %p191 = scmp.ne.s32.totalorder %s183, %s185
      %p192 = scmp.eq.s32.totalorder %s34, 1
      %p193 = por %p191, %p192
      %p194 = scmp.ne.s32.totalorder %s185, %s186
      %p195 = scmp.eq.s32.totalorder %s34, 0
      %p196 = por %p194, %p195
      %p197 = scmp.ne.s32.totalorder %s185, %s186
      %p198 = scmp.eq.s32.totalorder %s35, 1
      %p199 = por %p197, %p198
      %p201 = scmp.ne.s32.totalorder %s186, %s200
      %p202 = scmp.eq.s32.totalorder %s35, 0
      %p203 = por %p201, %p202
      %s205 = sadd.s32 %s204, 1
      %p208 = scmp.eq.s32.totalorder %s29, 1
      %p209 = scmp.ne.s32.totalorder %s204, %s206
      %p210 = scmp.eq.s32.totalorder %s29, 0
      %p211 = por %p209, %p210
      %p212 = scmp.ne.s32.totalorder %s204, %s206
      %p213 = scmp.eq.s32.totalorder %s34, 1
      %p214 = por %p212, %p213
      %p215 = scmp.ne.s32.totalorder %s206, %s207
      %p216 = scmp.eq.s32.totalorder %s34, 0
      %p217 = por %p215, %p216
      %p218 = scmp.ne.s32.totalorder %s206, %s207
      %p219 = scmp.eq.s32.totalorder %s35, 1
      %p220 = por %p218, %p219
      %p222 = scmp.ne.s32.totalorder %s207, %s221
      %p223 = scmp.eq.s32.totalorder %s35, 0
      %p224 = por %p222, %p223
      %s226 = sadd.s32 %s225, 1
      %p229 = scmp.eq.s32.totalorder %s29, 1
      %p230 = scmp.ne.s32.totalorder %s225, %s227
      %p231 = scmp.eq.s32.totalorder %s29, 0
      %p232 = por %p230, %p231
      %p233 = scmp.ne.s32.totalorder %s225, %s227
      %p234 = scmp.eq.s32.totalorder %s34, 1
      %p235 = por %p233, %p234
      %p236 = scmp.ne.s32.totalorder %s227, %s228
      %p237 = scmp.eq.s32.totalorder %s34, 0
      %p238 = por %p236, %p237
      %p239 = scmp.ne.s32.totalorder %s227, %s228
      %p240 = scmp.eq.s32.totalorder %s35, 1
      %p241 = por %p239, %p240
      %p243 = scmp.ne.s32.totalorder %s228, %s242
      %p244 = scmp.eq.s32.totalorder %s35, 0
      %p245 = por %p243, %p244
      %s247 = sadd.s32 %s246, 1
      %p250 = scmp.eq.s32.totalorder %s29, 1
      %p251 = scmp.ne.s32.totalorder %s246, %s248
      %p252 = scmp.eq.s32.totalorder %s29, 0
      %p253 = por %p251, %p252
      %p254 = scmp.ne.s32.totalorder %s246, %s248
      %p255 = scmp.eq.s32.totalorder %s34, 1
      %p256 = por %p254, %p255
      %p257 = scmp.ne.s32.totalorder %s248, %s249
      %p258 = scmp.eq.s32.totalorder %s34, 0
      %p259 = por %p257, %p258
      %p260 = scmp.ne.s32.totalorder %s248, %s249
      %p261 = scmp.eq.s32.totalorder %s35, 1
      %p262 = por %p260, %p261
      %p264 = scmp.ne.s32.totalorder %s249, %s263
      %p265 = scmp.eq.s32.totalorder %s35, 0
      %p266 = por %p264, %p265
      %s268 = sadd.s32 %s267, 1
      %p271 = scmp.eq.s32.totalorder %s29, 1
      %p272 = scmp.ne.s32.totalorder %s267, %s269
      %p273 = scmp.eq.s32.totalorder %s29, 0
      %p274 = por %p272, %p273
      %p275 = scmp.ne.s32.totalorder %s267, %s269
      %p276 = scmp.eq.s32.totalorder %s34, 1
      %p277 = por %p275, %p276
      %p278 = scmp.ne.s32.totalorder %s269, %s270
      %p279 = scmp.eq.s32.totalorder %s34, 0
      %p280 = por %p278, %p279
      %p281 = scmp.ne.s32.totalorder %s269, %s270
      %p282 = scmp.eq.s32.totalorder %s35, 1
      %p283 = por %p281, %p282
      %p285 = scmp.ne.s32.totalorder %s270, %s284
      %p286 = scmp.eq.s32.totalorder %s35, 0
      %p287 = por %p285, %p286
      %s289 = sadd.s32 %s288, 1
      %p292 = scmp.eq.s32.totalorder %s29, 1
      %p293 = scmp.ne.s32.totalorder %s288, %s290
      %p294 = scmp.eq.s32.totalorder %s29, 0
      %p295 = por %p293, %p294
      %p296 = scmp.ne.s32.totalorder %s288, %s290
      %p297 = scmp.eq.s32.totalorder %s34, 1
      %p298 = por %p296, %p297
      %p299 = scmp.ne.s32.totalorder %s290, %s291
      %p300 = scmp.eq.s32.totalorder %s34, 0
      %p301 = por %p299, %p300
      %p302 = scmp.ne.s32.totalorder %s290, %s291
      %p303 = scmp.eq.s32.totalorder %s35, 1
      %p304 = por %p302, %p303
      %p306 = scmp.ne.s32.totalorder %s291, %s305
      %p307 = scmp.eq.s32.totalorder %s35, 0
      %p308 = por %p306, %p307
      %s310 = sadd.s32 %s309, 1
      %p313 = scmp.eq.s32.totalorder %s29, 1
      %p314 = scmp.ne.s32.totalorder %s309, %s311
      %p315 = scmp.eq.s32.totalorder %s29, 0
      %p316 = por %p314, %p315
      %p317 = scmp.ne.s32.totalorder %s309, %s311
      %p318 = scmp.eq.s32.totalorder %s34, 1
      %p319 = por %p317, %p318
      %p320 = scmp.ne.s32.totalorder %s311, %s312
      %p321 = scmp.eq.s32.totalorder %s34, 0
      %p322 = por %p320, %p321
      %p323 = scmp.ne.s32.totalorder %s311, %s312
      %p324 = scmp.eq.s32.totalorder %s35, 1
      %p325 = por %p323, %p324
      %p327 = scmp.ne.s32.totalorder %s312, %s326
      %p328 = scmp.eq.s32.totalorder %s35, 0
      %p329 = por %p327, %p328
      %s330 = ssub.s32 %s29, %s36
      %p331 = scmp.eq.s32.totalorder %s330, 0
      %s333 = sadd.s32 %s332, 1
      %s334 = scalar_select %p331, %s332, %s333
      %p337 = pneg %p331
      %p338 = scmp.eq.s32.totalorder %s29, 1
      %p339 = por %p337, %p338
      %p340 = scmp.ne.s32.totalorder %s332, %s335
      %p341 = scmp.eq.s32.totalorder %s29, 0
      %p342 = por %p340, %p341
      %p343 = scmp.ne.s32.totalorder %s332, %s335
      %p344 = scmp.eq.s32.totalorder %s34, 1
      %p345 = por %p343, %p344
      %p346 = scmp.ne.s32.totalorder %s335, %s336
      %p347 = scmp.eq.s32.totalorder %s34, 0
      %p348 = por %p346, %p347
      %p349 = scmp.ne.s32.totalorder %s335, %s336
      %p350 = scmp.eq.s32.totalorder %s35, 1
      %p351 = por %p349, %p350
      %p353 = scmp.ne.s32.totalorder %s336, %s352
      %p354 = scmp.eq.s32.totalorder %s35, 0
      %p355 = por %p353, %p354
      %p356 = scmp.le.s32.totalorder 1, %s29
      %p357 = scmp.lt.s32.totalorder %s29, 3
      %p358 = pnand %p356, %p357
      %p359 = pneg %p358
      // Predicated region
      $region9: #{tpu_custom_call.1} parent=5 // pred_check
        _
      $region10: #{tpu_custom_call.1} parent=5 // pred_check_branch
        %361 = sbr.rel (%p358) target = $region12
      $region11: #{tpu_custom_call.1} parent=5 // pred_region
        %s362 = ssub.s32 %s29, 1
        // Predicated region
        $region13: #{tpu_custom_call.1} parent=11 // pred_check
          %p363 = pneg %p154
        $region14: #{tpu_custom_call.1} parent=11 // pred_check_branch
          %365 = sbr.rel (%p363) target = $region16
        $region15: #{tpu_custom_call.1} parent=11 // pred_region
          _
        $region16: #{tpu_custom_call.1} parent=11 // pred_fallthru
          _
        // Predicated region
        $region17: #{tpu_custom_call.1} parent=11 // pred_check
          %p366 = pneg %p175
        $region18: #{tpu_custom_call.1} parent=11 // pred_check_branch
          %368 = sbr.rel (%p366) target = $region20
        $region19: #{tpu_custom_call.1} parent=11 // pred_region
          _
        $region20: #{tpu_custom_call.1} parent=11 // pred_fallthru
          _
        // Predicated region
        $region21: #{tpu_custom_call.1} parent=11 // pred_check
          %p369 = pneg %p196
        $region22: #{tpu_custom_call.1} parent=11 // pred_check_branch
          %371 = sbr.rel (%p369) target = $region24
        $region23: #{tpu_custom_call.1} parent=11 // pred_region
          _
        $region24: #{tpu_custom_call.1} parent=11 // pred_fallthru
          _
        // Predicated region
        $region25: #{tpu_custom_call.1} parent=11 // pred_check
          %p372 = pneg %p217
        $region26: #{tpu_custom_call.1} parent=11 // pred_check_branch
          %374 = sbr.rel (%p372) target = $region28
        $region27: #{tpu_custom_call.1} parent=11 // pred_region
          _
        $region28: #{tpu_custom_call.1} parent=11 // pred_fallthru
          _
        // Predicated region
        $region29: #{tpu_custom_call.1} parent=11 // pred_check
          %p375 = pneg %p238
        $region30: #{tpu_custom_call.1} parent=11 // pred_check_branch
          %377 = sbr.rel (%p375) target = $region32
        $region31: #{tpu_custom_call.1} parent=11 // pred_region
          _
        $region32: #{tpu_custom_call.1} parent=11 // pred_fallthru
          _
        // Predicated region
        $region33: #{tpu_custom_call.1} parent=11 // pred_check
          %p378 = pneg %p259
        $region34: #{tpu_custom_call.1} parent=11 // pred_check_branch
          %380 = sbr.rel (%p378) target = $region36
        $region35: #{tpu_custom_call.1} parent=11 // pred_region
          _
        $region36: #{tpu_custom_call.1} parent=11 // pred_fallthru
          _
        // Predicated region
        $region37: #{tpu_custom_call.1} parent=11 // pred_check
          %p381 = pneg %p280
        $region38: #{tpu_custom_call.1} parent=11 // pred_check_branch
          %383 = sbr.rel (%p381) target = $region40
        $region39: #{tpu_custom_call.1} parent=11 // pred_region
          _
        $region40: #{tpu_custom_call.1} parent=11 // pred_fallthru
          _
        // Predicated region
        $region41: #{tpu_custom_call.1} parent=11 // pred_check
          %p384 = pneg %p301
        $region42: #{tpu_custom_call.1} parent=11 // pred_check_branch
          %386 = sbr.rel (%p384) target = $region44
        $region43: #{tpu_custom_call.1} parent=11 // pred_region
          _
        $region44: #{tpu_custom_call.1} parent=11 // pred_fallthru
          _
        // Predicated region
        $region45: #{tpu_custom_call.1} parent=11 // pred_check
          %p387 = pneg %p322
        $region46: #{tpu_custom_call.1} parent=11 // pred_check_branch
          %389 = sbr.rel (%p387) target = $region48
        $region47: #{tpu_custom_call.1} parent=11 // pred_region
          _
        $region48: #{tpu_custom_call.1} parent=11 // pred_fallthru
          _
      $region12: #{tpu_custom_call.1} parent=5 // pred_fallthru
        _
      %p390 = scmp.lt.s32.totalorder %s29, 2
      // Predicated region
      $region49: #{tpu_custom_call.1} parent=5 // pred_check
        %p391 = pneg %p390
      $region50: #{tpu_custom_call.1} parent=5 // pred_check_branch
        %393 = sbr.rel (%p391) target = $region52
      $region51: #{tpu_custom_call.1} parent=5 // pred_region
        // Predicated region
        $region53: #{tpu_custom_call.1} parent=51 // pred_check
          %p394 = pneg %p49
        $region54: #{tpu_custom_call.1} parent=51 // pred_check_branch
          %396 = sbr.rel (%p394) target = $region56
        $region55: #{tpu_custom_call.1} parent=51 // pred_region
          %p397 = scmp.lt.s32.totalorder %s29, 1
          %s398 = scalar_select %p397, %s29, 1
          %s399 = smul.addr %s398, 4
          %s400 = scalar_lea.vmem %s1, %s399
        $region56: #{tpu_custom_call.1} parent=51 // pred_fallthru
          _
        // Predicated region
        $region57: #{tpu_custom_call.1} parent=51 // pred_check
          %p401 = pneg %p75
        $region58: #{tpu_custom_call.1} parent=51 // pred_check_branch
          %403 = sbr.rel (%p401) target = $region60
        $region59: #{tpu_custom_call.1} parent=51 // pred_region
          %p404 = scmp.lt.s32.totalorder %s29, 1
          %s405 = scalar_select %p404, %s29, 1
          %s406 = smul.addr %s405, 4
          %s407 = scalar_lea.vmem %s2, %s406
        $region60: #{tpu_custom_call.1} parent=51 // pred_fallthru
          _
        // Predicated region
        $region61: #{tpu_custom_call.1} parent=51 // pred_check
          %p408 = pneg %p101
        $region62: #{tpu_custom_call.1} parent=51 // pred_check_branch
          %410 = sbr.rel (%p408) target = $region64
        $region63: #{tpu_custom_call.1} parent=51 // pred_region
          %p411 = scmp.lt.s32.totalorder %s29, 1
          %s412 = scalar_select %p411, %s29, 1
          %s413 = smul.addr %s412, 4
          %s414 = scalar_lea.vmem %s3, %s413
        $region64: #{tpu_custom_call.1} parent=51 // pred_fallthru
          _
        // Predicated region
        $region65: #{tpu_custom_call.1} parent=51 // pred_check
          %p415 = pneg %p127
        $region66: #{tpu_custom_call.1} parent=51 // pred_check_branch
          %417 = sbr.rel (%p415) target = $region68
        $region67: #{tpu_custom_call.1} parent=51 // pred_region
          %p418 = scmp.lt.s32.totalorder %s29, 1
          %s419 = scalar_select %p418, %s29, 1
          %s420 = smul.addr %s419, 16
          %s421 = smul.addr %s420, 4
          %s422 = scalar_lea.vmem %s4, %s421
        $region68: #{tpu_custom_call.1} parent=51 // pred_fallthru
          _
      $region52: #{tpu_custom_call.1} parent=5 // pred_fallthru
        _
      %p423 = scmp.le.s32.totalorder 1, %s29
      %p424 = scmp.lt.s32.totalorder %s29, 3
      %p425 = pnand %p423, %p424
      %p426 = pneg %p425
      // Predicated region
      $region69: #{tpu_custom_call.1} parent=5 // pred_check
        _
      $region70: #{tpu_custom_call.1} parent=5 // pred_check_branch
        %428 = sbr.rel (%p425) target = $region72
      $region71: #{tpu_custom_call.1} parent=5 // pred_region
        %s429 = ssub.s32 %s29, 1
        %p430 = scmp.lt.s32.totalorder %s34, 1
        %s431 = scalar_select %p430, %s34, 1
        %s432 = smul.addr %s431, 4
        %s433 = scalar_lea.vmem %s1, %s432
        %p434 = pneg %p55
        %p435 = pneg %p52
        %p436 = scmp.lt.s32.totalorder %s34, 1
        %s437 = scalar_select %p436, %s34, 1
        %s438 = smul.addr %s437, 4
        %s439 = scalar_lea.vmem %s2, %s438
        %p440 = pneg %p81
        %p441 = pneg %p78
        %p442 = scmp.lt.s32.totalorder %s34, 1
        %s443 = scalar_select %p442, %s34, 1
        %s444 = smul.addr %s443, 4
        %s445 = scalar_lea.vmem %s3, %s444
        %p446 = pneg %p107
        %p447 = pneg %p104
        %p448 = scmp.lt.s32.totalorder %s34, 1
        %s449 = scalar_select %p448, %s34, 1
        %s450 = smul.addr %s449, 16
        %s451 = smul.addr %s450, 4
        %s452 = scalar_lea.vmem %s4, %s451
        %p453 = pneg %p133
        %p454 = pneg %p130
        %p455 = pneg %p154
        %p456 = pneg %p151
        %p457 = pneg %p175
        %p458 = pneg %p172
        %p459 = pneg %p196
        %p460 = pneg %p193
        %p461 = pneg %p217
        %p462 = pneg %p214
        %p463 = pneg %p238
        %p464 = pneg %p235
        %p465 = pneg %p259
        %p466 = pneg %p256
        %p467 = pneg %p280
        %p468 = pneg %p277
        %p469 = pneg %p301
        %p470 = pneg %p298
        %p471 = pneg %p322
        %p472 = pneg %p319
        %p473 = pneg %p348
        %p474 = pneg %p345
        %s475 = sand.u32 %s335, 1
        %s476 = scalar_lea.sflag [#allocation6], %s475
        %s477 = sand.u32 %s335, 1
        %s478 = smul.addr %s477, 4
        %s479 = scalar_lea.vmem [#allocation5], %s478
        %p480 = scmp.lt.s32.totalorder %s34, 1
        %s481 = scalar_select %p480, %s34, 1
        %s482 = smul.addr %s481, 4
        %s483 = scalar_lea.vmem %s1, %s482
        %p484 = scmp.lt.s32.totalorder %s34, 1
        %s485 = scalar_select %p484, %s34, 1
        %s486 = smul.addr %s485, 4
        %s487 = scalar_lea.vmem %s2, %s486
        %p488 = scmp.lt.s32.totalorder %s34, 1
        %s489 = scalar_select %p488, %s34, 1
        %s490 = smul.addr %s489, 4
        %s491 = scalar_lea.vmem %s3, %s490
        %p492 = scmp.lt.s32.totalorder %s34, 1
        %s493 = scalar_select %p492, %s34, 1
        %s494 = smul.addr %s493, 16
        %s495 = smul.addr %s494, 4
        %s496 = scalar_lea.vmem %s4, %s495
        %s498 = sld [smem:[#allocation4 + %s34]]
        %v499 = vld [vmem:[%s483] sm:$0xf]
        %v500 = vld [vmem:[%s487] sm:$0xf]
        %v501 = vld [vmem:[%s491] sm:$0xf]
        %v502 = vld [vmem:[%s496] sm:$0xf]
        %v503 = vld [vmem:[%s496 + $0x4] sm:$0xf]
        %v504 = vld [vmem:[%s496 + $0x8] sm:$0xf]
        %v505 = vld [vmem:[%s496 + $0xc] sm:$0xf]
        %v506 = vld [vmem:[%s496 + $0x10] sm:$0xf]
        %v507 = vld [vmem:[%s496 + $0x14] sm:$0xf]
        %v508 = vld [vmem:[%s496 + $0x18] sm:$0xf]
        %v509 = vld [vmem:[%s496 + $0x1c] sm:$0xf]
        %v510 = vld [vmem:[%s496 + $0x20] sm:$0xf]
        %v511 = vld [vmem:[%s496 + $0x24] sm:$0xf]
        %v512 = vld [vmem:[%s496 + $0x28] sm:$0xf]
        %v513 = vld [vmem:[%s496 + $0x2c] sm:$0xf]
        %v514 = vld [vmem:[%s496 + $0x30] sm:$0xf]
        %v515 = vld [vmem:[%s496 + $0x34] sm:$0xf]
        %v516 = vld [vmem:[%s496 + $0x38] sm:$0xf]
        %v517 = vld [vmem:[%s496 + $0x3c] sm:$0xf]
        %v518 = vld [vmem:[%s5] sm:$0xf]
        %v519 = vld [vmem:[%s5 + $0x4] sm:$0xf]
        %v520 = vld [vmem:[%s5 + $0x8] sm:$0xf]
        %v521 = vld [vmem:[%s5 + $0xc] sm:$0xf]
        %v522 = vld [vmem:[%s8] sm:$0x1]
        %v524 = vlaneseq
        %v525 = vshrl.u32 %v524, 7
        %v526 = vsub.s32 0, %v525
        %v527 = vrot.slane %v522, %v526
        %v533 = vunpack.c.l.b16 %v518
        %v534 = vunpack.c.l.b16 %v519
        %v535 = vunpack.c.l.b16 %v520
        %v536 = vunpack.c.l.b16 %v521
        %v537 = vpack.c.b16 %v534, %v533
        %v538 = vpack.c.b16 %v536, %v535
        %vm541 = vcmask 261120
        %v543 = vsel %vm541, %v499, 0
        %545 = vmatprep.subr.bf16.mxu0 0
        %546 = vmatpush1.bf16.msra.mxu0 %v537
        %547 = vmatprep.subr.bf16.mxu0 0
        %548 = vmatpush1.bf16.msra.mxu0 %v538
        %549 = vmatprep.subr.bf16.mxu0 0
        %550 = vmatpush1.bf16.msra.mxu0 0
        %551 = vmatprep.subr.bf16.mxu0 0
        %552 = vmatpush1.bf16.msra.mxu0 0
        %553 = vmatprep.subr.bf16.mxu0 0
        %554 = vmatpush1.bf16.msra.mxu0 0
        %555 = vmatprep.subr.bf16.mxu0 0
        %556 = vmatpush1.bf16.msra.mxu0 0
        %557 = vmatprep.subr.bf16.mxu0 0
        %558 = vmatpush1.bf16.msra.mxu0 0
        %559 = vmatprep.subr.bf16.mxu0 0
        %560 = vmatpush1.bf16.msra.mxu0 0
        %561 = vmatprep.subr.bf16.mxu0 0
        %562 = vmatpush1.bf16.msra.mxu0 0
        %563 = vmatprep.subr.bf16.mxu0 0
        %564 = vmatpush1.bf16.msra.mxu0 0
        %565 = vmatprep.subr.bf16.mxu0 0
        %566 = vmatpush1.bf16.msra.mxu0 0
        %567 = vmatprep.subr.bf16.mxu0 0
        %568 = vmatpush1.bf16.msra.mxu0 0
        %569 = vmatprep.subr.bf16.mxu0 0
        %570 = vmatpush1.bf16.msra.mxu0 0
        %571 = vmatprep.subr.bf16.mxu0 0
        %572 = vmatpush1.bf16.msra.mxu0 0
        %573 = vmatprep.subr.bf16.mxu0 0
        %574 = vmatpush1.bf16.msra.mxu0 0
        %575 = vmatprep.subr.bf16.mxu0 0
        %576 = vmatpush1.bf16.msra.mxu0 0
        %577 = vmatprep.mubr.bf16.mxu0 0
        %578 = vmatmul.mubr.bf16.gmra.mrb[0].mxu0 %v543
        %v579 = vpop.f32.mrb[0].mxu0
        %v580 = vadd.f32 %v527, %v579
        %v581 = vpop.f32.mrb[0].mxu0
        %v582 = vpop.f32.mrb[0].mxu0
        %v583 = vpop.f32.mrb[0].mxu0
        %584 = vdwg.mxu0
        %v585 = vld [vmem:[%s6] sm:$0xf]
        %v586 = vld [vmem:[%s6 + $0x4] sm:$0xf]
        %v587 = vld [vmem:[%s6 + $0x8] sm:$0xf]
        %v588 = vld [vmem:[%s6 + $0xc] sm:$0xf]
        %v589 = vld [vmem:[%s9] sm:$0x1]
        %v591 = vlaneseq
        %v592 = vshrl.u32 %v591, 7
        %v593 = vsub.s32 0, %v592
        %v594 = vrot.slane %v589, %v593
        %v600 = vunpack.c.l.b16 %v585
        %v601 = vunpack.c.l.b16 %v586
        %v602 = vunpack.c.l.b16 %v587
        %v603 = vunpack.c.l.b16 %v588
        %v604 = vpack.c.b16 %v601, %v600
        %v605 = vpack.c.b16 %v603, %v602
        %v609 = vsel %vm541, %v500, 0
        %611 = vmatprep.subr.bf16.mxu0 0
        %612 = vmatpush1.bf16.msra.mxu0 %v604
        %613 = vmatprep.subr.bf16.mxu0 0
        %614 = vmatpush1.bf16.msra.mxu0 %v605
        %615 = vmatprep.subr.bf16.mxu0 0
        %616 = vmatpush1.bf16.msra.mxu0 0
        %617 = vmatprep.subr.bf16.mxu0 0
        %618 = vmatpush1.bf16.msra.mxu0 0
        %619 = vmatprep.subr.bf16.mxu0 0
        %620 = vmatpush1.bf16.msra.mxu0 0
        %621 = vmatprep.subr.bf16.mxu0 0
        %622 = vmatpush1.bf16.msra.mxu0 0
        %623 = vmatprep.subr.bf16.mxu0 0
        %624 = vmatpush1.bf16.msra.mxu0 0
        %625 = vmatprep.subr.bf16.mxu0 0
        %626 = vmatpush1.bf16.msra.mxu0 0
        %627 = vmatprep.subr.bf16.mxu0 0
        %628 = vmatpush1.bf16.msra.mxu0 0
        %629 = vmatprep.subr.bf16.mxu0 0
        %630 = vmatpush1.bf16.msra.mxu0 0
        %631 = vmatprep.subr.bf16.mxu0 0
        %632 = vmatpush1.bf16.msra.mxu0 0
        %633 = vmatprep.subr.bf16.mxu0 0
        %634 = vmatpush1.bf16.msra.mxu0 0
        %635 = vmatprep.subr.bf16.mxu0 0
        %636 = vmatpush1.bf16.msra.mxu0 0
        %637 = vmatprep.subr.bf16.mxu0 0
        %638 = vmatpush1.bf16.msra.mxu0 0
        %639 = vmatprep.subr.bf16.mxu0 0
        %640 = vmatpush1.bf16.msra.mxu0 0
        %641 = vmatprep.subr.bf16.mxu0 0
        %642 = vmatpush1.bf16.msra.mxu0 0
        %643 = vmatprep.mubr.bf16.mxu0 0
        %644 = vmatmul.mubr.bf16.gmra.mrb[0].mxu0 %v609
        %v645 = vpop.f32.mrb[0].mxu0
        %v646 = vadd.f32 %v594, %v645
        %v647 = vpop.f32.mrb[0].mxu0
        %v648 = vpop.f32.mrb[0].mxu0
        %v649 = vpop.f32.mrb[0].mxu0
        %650 = vdwg.mxu0
        %v651 = vld [vmem:[%s7] sm:$0xf]
        %v652 = vld [vmem:[%s7 + $0x4] sm:$0xf]
        %v653 = vld [vmem:[%s7 + $0x8] sm:$0xf]
        %v654 = vld [vmem:[%s7 + $0xc] sm:$0xf]
        %v655 = vld [vmem:[%s10] sm:$0x1]
        %v657 = vlaneseq
        %v658 = vshrl.u32 %v657, 7
        %v659 = vsub.s32 0, %v658
        %v660 = vrot.slane %v655, %v659
        %v666 = vunpack.c.l.b16 %v651
        %v667 = vunpack.c.l.b16 %v652
        %v668 = vunpack.c.l.b16 %v653
        %v669 = vunpack.c.l.b16 %v654
        %v670 = vpack.c.b16 %v667, %v666
        %v671 = vpack.c.b16 %v669, %v668
        %v675 = vsel %vm541, %v501, 0
        %677 = vmatprep.subr.bf16.mxu0 0
        %678 = vmatpush1.bf16.msra.mxu0 %v670
        %679 = vmatprep.subr.bf16.mxu0 0
        %680 = vmatpush1.bf16.msra.mxu0 %v671
        %681 = vmatprep.subr.bf16.mxu0 0
        %682 = vmatpush1.bf16.msra.mxu0 0
        %683 = vmatprep.subr.bf16.mxu0 0
        %684 = vmatpush1.bf16.msra.mxu0 0
        %685 = vmatprep.subr.bf16.mxu0 0
        %686 = vmatpush1.bf16.msra.mxu0 0
        %687 = vmatprep.subr.bf16.mxu0 0
        %688 = vmatpush1.bf16.msra.mxu0 0
        %689 = vmatprep.subr.bf16.mxu0 0
        %690 = vmatpush1.bf16.msra.mxu0 0
        %691 = vmatprep.subr.bf16.mxu0 0
        %692 = vmatpush1.bf16.msra.mxu0 0
        %693 = vmatprep.subr.bf16.mxu0 0
        %694 = vmatpush1.bf16.msra.mxu0 0
        %695 = vmatprep.subr.bf16.mxu0 0
        %696 = vmatpush1.bf16.msra.mxu0 0
        %697 = vmatprep.subr.bf16.mxu0 0
        %698 = vmatpush1.bf16.msra.mxu0 0
        %699 = vmatprep.subr.bf16.mxu0 0
        %700 = vmatpush1.bf16.msra.mxu0 0
        %701 = vmatprep.subr.bf16.mxu0 0
        %702 = vmatpush1.bf16.msra.mxu0 0
        %703 = vmatprep.subr.bf16.mxu0 0
        %704 = vmatpush1.bf16.msra.mxu0 0
        %705 = vmatprep.subr.bf16.mxu0 0
        %706 = vmatpush1.bf16.msra.mxu0 0
        %707 = vmatprep.subr.bf16.mxu0 0
        %708 = vmatpush1.bf16.msra.mxu0 0
        %709 = vmatprep.mubr.bf16.mxu0 0
        %710 = vmatmul.mubr.bf16.gmra.mrb[0].mxu0 %v675
        %v711 = vpop.f32.mrb[0].mxu0
        %v712 = vadd.f32 %v660, %v711
        %v713 = vpop.f32.mrb[0].mxu0
        %v714 = vpop.f32.mrb[0].mxu0
        %v715 = vpop.f32.mrb[0].mxu0
        %716 = vdwg.mxu0
        %v717 = vpack.c.bf16 %v580, %v580
        %v718 = vpack.c.bf16 %v712, %v712
        %v719 = vpack.c.bf16 %v646, %v646
        %v736 = vunpack.c.l.b16 %v502
        %v737 = vunpack.c.l.b16 %v503
        %v738 = vunpack.c.l.b16 %v504
        %v739 = vunpack.c.l.b16 %v505
        %v740 = vunpack.c.l.b16 %v506
        %v741 = vunpack.c.l.b16 %v507
        %v742 = vunpack.c.l.b16 %v508
        %v743 = vunpack.c.l.b16 %v509
        %v744 = vunpack.c.l.b16 %v510
        %v745 = vunpack.c.l.b16 %v511
        %v746 = vunpack.c.l.b16 %v512
        %v747 = vunpack.c.l.b16 %v513
        %v748 = vunpack.c.l.b16 %v514
        %v749 = vunpack.c.l.b16 %v515
        %v750 = vunpack.c.l.b16 %v516
        %v751 = vunpack.c.l.b16 %v517
        %v752 = vpack.c.b16 %v737, %v736
        %v753 = vpack.c.b16 %v739, %v738
        %v754 = vpack.c.b16 %v741, %v740
        %v755 = vpack.c.b16 %v743, %v742
        %v756 = vpack.c.b16 %v745, %v744
        %v757 = vpack.c.b16 %v747, %v746
        %v758 = vpack.c.b16 %v749, %v748
        %v759 = vpack.c.b16 %v751, %v750
        %v760 = vld [vmem:[%s11] sm:$0x1]
        %v761 = vlaneseq
        %v762 = vand.u32 %v761, 127
        %v763 = vstv %s498
        %vm764 = vcmp.ge.s32.totalorder %v762, %v763
        %v765 = vadd.s32 %v762, 128
        %vm766 = vcmp.lt.s32.totalorder %v762, 128
        %vm767 = vcmp.lt.s32.totalorder %v765, 128
        %vm768 = vcmask 64512
        %v770 = vsel %vm768, %v760, 0
        %v773 = vsel %vm768, %v752, 0
        %v776 = vsel %vm768, %v753, 0
        %v779 = vsel %vm768, %v754, 0
        %v782 = vsel %vm768, %v755, 0
        %v785 = vsel %vm768, %v756, 0
        %v788 = vsel %vm768, %v757, 0
        %v791 = vsel %vm768, %v758, 0
        %v794 = vsel %vm768, %v759, 0
        %v797 = vsel %vm768, %v719, 0
        %799 = vmatprep.subr.bf16.mxu0 0
        %800 = vmatpush1.bf16.xpose.msra.mxu0 %v773
        %801 = vmatprep.subr.bf16.mxu0 0
        %802 = vmatpush1.bf16.xpose.msra.mxu0 %v776
        %803 = vmatprep.subr.bf16.mxu0 0
        %804 = vmatpush1.bf16.xpose.msra.mxu0 %v779
        %805 = vmatprep.subr.bf16.mxu0 0
        %806 = vmatpush1.bf16.xpose.msra.mxu0 %v782
        %807 = vmatprep.subr.bf16.mxu0 0
        %808 = vmatpush1.bf16.xpose.msra.mxu0 %v785
        %809 = vmatprep.subr.bf16.mxu0 0
        %810 = vmatpush1.bf16.xpose.msra.mxu0 %v788
        %811 = vmatprep.subr.bf16.mxu0 0
        %812 = vmatpush1.bf16.xpose.msra.mxu0 %v791
        %813 = vmatprep.subr.bf16.mxu0 0
        %814 = vmatpush1.bf16.xpose.msra.mxu0 %v794
        %815 = vmatprep.subr.bf16.mxu0 0
        %816 = vmatpush1.bf16.xpose.msra.mxu0 %v797
        %817 = vmatprep.subr.bf16.mxu0 0
        %818 = vmatpush1.bf16.xpose.msra.mxu0 0
        %819 = vmatprep.subr.bf16.mxu0 0
        %820 = vmatpush1.bf16.xpose.msra.mxu0 0
        %821 = vmatprep.subr.bf16.mxu0 0
        %822 = vmatpush1.bf16.xpose.msra.mxu0 0
        %823 = vmatprep.subr.bf16.mxu0 0
        %824 = vmatpush1.bf16.xpose.msra.mxu0 0
        %825 = vmatprep.subr.bf16.mxu0 0
        %826 = vmatpush1.bf16.xpose.msra.mxu0 0
        %827 = vmatprep.subr.bf16.mxu0 0
        %828 = vmatpush1.bf16.xpose.msra.mxu0 0
        %829 = vmatprep.subr.bf16.mxu0 0
        %830 = vmatpush1.bf16.xpose.msra.mxu0 0
        %831 = vmatprep.mubr.bf16.mxu0 0
        %832 = vmatmul.mubr.bf16.gmra.mrb[0].mxu0 %v770
        %v833 = vpop.f32.mrb[0].mxu0
        %v834 = vadd.f32 0.0, %v833
        %v835 = vpop.f32.mrb[0].mxu0
        %v836 = vadd.f32 0.0, %v835
        %v837 = vpop.f32.mrb[0].mxu0
        %v838 = vpop.f32.mrb[0].mxu0
        %839 = vdwg.mxu0
        %v842 = vrot.slane %v834, 1
        %v843 = vrot.slane %v836, 1
        %v846 = vsel %vm766, %v834, %v842
        %v847 = vsel %vm767, %v836, %v843
        %v848 = vlaneseq
        %v849 = vshrl.u32 %v848, 7
        %v850 = vsub.s32 0, %v849
        %v851 = vrot.slane %v846, %v850
        %v852 = vlaneseq
        %v853 = vshrl.u32 %v852, 7
        %v854 = vsub.s32 0, %v853
        %v855 = vrot.slane %v847, %v854
        %v857 = vsel %vm768, %v717, 0
        %859 = vmatprep.subr.bf16.mxu0 0
        %860 = vmatpush1.bf16.xpose.msra.mxu0 %v773
        %861 = vmatprep.subr.bf16.mxu0 0
        %862 = vmatpush1.bf16.xpose.msra.mxu0 %v776
        %863 = vmatprep.subr.bf16.mxu0 0
        %864 = vmatpush1.bf16.xpose.msra.mxu0 %v779
        %865 = vmatprep.subr.bf16.mxu0 0
        %866 = vmatpush1.bf16.xpose.msra.mxu0 %v782
        %867 = vmatprep.subr.bf16.mxu0 0
        %868 = vmatpush1.bf16.xpose.msra.mxu0 %v785
        %869 = vmatprep.subr.bf16.mxu0 0
        %870 = vmatpush1.bf16.xpose.msra.mxu0 %v788
        %871 = vmatprep.subr.bf16.mxu0 0
        %872 = vmatpush1.bf16.xpose.msra.mxu0 %v791
        %873 = vmatprep.subr.bf16.mxu0 0
        %874 = vmatpush1.bf16.xpose.msra.mxu0 %v794
        %875 = vmatprep.subr.bf16.mxu0 0
        %876 = vmatpush1.bf16.xpose.msra.mxu0 %v797
        %877 = vmatprep.subr.bf16.mxu0 0
        %878 = vmatpush1.bf16.xpose.msra.mxu0 0
        %879 = vmatprep.subr.bf16.mxu0 0
        %880 = vmatpush1.bf16.xpose.msra.mxu0 0
        %881 = vmatprep.subr.bf16.mxu0 0
        %882 = vmatpush1.bf16.xpose.msra.mxu0 0
        %883 = vmatprep.subr.bf16.mxu0 0
        %884 = vmatpush1.bf16.xpose.msra.mxu0 0
        %885 = vmatprep.subr.bf16.mxu0 0
        %886 = vmatpush1.bf16.xpose.msra.mxu0 0
        %887 = vmatprep.subr.bf16.mxu0 0
        %888 = vmatpush1.bf16.xpose.msra.mxu0 0
        %889 = vmatprep.subr.bf16.mxu0 0
        %890 = vmatpush1.bf16.xpose.msra.mxu0 0
        %891 = vmatprep.mubr.bf16.mxu0 0
        %892 = vmatmul.mubr.bf16.gmra.mrb[0].mxu0 %v857
        %v893 = vpop.f32.mrb[0].mxu0
        %v894 = vadd.f32 %v851, %v893
        %v895 = vpop.f32.mrb[0].mxu0
        %v896 = vadd.f32 %v855, %v895
        %v897 = vpop.f32.mrb[0].mxu0
        %v898 = vpop.f32.mrb[0].mxu0
        %899 = vdwg.mxu0
        %s901 = sor.u32 256, 121
        %902 = vrot.lane.b32.xlu0 %v894, %s901
        %v903 = vpop.permute.xlu0 %902
        %v904 = vadd.f32 %v896, %v903
        %v905 = vmul.f32 %v904, 0.35355338
        %v906 = vsel %vm764, -1e+09, %v905
        %v907 = vsel %vm768, %v906, -inf
        %908 = vmax.xlane.f32.xlu0 %v907
        %v909 = vpop.xlane.xlu0 %908
        %v910 = vsub.f32 %v906, %v909
        %v911 = vmul.f32 %v910, 1.442695
        %v912 = vpow.pop %v911
        %v913 = vsel %vm768, %v912, 0.0
        %914 = vadd.xlane.f32.xlu0 %v913
        %v915 = vpop.xlane.xlu0 %914
        %v916 = vrcp.pop %v915
        %v917 = vmul.f32 %v912, %v916
        %v918 = vpack.c.bf16 %v917, %v917
        %v920 = vsel %vm768, %v918, 0
        %vm922 = vcmask 1043456
        %v924 = vsel %vm922, %v718, 0
        %926 = vmatprep.subr.bf16.mxu0 0
        %927 = vmatpush1.bf16.msra.mxu0 %v924
        %928 = vmatprep.subr.bf16.mxu0 0
        %929 = vmatpush1.bf16.msra.mxu0 0
        %930 = vmatprep.subr.bf16.mxu0 0
        %931 = vmatpush1.bf16.msra.mxu0 0
        %932 = vmatprep.subr.bf16.mxu0 0
        %933 = vmatpush1.bf16.msra.mxu0 0
        %934 = vmatprep.subr.bf16.mxu0 0
        %935 = vmatpush1.bf16.msra.mxu0 0
        %936 = vmatprep.subr.bf16.mxu0 0
        %937 = vmatpush1.bf16.msra.mxu0 0
        %938 = vmatprep.subr.bf16.mxu0 0
        %939 = vmatpush1.bf16.msra.mxu0 0
        %940 = vmatprep.subr.bf16.mxu0 0
        %941 = vmatpush1.bf16.msra.mxu0 0
        %942 = vmatprep.subr.bf16.mxu0 0
        %943 = vmatpush1.bf16.msra.mxu0 0
        %944 = vmatprep.subr.bf16.mxu0 0
        %945 = vmatpush1.bf16.msra.mxu0 0
        %946 = vmatprep.subr.bf16.mxu0 0
        %947 = vmatpush1.bf16.msra.mxu0 0
        %948 = vmatprep.subr.bf16.mxu0 0
        %949 = vmatpush1.bf16.msra.mxu0 0
        %950 = vmatprep.subr.bf16.mxu0 0
        %951 = vmatpush1.bf16.msra.mxu0 0
        %952 = vmatprep.subr.bf16.mxu0 0
        %953 = vmatpush1.bf16.msra.mxu0 0
        %954 = vmatprep.subr.bf16.mxu0 0
        %955 = vmatpush1.bf16.msra.mxu0 0
        %956 = vmatprep.subr.bf16.mxu0 0
        %957 = vmatpush1.bf16.msra.mxu0 0
        %958 = vmatprep.mubr.bf16.mxu0 0
        %959 = vmatmul.mubr.bf16.gmra.mrb[0].mxu0 %v920
        %v960 = vpop.f32.mrb[0].mxu0
        %v961 = vadd.f32 0.0, %v960
        %v962 = vpop.f32.mrb[0].mxu0
        %v963 = vpop.f32.mrb[0].mxu0
        %v964 = vpop.f32.mrb[0].mxu0
        %965 = vdwg.mxu0
        %v966 = vpack.c.bf16 %v961, %v961
        %vm967 = vcmask 60416
        %968 = vst.msk [vmem:[#allocation2] sm:$0xf] %vm967, %v966
        %v971 = vunpack.c.l.s4 1966171168
        %v972 = vunpack.c.0.s8 %v971
        %v973 = vlaneseq
        %v974 = vshrl.u32 %v973, 7
        %v975 = vsub.s32 %v972, %v974
        %v976 = vrot.slane %v760, %v975
        %v978 = vunpack.c.l.s4 1966171168
        %v979 = vunpack.c.0.s8 %v978
        %v980 = vlaneseq
        %v981 = vshrl.u32 %v980, 7
        %v982 = vsub.s32 %v979, %v981
        %v983 = vrot.slane %v976, %v982
        %984 = vrot.lane.b32.xlu0 %v983, 120
        %v985 = vpop.permute.xlu0 %984
        %987 = vrot.lane.b32.xlu0 %v752, 120
        %v988 = vpop.permute.xlu0 %987
        %989 = vrot.lane.b32.xlu0 %v753, 120
        %v990 = vpop.permute.xlu0 %989
        %991 = vrot.lane.b32.xlu0 %v754, 120
        %v992 = vpop.permute.xlu0 %991
        %993 = vrot.lane.b32.xlu0 %v755, 120
        %v994 = vpop.permute.xlu0 %993
        %995 = vrot.lane.b32.xlu0 %v756, 120
        %v996 = vpop.permute.xlu0 %995
        %997 = vrot.lane.b32.xlu0 %v757, 120
        %v998 = vpop.permute.xlu0 %997
        %999 = vrot.lane.b32.xlu0 %v758, 120
        %v1000 = vpop.permute.xlu0 %999
        %1001 = vrot.lane.b32.xlu0 %v759, 120
        %v1002 = vpop.permute.xlu0 %1001
        %1003 = vrot.lane.b32.xlu0 %v719, 120
        %v1004 = vpop.permute.xlu0 %1003
        %v1006 = vsel %vm768, %v985, 0
        %v1009 = vsel %vm768, %v988, 0
        %v1012 = vsel %vm768, %v990, 0
        %v1015 = vsel %vm768, %v992, 0
        %v1018 = vsel %vm768, %v994, 0
        %v1021 = vsel %vm768, %v996, 0
        %v1024 = vsel %vm768, %v998, 0
        %v1027 = vsel %vm768, %v1000, 0
        %v1030 = vsel %vm768, %v1002, 0
        %v1033 = vsel %vm768, %v1004, 0
        %1035 = vmatprep.subr.bf16.mxu0 0
        %1036 = vmatpush1.bf16.xpose.msra.mxu0 %v1009
        %1037 = vmatprep.subr.bf16.mxu0 0
        %1038 = vmatpush1.bf16.xpose.msra.mxu0 %v1012
        %1039 = vmatprep.subr.bf16.mxu0 0
        %1040 = vmatpush1.bf16.xpose.msra.mxu0 %v1015
        %1041 = vmatprep.subr.bf16.mxu0 0
        %1042 = vmatpush1.bf16.xpose.msra.mxu0 %v1018
        %1043 = vmatprep.subr.bf16.mxu0 0
        %1044 = vmatpush1.bf16.xpose.msra.mxu0 %v1021
        %1045 = vmatprep.subr.bf16.mxu0 0
        %1046 = vmatpush1.bf16.xpose.msra.mxu0 %v1024
        %1047 = vmatprep.subr.bf16.mxu0 0
        %1048 = vmatpush1.bf16.xpose.msra.mxu0 %v1027
        %1049 = vmatprep.subr.bf16.mxu0 0
        %1050 = vmatpush1.bf16.xpose.msra.mxu0 %v1030
        %1051 = vmatprep.subr.bf16.mxu0 0
        %1052 = vmatpush1.bf16.xpose.msra.mxu0 %v1033
        %1053 = vmatprep.subr.bf16.mxu0 0
        %1054 = vmatpush1.bf16.xpose.msra.mxu0 0
        %1055 = vmatprep.subr.bf16.mxu0 0
        %1056 = vmatpush1.bf16.xpose.msra.mxu0 0
        %1057 = vmatprep.subr.bf16.mxu0 0
        %1058 = vmatpush1.bf16.xpose.msra.mxu0 0
        %1059 = vmatprep.subr.bf16.mxu0 0
        %1060 = vmatpush1.bf16.xpose.msra.mxu0 0
        %1061 = vmatprep.subr.bf16.mxu0 0
        %1062 = vmatpush1.bf16.xpose.msra.mxu0 0
        %1063 = vmatprep.subr.bf16.mxu0 0
        %1064 = vmatpush1.bf16.xpose.msra.mxu0 0
        %1065 = vmatprep.subr.bf16.mxu0 0
        %1066 = vmatpush1.bf16.xpose.msra.mxu0 0
        %1067 = vmatprep.mubr.bf16.mxu0 0
        %1068 = vmatmul.mubr.bf16.gmra.mrb[0].mxu0 %v1006
        %v1069 = vpop.f32.mrb[0].mxu0
        %v1070 = vadd.f32 0.0, %v1069
        %v1071 = vpop.f32.mrb[0].mxu0
        %v1072 = vadd.f32 0.0, %v1071
        %v1073 = vpop.f32.mrb[0].mxu0
        %v1074 = vpop.f32.mrb[0].mxu0
        %1075 = vdwg.mxu0
        %v1078 = vrot.slane %v1070, 1
        %v1079 = vrot.slane %v1072, 1
        %v1082 = vsel %vm766, %v1070, %v1078
        %v1083 = vsel %vm767, %v1072, %v1079
        %v1084 = vlaneseq
        %v1085 = vshrl.u32 %v1084, 7
        %v1086 = vsub.s32 0, %v1085
        %v1087 = vrot.slane %v1082, %v1086
        %v1088 = vlaneseq
        %v1089 = vshrl.u32 %v1088, 7
        %v1090 = vsub.s32 0, %v1089
        %v1091 = vrot.slane %v1083, %v1090
        %1093 = vrot.lane.b32.xlu0 %v717, 120
        %v1094 = vpop.permute.xlu0 %1093
        %v1096 = vsel %vm768, %v1094, 0
        %1098 = vmatprep.subr.bf16.mxu0 0
        %1099 = vmatpush1.bf16.xpose.msra.mxu0 %v1009
        %1100 = vmatprep.subr.bf16.mxu0 0
        %1101 = vmatpush1.bf16.xpose.msra.mxu0 %v1012
        %1102 = vmatprep.subr.bf16.mxu0 0
        %1103 = vmatpush1.bf16.xpose.msra.mxu0 %v1015
        %1104 = vmatprep.subr.bf16.mxu0 0
        %1105 = vmatpush1.bf16.xpose.msra.mxu0 %v1018
        %1106 = vmatprep.subr.bf16.mxu0 0
        %1107 = vmatpush1.bf16.xpose.msra.mxu0 %v1021
        %1108 = vmatprep.subr.bf16.mxu0 0
        %1109 = vmatpush1.bf16.xpose.msra.mxu0 %v1024
        %1110 = vmatprep.subr.bf16.mxu0 0
        %1111 = vmatpush1.bf16.xpose.msra.mxu0 %v1027
        %1112 = vmatprep.subr.bf16.mxu0 0
        %1113 = vmatpush1.bf16.xpose.msra.mxu0 %v1030
        %1114 = vmatprep.subr.bf16.mxu0 0
        %1115 = vmatpush1.bf16.xpose.msra.mxu0 %v1033
        %1116 = vmatprep.subr.bf16.mxu0 0
        %1117 = vmatpush1.bf16.xpose.msra.mxu0 0
        %1118 = vmatprep.subr.bf16.mxu0 0
        %1119 = vmatpush1.bf16.xpose.msra.mxu0 0
        %1120 = vmatprep.subr.bf16.mxu0 0
        %1121 = vmatpush1.bf16.xpose.msra.mxu0 0
        %1122 = vmatprep.subr.bf16.mxu0 0
        %1123 = vmatpush1.bf16.xpose.msra.mxu0 0
        %1124 = vmatprep.subr.bf16.mxu0 0
        %1125 = vmatpush1.bf16.xpose.msra.mxu0 0
        %1126 = vmatprep.subr.bf16.mxu0 0
        %1127 = vmatpush1.bf16.xpose.msra.mxu0 0
        %1128 = vmatprep.subr.bf16.mxu0 0
        %1129 = vmatpush1.bf16.xpose.msra.mxu0 0
        %1130 = vmatprep.mubr.bf16.mxu0 0
        %1131 = vmatmul.mubr.bf16.gmra.mrb[0].mxu0 %v1096
        %v1132 = vpop.f32.mrb[0].mxu0
        %v1133 = vadd.f32 %v1087, %v1132
        %v1134 = vpop.f32.mrb[0].mxu0
        %v1135 = vadd.f32 %v1091, %v1134
        %v1136 = vpop.f32.mrb[0].mxu0
        %v1137 = vpop.f32.mrb[0].mxu0
        %1138 = vdwg.mxu0
        %s1140 = sor.u32 256, 121
        %1141 = vrot.lane.b32.xlu0 %v1133, %s1140
        %v1142 = vpop.permute.xlu0 %1141
        %v1143 = vadd.f32 %v1135, %v1142
        %v1144 = vmul.f32 %v1143, 0.35355338
        %v1145 = vsel %vm764, -1e+09, %v1144
        %v1146 = vsel %vm768, %v1145, -inf
        %1147 = vmax.xlane.f32.xlu0 %v1146
        %v1148 = vpop.xlane.xlu0 %1147
        %v1149 = vsub.f32 %v1145, %v1148
        %v1150 = vmul.f32 %v1149, 1.442695
        %v1151 = vpow.pop %v1150
        %v1152 = vsel %vm768, %v1151, 0.0
        %1153 = vadd.xlane.f32.xlu0 %v1152
        %v1154 = vpop.xlane.xlu0 %1153
        %v1155 = vrcp.pop %v1154
        %v1156 = vmul.f32 %v1151, %v1155
        %v1157 = vpack.c.bf16 %v1156, %v1156
        %1159 = vrot.lane.b32.xlu0 %v718, 120
        %v1160 = vpop.permute.xlu0 %1159
        %v1162 = vsel %vm768, %v1157, 0
        %v1165 = vsel %vm922, %v1160, 0
        %1167 = vmatprep.subr.bf16.mxu0 0
        %1168 = vmatpush1.bf16.msra.mxu0 %v1165
        %1169 = vmatprep.subr.bf16.mxu0 0
        %1170 = vmatpush1.bf16.msra.mxu0 0
        %1171 = vmatprep.subr.bf16.mxu0 0
        %1172 = vmatpush1.bf16.msra.mxu0 0
        %1173 = vmatprep.subr.bf16.mxu0 0
        %1174 = vmatpush1.bf16.msra.mxu0 0
        %1175 = vmatprep.subr.bf16.mxu0 0
        %1176 = vmatpush1.bf16.msra.mxu0 0
        %1177 = vmatprep.subr.bf16.mxu0 0
        %1178 = vmatpush1.bf16.msra.mxu0 0
        %1179 = vmatprep.subr.bf16.mxu0 0
        %1180 = vmatpush1.bf16.msra.mxu0 0
        %1181 = vmatprep.subr.bf16.mxu0 0
        %1182 = vmatpush1.bf16.msra.mxu0 0
        %1183 = vmatprep.subr.bf16.mxu0 0
        %1184 = vmatpush1.bf16.msra.mxu0 0
        %1185 = vmatprep.subr.bf16.mxu0 0
        %1186 = vmatpush1.bf16.msra.mxu0 0
        %1187 = vmatprep.subr.bf16.mxu0 0
        %1188 = vmatpush1.bf16.msra.mxu0 0
        %1189 = vmatprep.subr.bf16.mxu0 0
        %1190 = vmatpush1.bf16.msra.mxu0 0
        %1191 = vmatprep.subr.bf16.mxu0 0
        %1192 = vmatpush1.bf16.msra.mxu0 0
        %1193 = vmatprep.subr.bf16.mxu0 0
        %1194 = vmatpush1.bf16.msra.mxu0 0
        %1195 = vmatprep.subr.bf16.mxu0 0
        %1196 = vmatpush1.bf16.msra.mxu0 0
        %1197 = vmatprep.subr.bf16.mxu0 0
        %1198 = vmatpush1.bf16.msra.mxu0 0
        %1199 = vmatprep.mubr.bf16.mxu0 0
        %1200 = vmatmul.mubr.bf16.gmra.mrb[0].mxu0 %v1162
        %v1201 = vpop.f32.mrb[0].mxu0
        %v1202 = vadd.f32 0.0, %v1201
        %v1203 = vpop.f32.mrb[0].mxu0
        %v1204 = vpop.f32.mrb[0].mxu0
        %v1205 = vpop.f32.mrb[0].mxu0
        %1206 = vdwg.mxu0
        %v1207 = vpack.c.bf16 %v1202, %v1202
        %v1209 = vunpack.c.l.b16 %v1207
        %v1210 = vpack.c.b16 %v1209, %v1209
        %1211 = vrot.lane.b32.xlu0 %v1210, 8
        %v1212 = vpop.permute.xlu0 %1211
        %vm1214 = vcmask 126016
        %1215 = vst.msk [vmem:[#allocation2] sm:$0xf] %vm1214, %v1212
        %1216 = vrot.lane.b32.xlu0 %v983, 112
        %v1217 = vpop.permute.xlu0 %1216
        %1218 = vrot.lane.b32.xlu0 %v752, 112
        %v1219 = vpop.permute.xlu0 %1218
        %1220 = vrot.lane.b32.xlu0 %v753, 112
        %v1221 = vpop.permute.xlu0 %1220
        %1222 = vrot.lane.b32.xlu0 %v754, 112
        %v1223 = vpop.permute.xlu0 %1222
        %1224 = vrot.lane.b32.xlu0 %v755, 112
        %v1225 = vpop.permute.xlu0 %1224
        %1226 = vrot.lane.b32.xlu0 %v756, 112
        %v1227 = vpop.permute.xlu0 %1226
        %1228 = vrot.lane.b32.xlu0 %v757, 112
        %v1229 = vpop.permute.xlu0 %1228
        %1230 = vrot.lane.b32.xlu0 %v758, 112
        %v1231 = vpop.permute.xlu0 %1230
        %1232 = vrot.lane.b32.xlu0 %v759, 112
        %v1233 = vpop.permute.xlu0 %1232
        %1234 = vrot.lane.b32.xlu0 %v719, 112
        %v1235 = vpop.permute.xlu0 %1234
        %v1237 = vsel %vm768, %v1217, 0
        %v1240 = vsel %vm768, %v1219, 0
        %v1243 = vsel %vm768, %v1221, 0
        %v1246 = vsel %vm768, %v1223, 0
        %v1249 = vsel %vm768, %v1225, 0
        %v1252 = vsel %vm768, %v1227, 0
        %v1255 = vsel %vm768, %v1229, 0
        %v1258 = vsel %vm768, %v1231, 0
        %v1261 = vsel %vm768, %v1233, 0
        %v1264 = vsel %vm768, %v1235, 0
        %1266 = vmatprep.subr.bf16.mxu0 0
        %1267 = vmatpush1.bf16.xpose.msra.mxu0 %v1240
        %1268 = vmatprep.subr.bf16.mxu0 0
        %1269 = vmatpush1.bf16.xpose.msra.mxu0 %v1243
        %1270 = vmatprep.subr.bf16.mxu0 0
        %1271 = vmatpush1.bf16.xpose.msra.mxu0 %v1246
        %1272 = vmatprep.subr.bf16.mxu0 0
        %1273 = vmatpush1.bf16.xpose.msra.mxu0 %v1249
        %1274 = vmatprep.subr.bf16.mxu0 0
        %1275 = vmatpush1.bf16.xpose.msra.mxu0 %v1252
        %1276 = vmatprep.subr.bf16.mxu0 0
        %1277 = vmatpush1.bf16.xpose.msra.mxu0 %v1255
        %1278 = vmatprep.subr.bf16.mxu0 0
        %1279 = vmatpush1.bf16.xpose.msra.mxu0 %v1258
        %1280 = vmatprep.subr.bf16.mxu0 0
        %1281 = vmatpush1.bf16.xpose.msra.mxu0 %v1261
        %1282 = vmatprep.subr.bf16.mxu0 0
        %1283 = vmatpush1.bf16.xpose.msra.mxu0 %v1264
        %1284 = vmatprep.subr.bf16.mxu0 0
        %1285 = vmatpush1.bf16.xpose.msra.mxu0 0
        %1286 = vmatprep.subr.bf16.mxu0 0
        %1287 = vmatpush1.bf16.xpose.msra.mxu0 0
        %1288 = vmatprep.subr.bf16.mxu0 0
        %1289 = vmatpush1.bf16.xpose.msra.mxu0 0
        %1290 = vmatprep.subr.bf16.mxu0 0
        %1291 = vmatpush1.bf16.xpose.msra.mxu0 0
        %1292 = vmatprep.subr.bf16.mxu0 0
        %1293 = vmatpush1.bf16.xpose.msra.mxu0 0
        %1294 = vmatprep.subr.bf16.mxu0 0
        %1295 = vmatpush1.bf16.xpose.msra.mxu0 0
        %1296 = vmatprep.subr.bf16.mxu0 0
        %1297 = vmatpush1.bf16.xpose.msra.mxu0 0
        %1298 = vmatprep.mubr.bf16.mxu0 0
        %1299 = vmatmul.mubr.bf16.gmra.mrb[0].mxu0 %v1237
        %v1300 = vpop.f32.mrb[0].mxu0
        %v1301 = vadd.f32 0.0, %v1300
        %v1302 = vpop.f32.mrb[0].mxu0
        %v1303 = vadd.f32 0.0, %v1302
        %v1304 = vpop.f32.mrb[0].mxu0
        %v1305 = vpop.f32.mrb[0].mxu0
        %1306 = vdwg.mxu0
        %v1309 = vrot.slane %v1301, 1
        %v1310 = vrot.slane %v1303, 1
        %v1313 = vsel %vm766, %v1301, %v1309
        %v1314 = vsel %vm767, %v1303, %v1310
        %v1315 = vlaneseq
        %v1316 = vshrl.u32 %v1315, 7
        %v1317 = vsub.s32 0, %v1316
        %v1318 = vrot.slane %v1313, %v1317
        %v1319 = vlaneseq
        %v1320 = vshrl.u32 %v1319, 7
        %v1321 = vsub.s32 0, %v1320
        %v1322 = vrot.slane %v1314, %v1321
        %1323 = vrot.lane.b32.xlu0 %v717, 112
        %v1324 = vpop.permute.xlu0 %1323
        %v1326 = vsel %vm768, %v1324, 0
        %1328 = vmatprep.subr.bf16.mxu0 0
        %1329 = vmatpush1.bf16.xpose.msra.mxu0 %v1240
        %1330 = vmatprep.subr.bf16.mxu0 0
        %1331 = vmatpush1.bf16.xpose.msra.mxu0 %v1243
        %1332 = vmatprep.subr.bf16.mxu0 0
        %1333 = vmatpush1.bf16.xpose.msra.mxu0 %v1246
        %1334 = vmatprep.subr.bf16.mxu0 0
        %1335 = vmatpush1.bf16.xpose.msra.mxu0 %v1249
        %1336 = vmatprep.subr.bf16.mxu0 0
        %1337 = vmatpush1.bf16.xpose.msra.mxu0 %v1252
        %1338 = vmatprep.subr.bf16.mxu0 0
        %1339 = vmatpush1.bf16.xpose.msra.mxu0 %v1255
        %1340 = vmatprep.subr.bf16.mxu0 0
        %1341 = vmatpush1.bf16.xpose.msra.mxu0 %v1258
        %1342 = vmatprep.subr.bf16.mxu0 0
        %1343 = vmatpush1.bf16.xpose.msra.mxu0 %v1261
        %1344 = vmatprep.subr.bf16.mxu0 0
        %1345 = vmatpush1.bf16.xpose.msra.mxu0 %v1264
        %1346 = vmatprep.subr.bf16.mxu0 0
        %1347 = vmatpush1.bf16.xpose.msra.mxu0 0
        %1348 = vmatprep.subr.bf16.mxu0 0
        %1349 = vmatpush1.bf16.xpose.msra.mxu0 0
        %1350 = vmatprep.subr.bf16.mxu0 0
        %1351 = vmatpush1.bf16.xpose.msra.mxu0 0
        %1352 = vmatprep.subr.bf16.mxu0 0
        %1353 = vmatpush1.bf16.xpose.msra.mxu0 0
        %1354 = vmatprep.subr.bf16.mxu0 0
        %1355 = vmatpush1.bf16.xpose.msra.mxu0 0
        %1356 = vmatprep.subr.bf16.mxu0 0
        %1357 = vmatpush1.bf16.xpose.msra.mxu0 0
        %1358 = vmatprep.subr.bf16.mxu0 0
        %1359 = vmatpush1.bf16.xpose.msra.mxu0 0
        %1360 = vmatprep.mubr.bf16.mxu0 0
        %1361 = vmatmul.mubr.bf16.gmra.mrb[0].mxu0 %v1326
        %v1362 = vpop.f32.mrb[0].mxu0
        %v1363 = vadd.f32 %v1318, %v1362
        %v1364 = vpop.f32.mrb[0].mxu0
        %v1365 = vadd.f32 %v1322, %v1364
        %v1366 = vpop.f32.mrb[0].mxu0
        %v1367 = vpop.f32.mrb[0].mxu0
        %1368 = vdwg.mxu0
        %s1370 = sor.u32 256, 121
        %1371 = vrot.lane.b32.xlu0 %v1363, %s1370
        %v1372 = vpop.permute.xlu0 %1371
        %v1373 = vadd.f32 %v1365, %v1372
        %v1374 = vmul.f32 %v1373, 0.35355338
        %v1375 = vsel %vm764, -1e+09, %v1374
        %v1376 = vsel %vm768, %v1375, -inf
        %1377 = vmax.xlane.f32.xlu0 %v1376
        %v1378 = vpop.xlane.xlu0 %1377
        %v1379 = vsub.f32 %v1375, %v1378
        %v1380 = vmul.f32 %v1379, 1.442695
        %v1381 = vpow.pop %v1380
        %v1382 = vsel %vm768, %v1381, 0.0
        %1383 = vadd.xlane.f32.xlu0 %v1382
        %v1384 = vpop.xlane.xlu0 %1383
        %v1385 = vrcp.pop %v1384
        %v1386 = vmul.f32 %v1381, %v1385
        %v1387 = vpack.c.bf16 %v1386, %v1386
        %1388 = vrot.lane.b32.xlu0 %v718, 112
        %v1389 = vpop.permute.xlu0 %1388
        %v1391 = vsel %vm768, %v1387, 0
        %v1394 = vsel %vm922, %v1389, 0
        %1396 = vmatprep.subr.bf16.mxu0 0
        %1397 = vmatpush1.bf16.msra.mxu0 %v1394
        %1398 = vmatprep.subr.bf16.mxu0 0
        %1399 = vmatpush1.bf16.msra.mxu0 0
        %1400 = vmatprep.subr.bf16.mxu0 0
        %1401 = vmatpush1.bf16.msra.mxu0 0
        %1402 = vmatprep.subr.bf16.mxu0 0
        %1403 = vmatpush1.bf16.msra.mxu0 0
        %1404 = vmatprep.subr.bf16.mxu0 0
        %1405 = vmatpush1.bf16.msra.mxu0 0
        %1406 = vmatprep.subr.bf16.mxu0 0
        %1407 = vmatpush1.bf16.msra.mxu0 0
        %1408 = vmatprep.subr.bf16.mxu0 0
        %1409 = vmatpush1.bf16.msra.mxu0 0
        %1410 = vmatprep.subr.bf16.mxu0 0
        %1411 = vmatpush1.bf16.msra.mxu0 0
        %1412 = vmatprep.subr.bf16.mxu0 0
        %1413 = vmatpush1.bf16.msra.mxu0 0
        %1414 = vmatprep.subr.bf16.mxu0 0
        %1415 = vmatpush1.bf16.msra.mxu0 0
        %1416 = vmatprep.subr.bf16.mxu0 0
        %1417 = vmatpush1.bf16.msra.mxu0 0
        %1418 = vmatprep.subr.bf16.mxu0 0
        %1419 = vmatpush1.bf16.msra.mxu0 0
        %1420 = vmatprep.subr.bf16.mxu0 0
        %1421 = vmatpush1.bf16.msra.mxu0 0
        %1422 = vmatprep.subr.bf16.mxu0 0
        %1423 = vmatpush1.bf16.msra.mxu0 0
        %1424 = vmatprep.subr.bf16.mxu0 0
        %1425 = vmatpush1.bf16.msra.mxu0 0
        %1426 = vmatprep.subr.bf16.mxu0 0
        %1427 = vmatpush1.bf16.msra.mxu0 0
        %1428 = vmatprep.mubr.bf16.mxu0 0
        %1429 = vmatmul.mubr.bf16.gmra.mrb[0].mxu0 %v1391
        %v1430 = vpop.f32.mrb[0].mxu0
        %v1431 = vadd.f32 0.0, %v1430
        %v1432 = vpop.f32.mrb[0].mxu0
        %v1433 = vpop.f32.mrb[0].mxu0
        %v1434 = vpop.f32.mrb[0].mxu0
        %1435 = vdwg.mxu0
        %v1436 = vpack.c.bf16 %v1431, %v1431
        %v1438 = vunpack.c.l.b16 %v1436
        %v1439 = vpack.c.b16 %v1438, %v1438
        %1440 = vrot.lane.b32.xlu0 %v1439, 16
        %v1441 = vpop.permute.xlu0 %1440
        %vm1443 = vcmask 191616
        %1444 = vst.msk [vmem:[#allocation2] sm:$0xf] %vm1443, %v1441
        %1445 = vrot.lane.b32.xlu0 %v983, 104
        %v1446 = vpop.permute.xlu0 %1445
        %1447 = vrot.lane.b32.xlu0 %v752, 104
        %v1448 = vpop.permute.xlu0 %1447
        %1449 = vrot.lane.b32.xlu0 %v753, 104
        %v1450 = vpop.permute.xlu0 %1449
        %1451 = vrot.lane.b32.xlu0 %v754, 104
        %v1452 = vpop.permute.xlu0 %1451
        %1453 = vrot.lane.b32.xlu0 %v755, 104
        %v1454 = vpop.permute.xlu0 %1453
        %1455 = vrot.lane.b32.xlu0 %v756, 104
        %v1456 = vpop.permute.xlu0 %1455
        %1457 = vrot.lane.b32.xlu0 %v757, 104
        %v1458 = vpop.permute.xlu0 %1457
        %1459 = vrot.lane.b32.xlu0 %v758, 104
        %v1460 = vpop.permute.xlu0 %1459
        %1461 = vrot.lane.b32.xlu0 %v759, 104
        %v1462 = vpop.permute.xlu0 %1461
        %1463 = vrot.lane.b32.xlu0 %v719, 104
        %v1464 = vpop.permute.xlu0 %1463
        %v1466 = vsel %vm768, %v1446, 0
        %v1469 = vsel %vm768, %v1448, 0
        %v1472 = vsel %vm768, %v1450, 0
        %v1475 = vsel %vm768, %v1452, 0
        %v1478 = vsel %vm768, %v1454, 0
        %v1481 = vsel %vm768, %v1456, 0
        %v1484 = vsel %vm768, %v1458, 0
        %v1487 = vsel %vm768, %v1460, 0
        %v1490 = vsel %vm768, %v1462, 0
        %v1493 = vsel %vm768, %v1464, 0
        %1495 = vmatprep.subr.bf16.mxu0 0
        %1496 = vmatpush1.bf16.xpose.msra.mxu0 %v1469
        %1497 = vmatprep.subr.bf16.mxu0 0
        %1498 = vmatpush1.bf16.xpose.msra.mxu0 %v1472
        %1499 = vmatprep.subr.bf16.mxu0 0
        %1500 = vmatpush1.bf16.xpose.msra.mxu0 %v1475
        %1501 = vmatprep.subr.bf16.mxu0 0
        %1502 = vmatpush1.bf16.xpose.msra.mxu0 %v1478
        %1503 = vmatprep.subr.bf16.mxu0 0
        %1504 = vmatpush1.bf16.xpose.msra.mxu0 %v1481
        %1505 = vmatprep.subr.bf16.mxu0 0
        %1506 = vmatpush1.bf16.xpose.msra.mxu0 %v1484
        %1507 = vmatprep.subr.bf16.mxu0 0
        %1508 = vmatpush1.bf16.xpose.msra.mxu0 %v1487
        %1509 = vmatprep.subr.bf16.mxu0 0
        %1510 = vmatpush1.bf16.xpose.msra.mxu0 %v1490
        %1511 = vmatprep.subr.bf16.mxu0 0
        %1512 = vmatpush1.bf16.xpose.msra.mxu0 %v1493
        %1513 = vmatprep.subr.bf16.mxu0 0
        %1514 = vmatpush1.bf16.xpose.msra.mxu0 0
        %1515 = vmatprep.subr.bf16.mxu0 0
        %1516 = vmatpush1.bf16.xpose.msra.mxu0 0
        %1517 = vmatprep.subr.bf16.mxu0 0
        %1518 = vmatpush1.bf16.xpose.msra.mxu0 0
        %1519 = vmatprep.subr.bf16.mxu0 0
        %1520 = vmatpush1.bf16.xpose.msra.mxu0 0
        %1521 = vmatprep.subr.bf16.mxu0 0
        %1522 = vmatpush1.bf16.xpose.msra.mxu0 0
        %1523 = vmatprep.subr.bf16.mxu0 0
        %1524 = vmatpush1.bf16.xpose.msra.mxu0 0
        %1525 = vmatprep.subr.bf16.mxu0 0
        %1526 = vmatpush1.bf16.xpose.msra.mxu0 0
        %1527 = vmatprep.mubr.bf16.mxu0 0
        %1528 = vmatmul.mubr.bf16.gmra.mrb[0].mxu0 %v1466
        %v1529 = vpop.f32.mrb[0].mxu0
        %v1530 = vadd.f32 0.0, %v1529
        %v1531 = vpop.f32.mrb[0].mxu0
        %v1532 = vadd.f32 0.0, %v1531
        %v1533 = vpop.f32.mrb[0].mxu0
        %v1534 = vpop.f32.mrb[0].mxu0
        %1535 = vdwg.mxu0
        %v1538 = vrot.slane %v1530, 1
        %v1539 = vrot.slane %v1532, 1
        %v1542 = vsel %vm766, %v1530, %v1538
        %v1543 = vsel %vm767, %v1532, %v1539
        %v1544 = vlaneseq
        %v1545 = vshrl.u32 %v1544, 7
        %v1546 = vsub.s32 0, %v1545
        %v1547 = vrot.slane %v1542, %v1546
        %v1548 = vlaneseq
        %v1549 = vshrl.u32 %v1548, 7
        %v1550 = vsub.s32 0, %v1549
        %v1551 = vrot.slane %v1543, %v1550
        %1552 = vrot.lane.b32.xlu0 %v717, 104
        %v1553 = vpop.permute.xlu0 %1552
        %v1555 = vsel %vm768, %v1553, 0
        %1557 = vmatprep.subr.bf16.mxu0 0
        %1558 = vmatpush1.bf16.xpose.msra.mxu0 %v1469
        %1559 = vmatprep.subr.bf16.mxu0 0
        %1560 = vmatpush1.bf16.xpose.msra.mxu0 %v1472
        %1561 = vmatprep.subr.bf16.mxu0 0
        %1562 = vmatpush1.bf16.xpose.msra.mxu0 %v1475
        %1563 = vmatprep.subr.bf16.mxu0 0
        %1564 = vmatpush1.bf16.xpose.msra.mxu0 %v1478
        %1565 = vmatprep.subr.bf16.mxu0 0
        %1566 = vmatpush1.bf16.xpose.msra.mxu0 %v1481
        %1567 = vmatprep.subr.bf16.mxu0 0
        %1568 = vmatpush1.bf16.xpose.msra.mxu0 %v1484
        %1569 = vmatprep.subr.bf16.mxu0 0
        %1570 = vmatpush1.bf16.xpose.msra.mxu0 %v1487
        %1571 = vmatprep.subr.bf16.mxu0 0
        %1572 = vmatpush1.bf16.xpose.msra.mxu0 %v1490
        %1573 = vmatprep.subr.bf16.mxu0 0
        %1574 = vmatpush1.bf16.xpose.msra.mxu0 %v1493
        %1575 = vmatprep.subr.bf16.mxu0 0
        %1576 = vmatpush1.bf16.xpose.msra.mxu0 0
        %1577 = vmatprep.subr.bf16.mxu0 0
        %1578 = vmatpush1.bf16.xpose.msra.mxu0 0
        %1579 = vmatprep.subr.bf16.mxu0 0
        %1580 = vmatpush1.bf16.xpose.msra.mxu0 0
        %1581 = vmatprep.subr.bf16.mxu0 0
        %1582 = vmatpush1.bf16.xpose.msra.mxu0 0
        %1583 = vmatprep.subr.bf16.mxu0 0
        %1584 = vmatpush1.bf16.xpose.msra.mxu0 0
        %1585 = vmatprep.subr.bf16.mxu0 0
        %1586 = vmatpush1.bf16.xpose.msra.mxu0 0
        %1587 = vmatprep.subr.bf16.mxu0 0
        %1588 = vmatpush1.bf16.xpose.msra.mxu0 0
        %1589 = vmatprep.mubr.bf16.mxu0 0
        %1590 = vmatmul.mubr.bf16.gmra.mrb[0].mxu0 %v1555
        %v1591 = vpop.f32.mrb[0].mxu0
        %v1592 = vadd.f32 %v1547, %v1591
        %v1593 = vpop.f32.mrb[0].mxu0
        %v1594 = vadd.f32 %v1551, %v1593
        %v1595 = vpop.f32.mrb[0].mxu0
        %v1596 = vpop.f32.mrb[0].mxu0
        %1597 = vdwg.mxu0
        %s1599 = sor.u32 256, 121
        %1600 = vrot.lane.b32.xlu0 %v1592, %s1599
        %v1601 = vpop.permute.xlu0 %1600
        %v1602 = vadd.f32 %v1594, %v1601
        %v1603 = vmul.f32 %v1602, 0.35355338
        %v1604 = vsel %vm764, -1e+09, %v1603
        %v1605 = vsel %vm768, %v1604, -inf
        %1606 = vmax.xlane.f32.xlu0 %v1605
        %v1607 = vpop.xlane.xlu0 %1606
        %v1608 = vsub.f32 %v1604, %v1607
        %v1609 = vmul.f32 %v1608, 1.442695
        %v1610 = vpow.pop %v1609
        %v1611 = vsel %vm768, %v1610, 0.0
        %1612 = vadd.xlane.f32.xlu0 %v1611
        %v1613 = vpop.xlane.xlu0 %1612
        %v1614 = vrcp.pop %v1613
        %v1615 = vmul.f32 %v1610, %v1614
        %v1616 = vpack.c.bf16 %v1615, %v1615
        %1617 = vrot.lane.b32.xlu0 %v718, 104
        %v1618 = vpop.permute.xlu0 %1617
        %v1620 = vsel %vm768, %v1616, 0
        %v1623 = vsel %vm922, %v1618, 0
        %1625 = vmatprep.subr.bf16.mxu0 0
        %1626 = vmatpush1.bf16.msra.mxu0 %v1623
        %1627 = vmatprep.subr.bf16.mxu0 0
        %1628 = vmatpush1.bf16.msra.mxu0 0
        %1629 = vmatprep.subr.bf16.mxu0 0
        %1630 = vmatpush1.bf16.msra.mxu0 0
        %1631 = vmatprep.subr.bf16.mxu0 0
        %1632 = vmatpush1.bf16.msra.mxu0 0
        %1633 = vmatprep.subr.bf16.mxu0 0
        %1634 = vmatpush1.bf16.msra.mxu0 0
        %1635 = vmatprep.subr.bf16.mxu0 0
        %1636 = vmatpush1.bf16.msra.mxu0 0
        %1637 = vmatprep.subr.bf16.mxu0 0
        %1638 = vmatpush1.bf16.msra.mxu0 0
        %1639 = vmatprep.subr.bf16.mxu0 0
        %1640 = vmatpush1.bf16.msra.mxu0 0
        %1641 = vmatprep.subr.bf16.mxu0 0
        %1642 = vmatpush1.bf16.msra.mxu0 0
        %1643 = vmatprep.subr.bf16.mxu0 0
        %1644 = vmatpush1.bf16.msra.mxu0 0
        %1645 = vmatprep.subr.bf16.mxu0 0
        %1646 = vmatpush1.bf16.msra.mxu0 0
        %1647 = vmatprep.subr.bf16.mxu0 0
        %1648 = vmatpush1.bf16.msra.mxu0 0
        %1649 = vmatprep.subr.bf16.mxu0 0
        %1650 = vmatpush1.bf16.msra.mxu0 0
        %1651 = vmatprep.subr.bf16.mxu0 0
        %1652 = vmatpush1.bf16.msra.mxu0 0
        %1653 = vmatprep.subr.bf16.mxu0 0
        %1654 = vmatpush1.bf16.msra.mxu0 0
        %1655 = vmatprep.subr.bf16.mxu0 0
        %1656 = vmatpush1.bf16.msra.mxu0 0
        %1657 = vmatprep.mubr.bf16.mxu0 0
        %1658 = vmatmul.mubr.bf16.gmra.mrb[0].mxu0 %v1620
        %v1659 = vpop.f32.mrb[0].mxu0
        %v1660 = vadd.f32 0.0, %v1659
        %v1661 = vpop.f32.mrb[0].mxu0
        %v1662 = vpop.f32.mrb[0].mxu0
        %v1663 = vpop.f32.mrb[0].mxu0
        %1664 = vdwg.mxu0
        %v1665 = vpack.c.bf16 %v1660, %v1660
        %v1667 = vunpack.c.l.b16 %v1665
        %v1668 = vpack.c.b16 %v1667, %v1667
        %1669 = vrot.lane.b32.xlu0 %v1668, 24
        %v1670 = vpop.permute.xlu0 %1669
        %vm1672 = vcmask 257216
        %1673 = vst.msk [vmem:[#allocation2] sm:$0xf] %vm1672, %v1670
        %v1674 = vld [vmem:[#allocation2] sm:$0xf]
        %v1675 = vld [vmem:[%s12] sm:$0xf]
        %v1676 = vld [vmem:[%s12 + $0x4] sm:$0xf]
        %v1677 = vld [vmem:[%s12 + $0x8] sm:$0xf]
        %v1678 = vld [vmem:[%s12 + $0xc] sm:$0xf]
        %v1679 = vld [vmem:[%s13] sm:$0x1]
        %v1681 = vlaneseq
        %v1682 = vshrl.u32 %v1681, 7
        %v1683 = vsub.s32 0, %v1682
        %v1684 = vrot.slane %v1679, %v1683
        %v1690 = vunpack.c.l.b16 %v1675
        %v1691 = vunpack.c.l.b16 %v1676
        %v1692 = vunpack.c.l.b16 %v1677
        %v1693 = vunpack.c.l.b16 %v1678
        %v1694 = vpack.c.b16 %v1691, %v1690
        %v1695 = vpack.c.b16 %v1693, %v1692
        %v1699 = vsel %vm541, %v1674, 0
        %1701 = vmatprep.subr.bf16.mxu0 0
        %1702 = vmatpush1.bf16.msra.mxu0 %v1694
        %1703 = vmatprep.subr.bf16.mxu0 0
        %1704 = vmatpush1.bf16.msra.mxu0 %v1695
        %1705 = vmatprep.subr.bf16.mxu0 0
        %1706 = vmatpush1.bf16.msra.mxu0 0
        %1707 = vmatprep.subr.bf16.mxu0 0
        %1708 = vmatpush1.bf16.msra.mxu0 0
        %1709 = vmatprep.subr.bf16.mxu0 0
        %1710 = vmatpush1.bf16.msra.mxu0 0
        %1711 = vmatprep.subr.bf16.mxu0 0
        %1712 = vmatpush1.bf16.msra.mxu0 0
        %1713 = vmatprep.subr.bf16.mxu0 0
        %1714 = vmatpush1.bf16.msra.mxu0 0
        %1715 = vmatprep.subr.bf16.mxu0 0
        %1716 = vmatpush1.bf16.msra.mxu0 0
        %1717 = vmatprep.subr.bf16.mxu0 0
        %1718 = vmatpush1.bf16.msra.mxu0 0
        %1719 = vmatprep.subr.bf16.mxu0 0
        %1720 = vmatpush1.bf16.msra.mxu0 0
        %1721 = vmatprep.subr.bf16.mxu0 0
        %1722 = vmatpush1.bf16.msra.mxu0 0
        %1723 = vmatprep.subr.bf16.mxu0 0
        %1724 = vmatpush1.bf16.msra.mxu0 0
        %1725 = vmatprep.subr.bf16.mxu0 0
        %1726 = vmatpush1.bf16.msra.mxu0 0
        %1727 = vmatprep.subr.bf16.mxu0 0
        %1728 = vmatpush1.bf16.msra.mxu0 0
        %1729 = vmatprep.subr.bf16.mxu0 0
        %1730 = vmatpush1.bf16.msra.mxu0 0
        %1731 = vmatprep.subr.bf16.mxu0 0
        %1732 = vmatpush1.bf16.msra.mxu0 0
        %1733 = vmatprep.mubr.bf16.mxu0 0
        %1734 = vmatmul.mubr.bf16.gmra.mrb[0].mxu0 %v1699
        %v1735 = vpop.f32.mrb[0].mxu0
        %v1736 = vadd.f32 %v1684, %v1735
        %v1737 = vpop.f32.mrb[0].mxu0
        %v1738 = vpop.f32.mrb[0].mxu0
        %v1739 = vpop.f32.mrb[0].mxu0
        %1740 = vdwg.mxu0
        %v1741 = vpack.c.bf16 %v1736, %v1736
        %vm1742 = vcmask 257024
        %1743 = vst.msk [vmem:[%s479] sm:$0xf] %vm1742, %v1741
        %s1744 = sand.u32 %s335, 1
        %s1745 = scalar_lea.sflag [#allocation6], %s1744
        %s1746 = sand.u32 %s335, 1
        %s1747 = smul.addr %s1746, 4
        %s1748 = scalar_lea.vmem [#allocation5], %s1747
        // Predicated region
        $region73: #{tpu_custom_call.1} parent=71 // pred_check
          %p1749 = pneg %p345
        $region74: #{tpu_custom_call.1} parent=71 // pred_check_branch
          %1751 = sbr.rel (%p1749) target = $region76
        $region75: #{tpu_custom_call.1} parent=71 // pred_region
          %s1753 = ssub.s32 64, 64
          %1754 = vsyncadd %s1745, %s1753
          %s1755 = smul.addr %s34, 64
          %s1756 = scalar_lea.hbm %s14, %s1755
          %s1758 = sshll.u32 %s1748, 4
          %s1759 = int_to_ptr.vmem [resolvable:$true] %s1758
          %1761 = dma.vmem_to_hbm [thread:$0]  %s1759, 64, %s1756, %s1745
        $region76: #{tpu_custom_call.1} parent=71 // pred_fallthru
          _
      $region72: #{tpu_custom_call.1} parent=5 // pred_fallthru
        _
      %p1762 = scmp.le.s32.totalorder 2, %s29
      // Predicated region
      $region77: #{tpu_custom_call.1} parent=5 // pred_check
        %p1763 = pneg %p1762
      $region78: #{tpu_custom_call.1} parent=5 // pred_check_branch
        %1765 = sbr.rel (%p1763) target = $region80
      $region79: #{tpu_custom_call.1} parent=5 // pred_region
        %s1766 = ssub.s32 %s29, 2
        // Predicated region
        $region81: #{tpu_custom_call.1} parent=79 // pred_check
          %p1767 = pneg %p351
        $region82: #{tpu_custom_call.1} parent=79 // pred_check_branch
          %1769 = sbr.rel (%p1767) target = $region84
        $region83: #{tpu_custom_call.1} parent=79 // pred_region
          %s1770 = sand.u32 %s336, 1
          %s1771 = scalar_lea.sflag [#allocation6], %s1770
          %s1772 = sand.u32 %s336, 1
          %s1773 = smul.addr %s1772, 4
          %s1774 = scalar_lea.vmem [#allocation5], %s1773
          %1775 = dma.done %s1771, 64
        $region84: #{tpu_custom_call.1} parent=79 // pred_fallthru
          _
      $region80: #{tpu_custom_call.1} parent=5 // pred_fallthru
        _
    $region6: #{tpu_custom_call.1} parent=1 // loop_footer
      %s33 = sadd.s32 1, %s29
    $region7: #{tpu_custom_call.1} parent=1 // loop_footer_branch
      %28 = sbr.rel target = $region3
    $region8: #{tpu_custom_call.1} parent=1 // loop_exit
      _
    %1776 = vsyncpa [#allocation6], 1
    %s1777 = scalar_lea.sflag [#allocation6], 1
    %1778 = vsyncpa %s1777, 1

// kernel: tpu_custom_call.1
$region0: #{tpu_custom_call.1}
  #allocation0 [shape = 'u32[]', space=smem, size = 0x4, offset = 0x4, fixed_abs, tag = 'smem constant byte address 0x4 - core index']
  #allocation1 [shape = 'u32[144,128]{1,0:T(1,128)}', space=vmem, size = 0x12000, scoped, tag = 'internal scratch']
  #allocation2 [shape = 'bf16[8,32]{1,0:T(8,128)(2,1)}', space=vmem, size = 0x800, scoped, tag = 'scratch operand']
  #allocation3 [shape = 's32[1]{0}', space=sflag, size = 0x4, scoped, tag = 'scoped memory for tpu_custom_call.1']
  #allocation4 [shape = 'u8[512]{0}', space=smem, size = 0x200, scoped, tag = 'prefetched SMEM operand 0']
  %s0 = inlined_call_operand.vmem [shape: s32[2], index: 0, kind: input, shape index: {}]
  %s1 = inlined_call_operand.vmem [shape: bf16[2,8,32], index: 1, kind: input, shape index: {}]
  %s2 = inlined_call_operand.vmem [shape: bf16[2,8,32], index: 2, kind: input, shape index: {}]
  %s3 = inlined_call_operand.vmem [shape: bf16[2,8,32], index: 3, kind: input, shape index: {}]
  %s4 = inlined_call_operand.vmem [shape: bf16[2,128,32], index: 4, kind: input, shape index: {}]
  %s5 = inlined_call_operand.vmem [shape: bf16[32,32], index: 5, kind: input, shape index: {}]
  %s6 = inlined_call_operand.vmem [shape: bf16[32,32], index: 6, kind: input, shape index: {}]
  %s7 = inlined_call_operand.vmem [shape: bf16[32,32], index: 7, kind: input, shape index: {}]
  %s8 = inlined_call_operand.vmem [shape: f32[1,32], index: 8, kind: input, shape index: {}]
  %s9 = inlined_call_operand.vmem [shape: f32[1,32], index: 9, kind: input, shape index: {}]
  %s10 = inlined_call_operand.vmem [shape: f32[1,32], index: 10, kind: input, shape index: {}]
  %s11 = inlined_call_operand.vmem [shape: bf16[2,32], index: 11, kind: input, shape index: {}]
  %s12 = inlined_call_operand.vmem [shape: bf16[32,32], index: 12, kind: input, shape index: {}]
  %s13 = inlined_call_operand.vmem [shape: f32[1,32], index: 13, kind: input, shape index: {}]
  %s14 = inlined_call_operand.hbm [shape: f32[2,8,32], index: 14, kind: output, shape index: {}]
  %s15 = sld [smem:[#allocation0]]
  $region85: #{tpu_custom_call.1} parent=0
    _
  %s17 = ssub.s32 1, %s15
  %s18 = scalar_select 0, %s17, %s15
  %s19 = sshll.u32 %s0, 4
  %s20 = int_to_ptr.vmem [resolvable:$true] %s19
  %22 = dma.vmem_to_smem %s20, 16, [#allocation4], [#allocation3]
  %23 = dma.done [#allocation3], 16
  %24 = sfence
  $region1: #{tpu_custom_call.1} parent=0
    #allocation5 [shape = 'u8[8192]{0}', space=vmem, size = 0x2000, scoped, tag = 'output window, operand 0']
    #allocation6 [shape = 's32[2]{0}', space=sflag, size = 0x8, scoped, tag = 'scoped memory for tpu_custom_call.1']
    %25 = vsyncpa [#allocation6], 0
    %s26 = scalar_lea.sflag [#allocation6], 1
    %27 = vsyncpa %s26, 0
    loop: start=0, step=1, limit=4
    $region2: #{tpu_custom_call.1} parent=1 // loop_pre_header
      _
    $region3: #{tpu_custom_call.1} parent=1 // loop_header
      %s29 = sphi 0, %s33
      %p30 = scmp.ge.s32.totalorder %s29, 4
      %s39 = sphi 0, %s41
      %s42 = sphi 0, %s39
      %s43 = sphi 0, %s42
      %s59 = sphi 0, %s43
      %s65 = sphi 0, %s67
      %s68 = sphi 0, %s65
      %s69 = sphi 0, %s68
      %s85 = sphi 0, %s69
      %s91 = sphi 0, %s93
      %s94 = sphi 0, %s91
      %s95 = sphi 0, %s94
      %s111 = sphi 0, %s95
      %s117 = sphi 0, %s119
      %s120 = sphi 0, %s117
      %s121 = sphi 0, %s120
      %s137 = sphi 0, %s121
      %s141 = sphi 0, %s141
      %s143 = sphi 0, %s141
      %s144 = sphi 0, %s143
      %s158 = sphi 0, %s144
      %s162 = sphi 0, %s162
      %s164 = sphi 0, %s162
      %s165 = sphi 0, %s164
      %s179 = sphi 0, %s165
      %s183 = sphi 0, %s183
      %s185 = sphi 0, %s183
      %s186 = sphi 0, %s185
      %s200 = sphi 0, %s186
      %s204 = sphi 0, %s204
      %s206 = sphi 0, %s204
      %s207 = sphi 0, %s206
      %s221 = sphi 0, %s207
      %s225 = sphi 0, %s225
      %s227 = sphi 0, %s225
      %s228 = sphi 0, %s227
      %s242 = sphi 0, %s228
      %s246 = sphi 0, %s246
      %s248 = sphi 0, %s246
      %s249 = sphi 0, %s248
      %s263 = sphi 0, %s249
      %s267 = sphi 0, %s267
      %s269 = sphi 0, %s267
      %s270 = sphi 0, %s269
      %s284 = sphi 0, %s270
      %s288 = sphi 0, %s288
      %s290 = sphi 0, %s288
      %s291 = sphi 0, %s290
      %s305 = sphi 0, %s291
      %s309 = sphi 0, %s309
      %s311 = sphi 0, %s309
      %s312 = sphi 0, %s311
      %s326 = sphi 0, %s312
      %s332 = sphi 0, %s334
      %s335 = sphi 0, %s332
      %s336 = sphi 0, %s335
      %s352 = sphi 0, %s336
    $region4: #{tpu_custom_call.1} parent=1 // loop_header_branch
      %32 = sbr.rel (%p30) target = $region8
    $region5: #{tpu_custom_call.1} parent=1 // loop_body
      %s34 = ssub.s32 %s29, 1
      %s35 = ssub.s32 %s29, 2
      %s36 = sadd.s32 %s29, 1
      %s37 = ssub.s32 %s29, %s36
      %p38 = scmp.eq.s32.totalorder %s37, 0
      %s40 = sadd.s32 %s39, 1
      %s41 = scalar_select %p38, %s39, %s40
      %p44 = pneg %p38
      %p45 = scmp.eq.s32.totalorder %s29, 1
      %p46 = por %p44, %p45
      %p47 = scmp.ne.s32.totalorder %s39, %s42
      %p48 = scmp.eq.s32.totalorder %s29, 0
      %p49 = por %p47, %p48
      %p50 = scmp.ne.s32.totalorder %s39, %s42
      %p51 = scmp.eq.s32.totalorder %s34, 1
      %p52 = por %p50, %p51
      %p53 = scmp.ne.s32.totalorder %s42, %s43
      %p54 = scmp.eq.s32.totalorder %s34, 0
      %p55 = por %p53, %p54
      %p56 = scmp.ne.s32.totalorder %s42, %s43
      %p57 = scmp.eq.s32.totalorder %s35, 1
      %p58 = por %p56, %p57
      %p60 = scmp.ne.s32.totalorder %s43, %s59
      %p61 = scmp.eq.s32.totalorder %s35, 0
      %p62 = por %p60, %p61
      %s63 = ssub.s32 %s29, %s36
      %p64 = scmp.eq.s32.totalorder %s63, 0
      %s66 = sadd.s32 %s65, 1
      %s67 = scalar_select %p64, %s65, %s66
      %p70 = pneg %p64
      %p71 = scmp.eq.s32.totalorder %s29, 1
      %p72 = por %p70, %p71
      %p73 = scmp.ne.s32.totalorder %s65, %s68
      %p74 = scmp.eq.s32.totalorder %s29, 0
      %p75 = por %p73, %p74
      %p76 = scmp.ne.s32.totalorder %s65, %s68
      %p77 = scmp.eq.s32.totalorder %s34, 1
      %p78 = por %p76, %p77
      %p79 = scmp.ne.s32.totalorder %s68, %s69
      %p80 = scmp.eq.s32.totalorder %s34, 0
      %p81 = por %p79, %p80
      %p82 = scmp.ne.s32.totalorder %s68, %s69
      %p83 = scmp.eq.s32.totalorder %s35, 1
      %p84 = por %p82, %p83
      %p86 = scmp.ne.s32.totalorder %s69, %s85
      %p87 = scmp.eq.s32.totalorder %s35, 0
      %p88 = por %p86, %p87
      %s89 = ssub.s32 %s29, %s36
      %p90 = scmp.eq.s32.totalorder %s89, 0
      %s92 = sadd.s32 %s91, 1
      %s93 = scalar_select %p90, %s91, %s92
      %p96 = pneg %p90
      %p97 = scmp.eq.s32.totalorder %s29, 1
      %p98 = por %p96, %p97
      %p99 = scmp.ne.s32.totalorder %s91, %s94
      %p100 = scmp.eq.s32.totalorder %s29, 0
      %p101 = por %p99, %p100
      %p102 = scmp.ne.s32.totalorder %s91, %s94
      %p103 = scmp.eq.s32.totalorder %s34, 1
      %p104 = por %p102, %p103
      %p105 = scmp.ne.s32.totalorder %s94, %s95
      %p106 = scmp.eq.s32.totalorder %s34, 0
      %p107 = por %p105, %p106
      %p108 = scmp.ne.s32.totalorder %s94, %s95
      %p109 = scmp.eq.s32.totalorder %s35, 1
      %p110 = por %p108, %p109
      %p112 = scmp.ne.s32.totalorder %s95, %s111
      %p113 = scmp.eq.s32.totalorder %s35, 0
      %p114 = por %p112, %p113
      %s115 = ssub.s32 %s29, %s36
      %p116 = scmp.eq.s32.totalorder %s115, 0
      %s118 = sadd.s32 %s117, 1
      %s119 = scalar_select %p116, %s117, %s118
      %p122 = pneg %p116
      %p123 = scmp.eq.s32.totalorder %s29, 1
      %p124 = por %p122, %p123
      %p125 = scmp.ne.s32.totalorder %s117, %s120
      %p126 = scmp.eq.s32.totalorder %s29, 0
      %p127 = por %p125, %p126
      %p128 = scmp.ne.s32.totalorder %s117, %s120
      %p129 = scmp.eq.s32.totalorder %s34, 1
      %p130 = por %p128, %p129
      %p131 = scmp.ne.s32.totalorder %s120, %s121
      %p132 = scmp.eq.s32.totalorder %s34, 0
      %p133 = por %p131, %p132
      %p134 = scmp.ne.s32.totalorder %s120, %s121
      %p135 = scmp.eq.s32.totalorder %s35, 1
      %p136 = por %p134, %p135
      %p138 = scmp.ne.s32.totalorder %s121, %s137
      %p139 = scmp.eq.s32.totalorder %s35, 0
      %p140 = por %p138, %p139
      %s142 = sadd.s32 %s141, 1
      %p145 = scmp.eq.s32.totalorder %s29, 1
      %p146 = scmp.ne.s32.totalorder %s141, %s143
      %p147 = scmp.eq.s32.totalorder %s29, 0
      %p148 = por %p146, %p147
      %p149 = scmp.ne.s32.totalorder %s141, %s143
      %p150 = scmp.eq.s32.totalorder %s34, 1
      %p151 = por %p149, %p150
      %p152 = scmp.ne.s32.totalorder %s143, %s144
      %p153 = scmp.eq.s32.totalorder %s34, 0
      %p154 = por %p152, %p153
      %p155 = scmp.ne.s32.totalorder %s143, %s144
      %p156 = scmp.eq.s32.totalorder %s35, 1
      %p157 = por %p155, %p156
      %p159 = scmp.ne.s32.totalorder %s144, %s158
      %p160 = scmp.eq.s32.totalorder %s35, 0
      %p161 = por %p159, %p160
      %s163 = sadd.s32 %s162, 1
      %p166 = scmp.eq.s32.totalorder %s29, 1
      %p167 = scmp.ne.s32.totalorder %s162, %s164
      %p168 = scmp.eq.s32.totalorder %s29, 0
      %p169 = por %p167, %p168
      %p170 = scmp.ne.s32.totalorder %s162, %s164
      %p171 = scmp.eq.s32.totalorder %s34, 1
      %p172 = por %p170, %p171
      %p173 = scmp.ne.s32.totalorder %s164, %s165
      %p174 = scmp.eq.s32.totalorder %s34, 0
      %p175 = por %p173, %p174
      %p176 = scmp.ne.s32.totalorder %s164, %s165
      %p177 = scmp.eq.s32.totalorder %s35, 1
      %p178 = por %p176, %p177
      %p180 = scmp.ne.s32.totalorder %s165, %s179
      %p181 = scmp.eq.s32.totalorder %s35, 0
      %p182 = por %p180, %p181
      %s184 = sadd.s32 %s183, 1
      %p187 = scmp.eq.s32.totalorder %s29, 1
      %p188 = scmp.ne.s32.totalorder %s183, %s185
      %p189 = scmp.eq.s32.totalorder %s29, 0
      %p190 = por %p188, %p189
      %p191 = scmp.ne.s32.totalorder %s183, %s185
      %p192 = scmp.eq.s32.totalorder %s34, 1
      %p193 = por %p191, %p192
      %p194 = scmp.ne.s32.totalorder %s185, %s186
      %p195 = scmp.eq.s32.totalorder %s34, 0
      %p196 = por %p194, %p195
      %p197 = scmp.ne.s32.totalorder %s185, %s186
      %p198 = scmp.eq.s32.totalorder %s35, 1
      %p199 = por %p197, %p198
      %p201 = scmp.ne.s32.totalorder %s186, %s200
      %p202 = scmp.eq.s32.totalorder %s35, 0
      %p203 = por %p201, %p202
      %s205 = sadd.s32 %s204, 1
      %p208 = scmp.eq.s32.totalorder %s29, 1
      %p209 = scmp.ne.s32.totalorder %s204, %s206
      %p210 = scmp.eq.s32.totalorder %s29, 0
      %p211 = por %p209, %p210
      %p212 = scmp.ne.s32.totalorder %s204, %s206
      %p213 = scmp.eq.s32.totalorder %s34, 1
      %p214 = por %p212, %p213
      %p215 = scmp.ne.s32.totalorder %s206, %s207
      %p216 = scmp.eq.s32.totalorder %s34, 0
      %p217 = por %p215, %p216
      %p218 = scmp.ne.s32.totalorder %s206, %s207
      %p219 = scmp.eq.s32.totalorder %s35, 1
      %p220 = por %p218, %p219
      %p222 = scmp.ne.s32.totalorder %s207, %s221
      %p223 = scmp.eq.s32.totalorder %s35, 0
      %p224 = por %p222, %p223
      %s226 = sadd.s32 %s225, 1
      %p229 = scmp.eq.s32.totalorder %s29, 1
      %p230 = scmp.ne.s32.totalorder %s225, %s227
      %p231 = scmp.eq.s32.totalorder %s29, 0
      %p232 = por %p230, %p231
      %p233 = scmp.ne.s32.totalorder %s225, %s227
      %p234 = scmp.eq.s32.totalorder %s34, 1
      %p235 = por %p233, %p234
      %p236 = scmp.ne.s32.totalorder %s227, %s228
      %p237 = scmp.eq.s32.totalorder %s34, 0
      %p238 = por %p236, %p237
      %p239 = scmp.ne.s32.totalorder %s227, %s228
      %p240 = scmp.eq.s32.totalorder %s35, 1
      %p241 = por %p239, %p240
      %p243 = scmp.ne.s32.totalorder %s228, %s242
      %p244 = scmp.eq.s32.totalorder %s35, 0
      %p245 = por %p243, %p244
      %s247 = sadd.s32 %s246, 1
      %p250 = scmp.eq.s32.totalorder %s29, 1
      %p251 = scmp.ne.s32.totalorder %s246, %s248
      %p252 = scmp.eq.s32.totalorder %s29, 0
      %p253 = por %p251, %p252
      %p254 = scmp.ne.s32.totalorder %s246, %s248
      %p255 = scmp.eq.s32.totalorder %s34, 1
      %p256 = por %p254, %p255
      %p257 = scmp.ne.s32.totalorder %s248, %s249
      %p258 = scmp.eq.s32.totalorder %s34, 0
      %p259 = por %p257, %p258
      %p260 = scmp.ne.s32.totalorder %s248, %s249
      %p261 = scmp.eq.s32.totalorder %s35, 1
      %p262 = por %p260, %p261
      %p264 = scmp.ne.s32.totalorder %s249, %s263
      %p265 = scmp.eq.s32.totalorder %s35, 0
      %p266 = por %p264, %p265
      %s268 = sadd.s32 %s267, 1
      %p271 = scmp.eq.s32.totalorder %s29, 1
      %p272 = scmp.ne.s32.totalorder %s267, %s269
      %p273 = scmp.eq.s32.totalorder %s29, 0
      %p274 = por %p272, %p273
      %p275 = scmp.ne.s32.totalorder %s267, %s269
      %p276 = scmp.eq.s32.totalorder %s34, 1
      %p277 = por %p275, %p276
      %p278 = scmp.ne.s32.totalorder %s269, %s270
      %p279 = scmp.eq.s32.totalorder %s34, 0
      %p280 = por %p278, %p279
      %p281 = scmp.ne.s32.totalorder %s269, %s270
      %p282 = scmp.eq.s32.totalorder %s35, 1
      %p283 = por %p281, %p282
      %p285 = scmp.ne.s32.totalorder %s270, %s284
      %p286 = scmp.eq.s32.totalorder %s35, 0
      %p287 = por %p285, %p286
      %s289 = sadd.s32 %s288, 1
      %p292 = scmp.eq.s32.totalorder %s29, 1
      %p293 = scmp.ne.s32.totalorder %s288, %s290
      %p294 = scmp.eq.s32.totalorder %s29, 0
      %p295 = por %p293, %p294
      %p296 = scmp.ne.s32.totalorder %s288, %s290
      %p297 = scmp.eq.s32.totalorder %s34, 1
      %p298 = por %p296, %p297
      %p299 = scmp.ne.s32.totalorder %s290, %s291
      %p300 = scmp.eq.s32.totalorder %s34, 0
      %p301 = por %p299, %p300
      %p302 = scmp.ne.s32.totalorder %s290, %s291
      %p303 = scmp.eq.s32.totalorder %s35, 1
      %p304 = por %p302, %p303
      %p306 = scmp.ne.s32.totalorder %s291, %s305
      %p307 = scmp.eq.s32.totalorder %s35, 0
      %p308 = por %p306, %p307
      %s310 = sadd.s32 %s309, 1
      %p313 = scmp.eq.s32.totalorder %s29, 1
      %p314 = scmp.ne.s32.totalorder %s309, %s311
      %p315 = scmp.eq.s32.totalorder %s29, 0
      %p316 = por %p314, %p315
      %p317 = scmp.ne.s32.totalorder %s309, %s311
      %p318 = scmp.eq.s32.totalorder %s34, 1
      %p319 = por %p317, %p318
      %p320 = scmp.ne.s32.totalorder %s311, %s312
      %p321 = scmp.eq.s32.totalorder %s34, 0
      %p322 = por %p320, %p321
      %p323 = scmp.ne.s32.totalorder %s311, %s312
      %p324 = scmp.eq.s32.totalorder %s35, 1
      %p325 = por %p323, %p324
      %p327 = scmp.ne.s32.totalorder %s312, %s326
      %p328 = scmp.eq.s32.totalorder %s35, 0
      %p329 = por %p327, %p328
      %s330 = ssub.s32 %s29, %s36
      %p331 = scmp.eq.s32.totalorder %s330, 0
      %s333 = sadd.s32 %s332, 1
      %s334 = scalar_select %p331, %s332, %s333
      %p337 = pneg %p331
      %p338 = scmp.eq.s32.totalorder %s29, 1
      %p339 = por %p337, %p338
      %p340 = scmp.ne.s32.totalorder %s332, %s335
      %p341 = scmp.eq.s32.totalorder %s29, 0
      %p342 = por %p340, %p341
      %p343 = scmp.ne.s32.totalorder %s332, %s335
      %p344 = scmp.eq.s32.totalorder %s34, 1
      %p345 = por %p343, %p344
      %p346 = scmp.ne.s32.totalorder %s335, %s336
      %p347 = scmp.eq.s32.totalorder %s34, 0
      %p348 = por %p346, %p347
      %p349 = scmp.ne.s32.totalorder %s335, %s336
      %p350 = scmp.eq.s32.totalorder %s35, 1
      %p351 = por %p349, %p350
      %p353 = scmp.ne.s32.totalorder %s336, %s352
      %p354 = scmp.eq.s32.totalorder %s35, 0
      %p355 = por %p353, %p354
      %p356 = scmp.le.s32.totalorder 1, %s29
      %p357 = scmp.lt.s32.totalorder %s29, 3
      %p358 = pnand %p356, %p357
      %p359 = pneg %p358
      // Predicated region
      $region9: #{tpu_custom_call.1} parent=5 // pred_check
        _
      $region10: #{tpu_custom_call.1} parent=5 // pred_check_branch
        %361 = sbr.rel (%p358) target = $region12
      $region11: #{tpu_custom_call.1} parent=5 // pred_region
        %s362 = ssub.s32 %s29, 1
        // Predicated region
        $region13: #{tpu_custom_call.1} parent=11 // pred_check
          %p363 = pneg %p154
        $region14: #{tpu_custom_call.1} parent=11 // pred_check_branch
          %365 = sbr.rel (%p363) target = $region16
        $region15: #{tpu_custom_call.1} parent=11 // pred_region
          _
        $region16: #{tpu_custom_call.1} parent=11 // pred_fallthru
          _
        // Predicated region
        $region17: #{tpu_custom_call.1} parent=11 // pred_check
          %p366 = pneg %p175
        $region18: #{tpu_custom_call.1} parent=11 // pred_check_branch
          %368 = sbr.rel (%p366) target = $region20
        $region19: #{tpu_custom_call.1} parent=11 // pred_region
          _
        $region20: #{tpu_custom_call.1} parent=11 // pred_fallthru
          _
        // Predicated region
        $region21: #{tpu_custom_call.1} parent=11 // pred_check
          %p369 = pneg %p196
        $region22: #{tpu_custom_call.1} parent=11 // pred_check_branch
          %371 = sbr.rel (%p369) target = $region24
        $region23: #{tpu_custom_call.1} parent=11 // pred_region
          _
        $region24: #{tpu_custom_call.1} parent=11 // pred_fallthru
          _
        // Predicated region
        $region25: #{tpu_custom_call.1} parent=11 // pred_check
          %p372 = pneg %p217
        $region26: #{tpu_custom_call.1} parent=11 // pred_check_branch
          %374 = sbr.rel (%p372) target = $region28
        $region27: #{tpu_custom_call.1} parent=11 // pred_region
          _
        $region28: #{tpu_custom_call.1} parent=11 // pred_fallthru
          _
        // Predicated region
        $region29: #{tpu_custom_call.1} parent=11 // pred_check
          %p375 = pneg %p238
        $region30: #{tpu_custom_call.1} parent=11 // pred_check_branch
          %377 = sbr.rel (%p375) target = $region32
        $region31: #{tpu_custom_call.1} parent=11 // pred_region
          _
        $region32: #{tpu_custom_call.1} parent=11 // pred_fallthru
          _
        // Predicated region
        $region33: #{tpu_custom_call.1} parent=11 // pred_check
          %p378 = pneg %p259
        $region34: #{tpu_custom_call.1} parent=11 // pred_check_branch
          %380 = sbr.rel (%p378) target = $region36
        $region35: #{tpu_custom_call.1} parent=11 // pred_region
          _
        $region36: #{tpu_custom_call.1} parent=11 // pred_fallthru
          _
        // Predicated region
        $region37: #{tpu_custom_call.1} parent=11 // pred_check
          %p381 = pneg %p280
        $region38: #{tpu_custom_call.1} parent=11 // pred_check_branch
          %383 = sbr.rel (%p381) target = $region40
        $region39: #{tpu_custom_call.1} parent=11 // pred_region
          _
        $region40: #{tpu_custom_call.1} parent=11 // pred_fallthru
          _
        // Predicated region
        $region41: #{tpu_custom_call.1} parent=11 // pred_check
          %p384 = pneg %p301
        $region42: #{tpu_custom_call.1} parent=11 // pred_check_branch
          %386 = sbr.rel (%p384) target = $region44
        $region43: #{tpu_custom_call.1} parent=11 // pred_region
          _
        $region44: #{tpu_custom_call.1} parent=11 // pred_fallthru
          _
        // Predicated region
        $region45: #{tpu_custom_call.1} parent=11 // pred_check
          %p387 = pneg %p322
        $region46: #{tpu_custom_call.1} parent=11 // pred_check_branch
          %389 = sbr.rel (%p387) target = $region48
        $region47: #{tpu_custom_call.1} parent=11 // pred_region
          _
        $region48: #{tpu_custom_call.1} parent=11 // pred_fallthru
          _
      $region12: #{tpu_custom_call.1} parent=5 // pred_fallthru
        _
      %p390 = scmp.lt.s32.totalorder %s29, 2
      // Predicated region
      $region49: #{tpu_custom_call.1} parent=5 // pred_check
        %p391 = pneg %p390
      $region50: #{tpu_custom_call.1} parent=5 // pred_check_branch
        %393 = sbr.rel (%p391) target = $region52
      $region51: #{tpu_custom_call.1} parent=5 // pred_region
        // Predicated region
        $region53: #{tpu_custom_call.1} parent=51 // pred_check
          %p394 = pneg %p49
        $region54: #{tpu_custom_call.1} parent=51 // pred_check_branch
          %396 = sbr.rel (%p394) target = $region56
        $region55: #{tpu_custom_call.1} parent=51 // pred_region
          %p397 = scmp.lt.s32.totalorder %s29, 1
          %s398 = scalar_select %p397, %s29, 1
          %s399 = smul.addr %s398, 4
          %s400 = scalar_lea.vmem %s1, %s399
        $region56: #{tpu_custom_call.1} parent=51 // pred_fallthru
          _
        // Predicated region
        $region57: #{tpu_custom_call.1} parent=51 // pred_check
          %p401 = pneg %p75
        $region58: #{tpu_custom_call.1} parent=51 // pred_check_branch
          %403 = sbr.rel (%p401) target = $region60
        $region59: #{tpu_custom_call.1} parent=51 // pred_region
          %p404 = scmp.lt.s32.totalorder %s29, 1
          %s405 = scalar_select %p404, %s29, 1
          %s406 = smul.addr %s405, 4
          %s407 = scalar_lea.vmem %s2, %s406
        $region60: #{tpu_custom_call.1} parent=51 // pred_fallthru
          _
        // Predicated region
        $region61: #{tpu_custom_call.1} parent=51 // pred_check
          %p408 = pneg %p101
        $region62: #{tpu_custom_call.1} parent=51 // pred_check_branch
          %410 = sbr.rel (%p408) target = $region64
        $region63: #{tpu_custom_call.1} parent=51 // pred_region
          %p411 = scmp.lt.s32.totalorder %s29, 1
          %s412 = scalar_select %p411, %s29, 1
          %s413 = smul.addr %s412, 4
          %s414 = scalar_lea.vmem %s3, %s413
        $region64: #{tpu_custom_call.1} parent=51 // pred_fallthru
          _
        // Predicated region
        $region65: #{tpu_custom_call.1} parent=51 // pred_check
          %p415 = pneg %p127
        $region66: #{tpu_custom_call.1} parent=51 // pred_check_branch
          %417 = sbr.rel (%p415) target = $region68
        $region67: #{tpu_custom_call.1} parent=51 // pred_region
          %p418 = scmp.lt.s32.totalorder %s29, 1
          %s419 = scalar_select %p418, %s29, 1
          %s420 = smul.addr %s419, 16
          %s421 = smul.addr %s420, 4
          %s422 = scalar_lea.vmem %s4, %s421
        $region68: #{tpu_custom_call.1} parent=51 // pred_fallthru
          _
      $region52: #{tpu_custom_call.1} parent=5 // pred_fallthru
        _
      %p423 = scmp.le.s32.totalorder 1, %s29
      %p424 = scmp.lt.s32.totalorder %s29, 3
      %p425 = pnand %p423, %p424
      %p426 = pneg %p425
      // Predicated region
      $region69: #{tpu_custom_call.1} parent=5 // pred_check
        _
      $region70: #{tpu_custom_call.1} parent=5 // pred_check_branch
        %428 = sbr.rel (%p425) target = $region72
      $region71: #{tpu_custom_call.1} parent=5 // pred_region
        %s429 = ssub.s32 %s29, 1
        %p430 = scmp.lt.s32.totalorder %s34, 1
        %s431 = scalar_select %p430, %s34, 1
        %s432 = smul.addr %s431, 4
        %s433 = scalar_lea.vmem %s1, %s432
        %p434 = pneg %p55
        %p435 = pneg %p52
        %p436 = scmp.lt.s32.totalorder %s34, 1
        %s437 = scalar_select %p436, %s34, 1
        %s438 = smul.addr %s437, 4
        %s439 = scalar_lea.vmem %s2, %s438
        %p440 = pneg %p81
        %p441 = pneg %p78
        %p442 = scmp.lt.s32.totalorder %s34, 1
        %s443 = scalar_select %p442, %s34, 1
        %s444 = smul.addr %s443, 4
        %s445 = scalar_lea.vmem %s3, %s444
        %p446 = pneg %p107
        %p447 = pneg %p104
        %p448 = scmp.lt.s32.totalorder %s34, 1
        %s449 = scalar_select %p448, %s34, 1
        %s450 = smul.addr %s449, 16
        %s451 = smul.addr %s450, 4
        %s452 = scalar_lea.vmem %s4, %s451
        %p453 = pneg %p133
        %p454 = pneg %p130
        %p455 = pneg %p154
        %p456 = pneg %p151
        %p457 = pneg %p175
        %p458 = pneg %p172
        %p459 = pneg %p196
        %p460 = pneg %p193
        %p461 = pneg %p217
        %p462 = pneg %p214
        %p463 = pneg %p238
        %p464 = pneg %p235
        %p465 = pneg %p259
        %p466 = pneg %p256
        %p467 = pneg %p280
        %p468 = pneg %p277
        %p469 = pneg %p301
        %p470 = pneg %p298
        %p471 = pneg %p322
        %p472 = pneg %p319
        %p473 = pneg %p348
        %p474 = pneg %p345
        %s475 = sand.u32 %s335, 1
        %s476 = scalar_lea.sflag [#allocation6], %s475
        %s477 = sand.u32 %s335, 1
        %s478 = smul.addr %s477, 8
        %s479 = scalar_lea.vmem [#allocation5], %s478
        %p480 = scmp.lt.s32.totalorder %s34, 1
        %s481 = scalar_select %p480, %s34, 1
        %s482 = smul.addr %s481, 4
        %s483 = scalar_lea.vmem %s1, %s482
        %p484 = scmp.lt.s32.totalorder %s34, 1
        %s485 = scalar_select %p484, %s34, 1
        %s486 = smul.addr %s485, 4
        %s487 = scalar_lea.vmem %s2, %s486
        %p488 = scmp.lt.s32.totalorder %s34, 1
        %s489 = scalar_select %p488, %s34, 1
        %s490 = smul.addr %s489, 4
        %s491 = scalar_lea.vmem %s3, %s490
        %p492 = scmp.lt.s32.totalorder %s34, 1
        %s493 = scalar_select %p492, %s34, 1
        %s494 = smul.addr %s493, 16
        %s495 = smul.addr %s494, 4
        %s496 = scalar_lea.vmem %s4, %s495
        %s498 = sld [smem:[#allocation4 + %s34]]
        %v499 = vld [vmem:[%s483] sm:$0xf]
        %v500 = vld [vmem:[%s487] sm:$0xf]
        %v501 = vld [vmem:[%s491] sm:$0xf]
        %v502 = vld [vmem:[%s496] sm:$0xf]
        %v503 = vld [vmem:[%s496 + $0x4] sm:$0xf]
        %v504 = vld [vmem:[%s496 + $0x8] sm:$0xf]
        %v505 = vld [vmem:[%s496 + $0xc] sm:$0xf]
        %v506 = vld [vmem:[%s496 + $0x10] sm:$0xf]
        %v507 = vld [vmem:[%s496 + $0x14] sm:$0xf]
        %v508 = vld [vmem:[%s496 + $0x18] sm:$0xf]
        %v509 = vld [vmem:[%s496 + $0x1c] sm:$0xf]
        %v510 = vld [vmem:[%s496 + $0x20] sm:$0xf]
        %v511 = vld [vmem:[%s496 + $0x24] sm:$0xf]
        %v512 = vld [vmem:[%s496 + $0x28] sm:$0xf]
        %v513 = vld [vmem:[%s496 + $0x2c] sm:$0xf]
        %v514 = vld [vmem:[%s496 + $0x30] sm:$0xf]
        %v515 = vld [vmem:[%s496 + $0x34] sm:$0xf]
        %v516 = vld [vmem:[%s496 + $0x38] sm:$0xf]
        %v517 = vld [vmem:[%s496 + $0x3c] sm:$0xf]
        %v518 = vld [vmem:[%s5] sm:$0xf]
        %v519 = vld [vmem:[%s5 + $0x4] sm:$0xf]
        %v520 = vld [vmem:[%s5 + $0x8] sm:$0xf]
        %v521 = vld [vmem:[%s5 + $0xc] sm:$0xf]
        %v522 = vld [vmem:[%s8] sm:$0x1]
        %v524 = vlaneseq
        %v525 = vshrl.u32 %v524, 7
        %v526 = vsub.s32 0, %v525
        %v527 = vrot.slane %v522, %v526
        %v533 = vunpack.c.l.b16 %v518
        %v534 = vunpack.c.l.b16 %v519
        %v535 = vunpack.c.l.b16 %v520
        %v536 = vunpack.c.l.b16 %v521
        %v537 = vpack.c.b16 %v534, %v533
        %v538 = vpack.c.b16 %v536, %v535
        %vm541 = vcmask 261120
        %v543 = vsel %vm541, %v499, 0
        %545 = vmatprep.subr.bf16.mxu0 0
        %546 = vmatpush1.bf16.msra.mxu0 %v537
        %547 = vmatprep.subr.bf16.mxu0 0
        %548 = vmatpush1.bf16.msra.mxu0 %v538
        %549 = vmatprep.subr.bf16.mxu0 0
        %550 = vmatpush1.bf16.msra.mxu0 0
        %551 = vmatprep.subr.bf16.mxu0 0
        %552 = vmatpush1.bf16.msra.mxu0 0
        %553 = vmatprep.subr.bf16.mxu0 0
        %554 = vmatpush1.bf16.msra.mxu0 0
        %555 = vmatprep.subr.bf16.mxu0 0
        %556 = vmatpush1.bf16.msra.mxu0 0
        %557 = vmatprep.subr.bf16.mxu0 0
        %558 = vmatpush1.bf16.msra.mxu0 0
        %559 = vmatprep.subr.bf16.mxu0 0
        %560 = vmatpush1.bf16.msra.mxu0 0
        %561 = vmatprep.subr.bf16.mxu0 0
        %562 = vmatpush1.bf16.msra.mxu0 0
        %563 = vmatprep.subr.bf16.mxu0 0
        %564 = vmatpush1.bf16.msra.mxu0 0
        %565 = vmatprep.subr.bf16.mxu0 0
        %566 = vmatpush1.bf16.msra.mxu0 0
        %567 = vmatprep.subr.bf16.mxu0 0
        %568 = vmatpush1.bf16.msra.mxu0 0
        %569 = vmatprep.subr.bf16.mxu0 0
        %570 = vmatpush1.bf16.msra.mxu0 0
        %571 = vmatprep.subr.bf16.mxu0 0
        %572 = vmatpush1.bf16.msra.mxu0 0
        %573 = vmatprep.subr.bf16.mxu0 0
        %574 = vmatpush1.bf16.msra.mxu0 0
        %575 = vmatprep.subr.bf16.mxu0 0
        %576 = vmatpush1.bf16.msra.mxu0 0
        %577 = vmatprep.mubr.bf16.mxu0 0
        %578 = vmatmul.mubr.bf16.gmra.mrb[0].mxu0 %v543
        %v579 = vpop.f32.mrb[0].mxu0
        %v580 = vadd.f32 %v527, %v579
        %v581 = vpop.f32.mrb[0].mxu0
        %v582 = vpop.f32.mrb[0].mxu0
        %v583 = vpop.f32.mrb[0].mxu0
        %584 = vdwg.mxu0
        %v585 = vld [vmem:[%s6] sm:$0xf]
        %v586 = vld [vmem:[%s6 + $0x4] sm:$0xf]
        %v587 = vld [vmem:[%s6 + $0x8] sm:$0xf]
        %v588 = vld [vmem:[%s6 + $0xc] sm:$0xf]
        %v589 = vld [vmem:[%s9] sm:$0x1]
        %v591 = vlaneseq
        %v592 = vshrl.u32 %v591, 7
        %v593 = vsub.s32 0, %v592
        %v594 = vrot.slane %v589, %v593
        %v600 = vunpack.c.l.b16 %v585
        %v601 = vunpack.c.l.b16 %v586
        %v602 = vunpack.c.l.b16 %v587
        %v603 = vunpack.c.l.b16 %v588
        %v604 = vpack.c.b16 %v601, %v600
        %v605 = vpack.c.b16 %v603, %v602
        %v609 = vsel %vm541, %v500, 0
        %611 = vmatprep.subr.bf16.mxu0 0
        %612 = vmatpush1.bf16.msra.mxu0 %v604
        %613 = vmatprep.subr.bf16.mxu0 0
        %614 = vmatpush1.bf16.msra.mxu0 %v605
        %615 = vmatprep.subr.bf16.mxu0 0
        %616 = vmatpush1.bf16.msra.mxu0 0
        %617 = vmatprep.subr.bf16.mxu0 0
        %618 = vmatpush1.bf16.msra.mxu0 0
        %619 = vmatprep.subr.bf16.mxu0 0
        %620 = vmatpush1.bf16.msra.mxu0 0
        %621 = vmatprep.subr.bf16.mxu0 0
        %622 = vmatpush1.bf16.msra.mxu0 0
        %623 = vmatprep.subr.bf16.mxu0 0
        %624 = vmatpush1.bf16.msra.mxu0 0
        %625 = vmatprep.subr.bf16.mxu0 0
        %626 = vmatpush1.bf16.msra.mxu0 0
        %627 = vmatprep.subr.bf16.mxu0 0
        %628 = vmatpush1.bf16.msra.mxu0 0
        %629 = vmatprep.subr.bf16.mxu0 0
        %630 = vmatpush1.bf16.msra.mxu0 0
        %631 = vmatprep.subr.bf16.mxu0 0
        %632 = vmatpush1.bf16.msra.mxu0 0
        %633 = vmatprep.subr.bf16.mxu0 0
        %634 = vmatpush1.bf16.msra.mxu0 0
        %635 = vmatprep.subr.bf16.mxu0 0
        %636 = vmatpush1.bf16.msra.mxu0 0
        %637 = vmatprep.subr.bf16.mxu0 0
        %638 = vmatpush1.bf16.msra.mxu0 0
        %639 = vmatprep.subr.bf16.mxu0 0
        %640 = vmatpush1.bf16.msra.mxu0 0
        %641 = vmatprep.subr.bf16.mxu0 0
        %642 = vmatpush1.bf16.msra.mxu0 0
        %643 = vmatprep.mubr.bf16.mxu0 0
        %644 = vmatmul.mubr.bf16.gmra.mrb[0].mxu0 %v609
        %v645 = vpop.f32.mrb[0].mxu0
        %v646 = vadd.f32 %v594, %v645
        %v647 = vpop.f32.mrb[0].mxu0
        %v648 = vpop.f32.mrb[0].mxu0
        %v649 = vpop.f32.mrb[0].mxu0
        %650 = vdwg.mxu0
        %v651 = vld [vmem:[%s7] sm:$0xf]
        %v652 = vld [vmem:[%s7 + $0x4] sm:$0xf]
        %v653 = vld [vmem:[%s7 + $0x8] sm:$0xf]
        %v654 = vld [vmem:[%s7 + $0xc] sm:$0xf]
        %v655 = vld [vmem:[%s10] sm:$0x1]
        %v657 = vlaneseq
        %v658 = vshrl.u32 %v657, 7
        %v659 = vsub.s32 0, %v658
        %v660 = vrot.slane %v655, %v659
        %v666 = vunpack.c.l.b16 %v651
        %v667 = vunpack.c.l.b16 %v652
        %v668 = vunpack.c.l.b16 %v653
        %v669 = vunpack.c.l.b16 %v654
        %v670 = vpack.c.b16 %v667, %v666
        %v671 = vpack.c.b16 %v669, %v668
        %v675 = vsel %vm541, %v501, 0
        %677 = vmatprep.subr.bf16.mxu0 0
        %678 = vmatpush1.bf16.msra.mxu0 %v670
        %679 = vmatprep.subr.bf16.mxu0 0
        %680 = vmatpush1.bf16.msra.mxu0 %v671
        %681 = vmatprep.subr.bf16.mxu0 0
        %682 = vmatpush1.bf16.msra.mxu0 0
        %683 = vmatprep.subr.bf16.mxu0 0
        %684 = vmatpush1.bf16.msra.mxu0 0
        %685 = vmatprep.subr.bf16.mxu0 0
        %686 = vmatpush1.bf16.msra.mxu0 0
        %687 = vmatprep.subr.bf16.mxu0 0
        %688 = vmatpush1.bf16.msra.mxu0 0
        %689 = vmatprep.subr.bf16.mxu0 0
        %690 = vmatpush1.bf16.msra.mxu0 0
        %691 = vmatprep.subr.bf16.mxu0 0
        %692 = vmatpush1.bf16.msra.mxu0 0
        %693 = vmatprep.subr.bf16.mxu0 0
        %694 = vmatpush1.bf16.msra.mxu0 0
        %695 = vmatprep.subr.bf16.mxu0 0
        %696 = vmatpush1.bf16.msra.mxu0 0
        %697 = vmatprep.subr.bf16.mxu0 0
        %698 = vmatpush1.bf16.msra.mxu0 0
        %699 = vmatprep.subr.bf16.mxu0 0
        %700 = vmatpush1.bf16.msra.mxu0 0
        %701 = vmatprep.subr.bf16.mxu0 0
        %702 = vmatpush1.bf16.msra.mxu0 0
        %703 = vmatprep.subr.bf16.mxu0 0
        %704 = vmatpush1.bf16.msra.mxu0 0
        %705 = vmatprep.subr.bf16.mxu0 0
        %706 = vmatpush1.bf16.msra.mxu0 0
        %707 = vmatprep.subr.bf16.mxu0 0
        %708 = vmatpush1.bf16.msra.mxu0 0
        %709 = vmatprep.mubr.bf16.mxu0 0
        %710 = vmatmul.mubr.bf16.gmra.mrb[0].mxu0 %v675
        %v711 = vpop.f32.mrb[0].mxu0
        %v712 = vadd.f32 %v660, %v711
        %v713 = vpop.f32.mrb[0].mxu0
        %v714 = vpop.f32.mrb[0].mxu0
        %v715 = vpop.f32.mrb[0].mxu0
        %716 = vdwg.mxu0
        %v717 = vpack.c.bf16 %v580, %v580
        %v718 = vpack.c.bf16 %v712, %v712
        %v719 = vpack.c.bf16 %v646, %v646
        %v736 = vunpack.c.l.b16 %v502
        %v737 = vunpack.c.l.b16 %v503
        %v738 = vunpack.c.l.b16 %v504
        %v739 = vunpack.c.l.b16 %v505
        %v740 = vunpack.c.l.b16 %v506
        %v741 = vunpack.c.l.b16 %v507
        %v742 = vunpack.c.l.b16 %v508
        %v743 = vunpack.c.l.b16 %v509
        %v744 = vunpack.c.l.b16 %v510
        %v745 = vunpack.c.l.b16 %v511
        %v746 = vunpack.c.l.b16 %v512
        %v747 = vunpack.c.l.b16 %v513
        %v748 = vunpack.c.l.b16 %v514
        %v749 = vunpack.c.l.b16 %v515
        %v750 = vunpack.c.l.b16 %v516
        %v751 = vunpack.c.l.b16 %v517
        %v752 = vpack.c.b16 %v737, %v736
        %v753 = vpack.c.b16 %v739, %v738
        %v754 = vpack.c.b16 %v741, %v740
        %v755 = vpack.c.b16 %v743, %v742
        %v756 = vpack.c.b16 %v745, %v744
        %v757 = vpack.c.b16 %v747, %v746
        %v758 = vpack.c.b16 %v749, %v748
        %v759 = vpack.c.b16 %v751, %v750
        %v760 = vld [vmem:[%s11] sm:$0x1]
        %v761 = vlaneseq
        %v762 = vand.u32 %v761, 127
        %v763 = vstv %s498
        %vm764 = vcmp.ge.s32.totalorder %v762, %v763
        %v765 = vadd.s32 %v762, 128
        %vm766 = vcmp.lt.s32.totalorder %v762, 128
        %vm767 = vcmp.lt.s32.totalorder %v765, 128
        %vm768 = vcmask 64512
        %v770 = vsel %vm768, %v760, 0
        %v773 = vsel %vm768, %v752, 0
        %v776 = vsel %vm768, %v753, 0
        %v779 = vsel %vm768, %v754, 0
        %v782 = vsel %vm768, %v755, 0
        %v785 = vsel %vm768, %v756, 0
        %v788 = vsel %vm768, %v757, 0
        %v791 = vsel %vm768, %v758, 0
        %v794 = vsel %vm768, %v759, 0
        %v797 = vsel %vm768, %v719, 0
        %799 = vmatprep.subr.bf16.mxu0 0
        %800 = vmatpush1.bf16.xpose.msra.mxu0 %v773
        %801 = vmatprep.subr.bf16.mxu0 0
        %802 = vmatpush1.bf16.xpose.msra.mxu0 %v776
        %803 = vmatprep.subr.bf16.mxu0 0
        %804 = vmatpush1.bf16.xpose.msra.mxu0 %v779
        %805 = vmatprep.subr.bf16.mxu0 0
        %806 = vmatpush1.bf16.xpose.msra.mxu0 %v782
        %807 = vmatprep.subr.bf16.mxu0 0
        %808 = vmatpush1.bf16.xpose.msra.mxu0 %v785
        %809 = vmatprep.subr.bf16.mxu0 0
        %810 = vmatpush1.bf16.xpose.msra.mxu0 %v788
        %811 = vmatprep.subr.bf16.mxu0 0
        %812 = vmatpush1.bf16.xpose.msra.mxu0 %v791
        %813 = vmatprep.subr.bf16.mxu0 0
        %814 = vmatpush1.bf16.xpose.msra.mxu0 %v794
        %815 = vmatprep.subr.bf16.mxu0 0
        %816 = vmatpush1.bf16.xpose.msra.mxu0 %v797
        %817 = vmatprep.subr.bf16.mxu0 0
        %818 = vmatpush1.bf16.xpose.msra.mxu0 0
        %819 = vmatprep.subr.bf16.mxu0 0
        %820 = vmatpush1.bf16.xpose.msra.mxu0 0
        %821 = vmatprep.subr.bf16.mxu0 0
        %822 = vmatpush1.bf16.xpose.msra.mxu0 0
        %823 = vmatprep.subr.bf16.mxu0 0
        %824 = vmatpush1.bf16.xpose.msra.mxu0 0
        %825 = vmatprep.subr.bf16.mxu0 0
        %826 = vmatpush1.bf16.xpose.msra.mxu0 0
        %827 = vmatprep.subr.bf16.mxu0 0
        %828 = vmatpush1.bf16.xpose.msra.mxu0 0
        %829 = vmatprep.subr.bf16.mxu0 0
        %830 = vmatpush1.bf16.xpose.msra.mxu0 0
        %831 = vmatprep.mubr.bf16.mxu0 0
        %832 = vmatmul.mubr.bf16.gmra.mrb[0].mxu0 %v770
        %v833 = vpop.f32.mrb[0].mxu0
        %v834 = vadd.f32 0.0, %v833
        %v835 = vpop.f32.mrb[0].mxu0
        %v836 = vadd.f32 0.0, %v835
        %v837 = vpop.f32.mrb[0].mxu0
        %v838 = vpop.f32.mrb[0].mxu0
        %839 = vdwg.mxu0
        %v842 = vrot.slane %v834, 1
        %v843 = vrot.slane %v836, 1
        %v846 = vsel %vm766, %v834, %v842
        %v847 = vsel %vm767, %v836, %v843
        %v848 = vlaneseq
        %v849 = vshrl.u32 %v848, 7
        %v850 = vsub.s32 0, %v849
        %v851 = vrot.slane %v846, %v850
        %v852 = vlaneseq
        %v853 = vshrl.u32 %v852, 7
        %v854 = vsub.s32 0, %v853
        %v855 = vrot.slane %v847, %v854
        %v857 = vsel %vm768, %v717, 0
        %859 = vmatprep.subr.bf16.mxu0 0
        %860 = vmatpush1.bf16.xpose.msra.mxu0 %v773
        %861 = vmatprep.subr.bf16.mxu0 0
        %862 = vmatpush1.bf16.xpose.msra.mxu0 %v776
        %863 = vmatprep.subr.bf16.mxu0 0
        %864 = vmatpush1.bf16.xpose.msra.mxu0 %v779
        %865 = vmatprep.subr.bf16.mxu0 0
        %866 = vmatpush1.bf16.xpose.msra.mxu0 %v782
        %867 = vmatprep.subr.bf16.mxu0 0
        %868 = vmatpush1.bf16.xpose.msra.mxu0 %v785
        %869 = vmatprep.subr.bf16.mxu0 0
        %870 = vmatpush1.bf16.xpose.msra.mxu0 %v788
        %871 = vmatprep.subr.bf16.mxu0 0
        %872 = vmatpush1.bf16.xpose.msra.mxu0 %v791
        %873 = vmatprep.subr.bf16.mxu0 0
        %874 = vmatpush1.bf16.xpose.msra.mxu0 %v794
        %875 = vmatprep.subr.bf16.mxu0 0
        %876 = vmatpush1.bf16.xpose.msra.mxu0 %v797
        %877 = vmatprep.subr.bf16.mxu0 0
        %878 = vmatpush1.bf16.xpose.msra.mxu0 0
        %879 = vmatprep.subr.bf16.mxu0 0
        %880 = vmatpush1.bf16.xpose.msra.mxu0 0
        %881 = vmatprep.subr.bf16.mxu0 0
        %882 = vmatpush1.bf16.xpose.msra.mxu0 0
        %883 = vmatprep.subr.bf16.mxu0 0
        %884 = vmatpush1.bf16.xpose.msra.mxu0 0
        %885 = vmatprep.subr.bf16.mxu0 0
        %886 = vmatpush1.bf16.xpose.msra.mxu0 0
        %887 = vmatprep.subr.bf16.mxu0 0
        %888 = vmatpush1.bf16.xpose.msra.mxu0 0
        %889 = vmatprep.subr.bf16.mxu0 0
        %890 = vmatpush1.bf16.xpose.msra.mxu0 0
        %891 = vmatprep.mubr.bf16.mxu0 0
        %892 = vmatmul.mubr.bf16.gmra.mrb[0].mxu0 %v857
        %v893 = vpop.f32.mrb[0].mxu0
        %v894 = vadd.f32 %v851, %v893
        %v895 = vpop.f32.mrb[0].mxu0
        %v896 = vadd.f32 %v855, %v895
        %v897 = vpop.f32.mrb[0].mxu0
        %v898 = vpop.f32.mrb[0].mxu0
        %899 = vdwg.mxu0
        %901 = vrot.lane.b32.xlu0 %v894, 121
        %v902 = vpop.permute.xlu0 %901
        %v904 = vlaneseq
        %v905 = vshrl.u32 %v904, 7
        %v906 = vand.u32 %v905, 1
        %vm907 = vcmp.ne.s32.totalorder %v906, 0
        %909 = vrot.lane.b32.xlu0 %v902, 1
        %v910 = vpop.permute.xlu0 %909
        %v912 = vsel %vm907, %v910, %v902
        %v913 = vand.u32 %v905, 2
        %vm914 = vcmp.ne.s32.totalorder %v913, 0
        %916 = vrot.lane.b32.xlu0 %v912, 2
        %v917 = vpop.permute.xlu0 %916
        %v919 = vsel %vm914, %v917, %v912
        %v920 = vand.u32 %v905, 4
        %vm921 = vcmp.ne.s32.totalorder %v920, 0
        %923 = vrot.lane.b32.xlu0 %v919, 4
        %v924 = vpop.permute.xlu0 %923
        %v926 = vsel %vm921, %v924, %v919
        %v927 = vadd.f32 %v896, %v926
        %v928 = vmul.f32 %v927, 0.35355338
        %v929 = vsel %vm764, -1e+09, %v928
        %v930 = vsel %vm768, %v929, -inf
        %931 = vmax.xlane.f32.xlu0 %v930
        %v932 = vpop.xlane.xlu0 %931
        %v933 = vsub.f32 %v929, %v932
        %v934 = vmul.f32 %v933, 1.442695
        %v935 = vpow.pop %v934
        %v936 = vsel %vm768, %v935, 0.0
        %937 = vadd.xlane.f32.xlu0 %v936
        %v938 = vpop.xlane.xlu0 %937
        %v939 = vrcp.pop %v938
        %v940 = vmul.f32 %v935, %v939
        %v941 = vpack.c.bf16 %v940, %v940
        %v943 = vsel %vm768, %v941, 0
        %vm945 = vcmask 1043456
        %v947 = vsel %vm945, %v718, 0
        %949 = vmatprep.subr.bf16.mxu0 0
        %950 = vmatpush1.bf16.msra.mxu0 %v947
        %951 = vmatprep.subr.bf16.mxu0 0
        %952 = vmatpush1.bf16.msra.mxu0 0
        %953 = vmatprep.subr.bf16.mxu0 0
        %954 = vmatpush1.bf16.msra.mxu0 0
        %955 = vmatprep.subr.bf16.mxu0 0
        %956 = vmatpush1.bf16.msra.mxu0 0
        %957 = vmatprep.subr.bf16.mxu0 0
        %958 = vmatpush1.bf16.msra.mxu0 0
        %959 = vmatprep.subr.bf16.mxu0 0
        %960 = vmatpush1.bf16.msra.mxu0 0
        %961 = vmatprep.subr.bf16.mxu0 0
        %962 = vmatpush1.bf16.msra.mxu0 0
        %963 = vmatprep.subr.bf16.mxu0 0
        %964 = vmatpush1.bf16.msra.mxu0 0
        %965 = vmatprep.subr.bf16.mxu0 0
        %966 = vmatpush1.bf16.msra.mxu0 0
        %967 = vmatprep.subr.bf16.mxu0 0
        %968 = vmatpush1.bf16.msra.mxu0 0
        %969 = vmatprep.subr.bf16.mxu0 0
        %970 = vmatpush1.bf16.msra.mxu0 0
        %971 = vmatprep.subr.bf16.mxu0 0
        %972 = vmatpush1.bf16.msra.mxu0 0
        %973 = vmatprep.subr.bf16.mxu0 0
        %974 = vmatpush1.bf16.msra.mxu0 0
        %975 = vmatprep.subr.bf16.mxu0 0
        %976 = vmatpush1.bf16.msra.mxu0 0
        %977 = vmatprep.subr.bf16.mxu0 0
        %978 = vmatpush1.bf16.msra.mxu0 0
        %979 = vmatprep.subr.bf16.mxu0 0
        %980 = vmatpush1.bf16.msra.mxu0 0
        %981 = vmatprep.mubr.bf16.mxu0 0
        %982 = vmatmul.mubr.bf16.gmra.mrb[0].mxu0 %v943
        %v983 = vpop.f32.mrb[0].mxu0
        %v984 = vadd.f32 0.0, %v983
        %v985 = vpop.f32.mrb[0].mxu0
        %v986 = vpop.f32.mrb[0].mxu0
        %v987 = vpop.f32.mrb[0].mxu0
        %988 = vdwg.mxu0
        %v989 = vpack.c.bf16 %v984, %v984
        %vm990 = vcmask 60416
        %991 = vst.msk [vmem:[#allocation2] sm:$0xf] %vm990, %v989
        %v994 = vunpack.c.l.s4 1966171168
        %v995 = vunpack.c.0.s8 %v994
        %v996 = vlaneseq
        %v997 = vshrl.u32 %v996, 7
        %v998 = vsub.s32 %v995, %v997
        %v999 = vrot.slane %v760, %v998
        %v1001 = vunpack.c.l.s4 1966171168
        %v1002 = vunpack.c.0.s8 %v1001
        %v1003 = vlaneseq
        %v1004 = vshrl.u32 %v1003, 7
        %v1005 = vsub.s32 %v1002, %v1004
        %v1006 = vrot.slane %v999, %v1005
        %1007 = vrot.lane.b32.xlu0 %v1006, 120
        %v1008 = vpop.permute.xlu0 %1007
        %1010 = vrot.lane.b32.xlu0 %v752, 120
        %v1011 = vpop.permute.xlu0 %1010
        %1012 = vrot.lane.b32.xlu0 %v753, 120
        %v1013 = vpop.permute.xlu0 %1012
        %1014 = vrot.lane.b32.xlu0 %v754, 120
        %v1015 = vpop.permute.xlu0 %1014
        %1016 = vrot.lane.b32.xlu0 %v755, 120
        %v1017 = vpop.permute.xlu0 %1016
        %1018 = vrot.lane.b32.xlu0 %v756, 120
        %v1019 = vpop.permute.xlu0 %1018
        %1020 = vrot.lane.b32.xlu0 %v757, 120
        %v1021 = vpop.permute.xlu0 %1020
        %1022 = vrot.lane.b32.xlu0 %v758, 120
        %v1023 = vpop.permute.xlu0 %1022
        %1024 = vrot.lane.b32.xlu0 %v759, 120
        %v1025 = vpop.permute.xlu0 %1024
        %1026 = vrot.lane.b32.xlu0 %v719, 120
        %v1027 = vpop.permute.xlu0 %1026
        %v1029 = vsel %vm768, %v1008, 0
        %v1032 = vsel %vm768, %v1011, 0
        %v1035 = vsel %vm768, %v1013, 0
        %v1038 = vsel %vm768, %v1015, 0
        %v1041 = vsel %vm768, %v1017, 0
        %v1044 = vsel %vm768, %v1019, 0
        %v1047 = vsel %vm768, %v1021, 0
        %v1050 = vsel %vm768, %v1023, 0
        %v1053 = vsel %vm768, %v1025, 0
        %v1056 = vsel %vm768, %v1027, 0
        %1058 = vmatprep.subr.bf16.mxu0 0
        %1059 = vmatpush1.bf16.xpose.msra.mxu0 %v1032
        %1060 = vmatprep.subr.bf16.mxu0 0
        %1061 = vmatpush1.bf16.xpose.msra.mxu0 %v1035
        %1062 = vmatprep.subr.bf16.mxu0 0
        %1063 = vmatpush1.bf16.xpose.msra.mxu0 %v1038
        %1064 = vmatprep.subr.bf16.mxu0 0
        %1065 = vmatpush1.bf16.xpose.msra.mxu0 %v1041
        %1066 = vmatprep.subr.bf16.mxu0 0
        %1067 = vmatpush1.bf16.xpose.msra.mxu0 %v1044
        %1068 = vmatprep.subr.bf16.mxu0 0
        %1069 = vmatpush1.bf16.xpose.msra.mxu0 %v1047
        %1070 = vmatprep.subr.bf16.mxu0 0
        %1071 = vmatpush1.bf16.xpose.msra.mxu0 %v1050
        %1072 = vmatprep.subr.bf16.mxu0 0
        %1073 = vmatpush1.bf16.xpose.msra.mxu0 %v1053
        %1074 = vmatprep.subr.bf16.mxu0 0
        %1075 = vmatpush1.bf16.xpose.msra.mxu0 %v1056
        %1076 = vmatprep.subr.bf16.mxu0 0
        %1077 = vmatpush1.bf16.xpose.msra.mxu0 0
        %1078 = vmatprep.subr.bf16.mxu0 0
        %1079 = vmatpush1.bf16.xpose.msra.mxu0 0
        %1080 = vmatprep.subr.bf16.mxu0 0
        %1081 = vmatpush1.bf16.xpose.msra.mxu0 0
        %1082 = vmatprep.subr.bf16.mxu0 0
        %1083 = vmatpush1.bf16.xpose.msra.mxu0 0
        %1084 = vmatprep.subr.bf16.mxu0 0
        %1085 = vmatpush1.bf16.xpose.msra.mxu0 0
        %1086 = vmatprep.subr.bf16.mxu0 0
        %1087 = vmatpush1.bf16.xpose.msra.mxu0 0
        %1088 = vmatprep.subr.bf16.mxu0 0
        %1089 = vmatpush1.bf16.xpose.msra.mxu0 0
        %1090 = vmatprep.mubr.bf16.mxu0 0
        %1091 = vmatmul.mubr.bf16.gmra.mrb[0].mxu0 %v1029
        %v1092 = vpop.f32.mrb[0].mxu0
        %v1093 = vadd.f32 0.0, %v1092
        %v1094 = vpop.f32.mrb[0].mxu0
        %v1095 = vadd.f32 0.0, %v1094
        %v1096 = vpop.f32.mrb[0].mxu0
        %v1097 = vpop.f32.mrb[0].mxu0
        %1098 = vdwg.mxu0
        %v1101 = vrot.slane %v1093, 1
        %v1102 = vrot.slane %v1095, 1
        %v1105 = vsel %vm766, %v1093, %v1101
        %v1106 = vsel %vm767, %v1095, %v1102
        %v1107 = vlaneseq
        %v1108 = vshrl.u32 %v1107, 7
        %v1109 = vsub.s32 0, %v1108
        %v1110 = vrot.slane %v1105, %v1109
        %v1111 = vlaneseq
        %v1112 = vshrl.u32 %v1111, 7
        %v1113 = vsub.s32 0, %v1112
        %v1114 = vrot.slane %v1106, %v1113
        %1116 = vrot.lane.b32.xlu0 %v717, 120
        %v1117 = vpop.permute.xlu0 %1116
        %v1119 = vsel %vm768, %v1117, 0
        %1121 = vmatprep.subr.bf16.mxu0 0
        %1122 = vmatpush1.bf16.xpose.msra.mxu0 %v1032
        %1123 = vmatprep.subr.bf16.mxu0 0
        %1124 = vmatpush1.bf16.xpose.msra.mxu0 %v1035
        %1125 = vmatprep.subr.bf16.mxu0 0
        %1126 = vmatpush1.bf16.xpose.msra.mxu0 %v1038
        %1127 = vmatprep.subr.bf16.mxu0 0
        %1128 = vmatpush1.bf16.xpose.msra.mxu0 %v1041
        %1129 = vmatprep.subr.bf16.mxu0 0
        %1130 = vmatpush1.bf16.xpose.msra.mxu0 %v1044
        %1131 = vmatprep.subr.bf16.mxu0 0
        %1132 = vmatpush1.bf16.xpose.msra.mxu0 %v1047
        %1133 = vmatprep.subr.bf16.mxu0 0
        %1134 = vmatpush1.bf16.xpose.msra.mxu0 %v1050
        %1135 = vmatprep.subr.bf16.mxu0 0
        %1136 = vmatpush1.bf16.xpose.msra.mxu0 %v1053
        %1137 = vmatprep.subr.bf16.mxu0 0
        %1138 = vmatpush1.bf16.xpose.msra.mxu0 %v1056
        %1139 = vmatprep.subr.bf16.mxu0 0
        %1140 = vmatpush1.bf16.xpose.msra.mxu0 0
        %1141 = vmatprep.subr.bf16.mxu0 0
        %1142 = vmatpush1.bf16.xpose.msra.mxu0 0
        %1143 = vmatprep.subr.bf16.mxu0 0
        %1144 = vmatpush1.bf16.xpose.msra.mxu0 0
        %1145 = vmatprep.subr.bf16.mxu0 0
        %1146 = vmatpush1.bf16.xpose.msra.mxu0 0
        %1147 = vmatprep.subr.bf16.mxu0 0
        %1148 = vmatpush1.bf16.xpose.msra.mxu0 0
        %1149 = vmatprep.subr.bf16.mxu0 0
        %1150 = vmatpush1.bf16.xpose.msra.mxu0 0
        %1151 = vmatprep.subr.bf16.mxu0 0
        %1152 = vmatpush1.bf16.xpose.msra.mxu0 0
        %1153 = vmatprep.mubr.bf16.mxu0 0
        %1154 = vmatmul.mubr.bf16.gmra.mrb[0].mxu0 %v1119
        %v1155 = vpop.f32.mrb[0].mxu0
        %v1156 = vadd.f32 %v1110, %v1155
        %v1157 = vpop.f32.mrb[0].mxu0
        %v1158 = vadd.f32 %v1114, %v1157
        %v1159 = vpop.f32.mrb[0].mxu0
        %v1160 = vpop.f32.mrb[0].mxu0
        %1161 = vdwg.mxu0
        %1163 = vrot.lane.b32.xlu0 %v1156, 121
        %v1164 = vpop.permute.xlu0 %1163
        %1167 = vrot.lane.b32.xlu0 %v1164, 1
        %v1168 = vpop.permute.xlu0 %1167
        %v1170 = vsel %vm907, %v1168, %v1164
        %1172 = vrot.lane.b32.xlu0 %v1170, 2
        %v1173 = vpop.permute.xlu0 %1172
        %v1175 = vsel %vm914, %v1173, %v1170
        %1177 = vrot.lane.b32.xlu0 %v1175, 4
        %v1178 = vpop.permute.xlu0 %1177
        %v1180 = vsel %vm921, %v1178, %v1175
        %v1181 = vadd.f32 %v1158, %v1180
        %v1182 = vmul.f32 %v1181, 0.35355338
        %v1183 = vsel %vm764, -1e+09, %v1182
        %v1184 = vsel %vm768, %v1183, -inf
        %1185 = vmax.xlane.f32.xlu0 %v1184
        %v1186 = vpop.xlane.xlu0 %1185
        %v1187 = vsub.f32 %v1183, %v1186
        %v1188 = vmul.f32 %v1187, 1.442695
        %v1189 = vpow.pop %v1188
        %v1190 = vsel %vm768, %v1189, 0.0
        %1191 = vadd.xlane.f32.xlu0 %v1190
        %v1192 = vpop.xlane.xlu0 %1191
        %v1193 = vrcp.pop %v1192
        %v1194 = vmul.f32 %v1189, %v1193
        %v1195 = vpack.c.bf16 %v1194, %v1194
        %1197 = vrot.lane.b32.xlu0 %v718, 120
        %v1198 = vpop.permute.xlu0 %1197
        %v1200 = vsel %vm768, %v1195, 0
        %v1203 = vsel %vm945, %v1198, 0
        %1205 = vmatprep.subr.bf16.mxu0 0
        %1206 = vmatpush1.bf16.msra.mxu0 %v1203
        %1207 = vmatprep.subr.bf16.mxu0 0
        %1208 = vmatpush1.bf16.msra.mxu0 0
        %1209 = vmatprep.subr.bf16.mxu0 0
        %1210 = vmatpush1.bf16.msra.mxu0 0
        %1211 = vmatprep.subr.bf16.mxu0 0
        %1212 = vmatpush1.bf16.msra.mxu0 0
        %1213 = vmatprep.subr.bf16.mxu0 0
        %1214 = vmatpush1.bf16.msra.mxu0 0
        %1215 = vmatprep.subr.bf16.mxu0 0
        %1216 = vmatpush1.bf16.msra.mxu0 0
        %1217 = vmatprep.subr.bf16.mxu0 0
        %1218 = vmatpush1.bf16.msra.mxu0 0
        %1219 = vmatprep.subr.bf16.mxu0 0
        %1220 = vmatpush1.bf16.msra.mxu0 0
        %1221 = vmatprep.subr.bf16.mxu0 0
        %1222 = vmatpush1.bf16.msra.mxu0 0
        %1223 = vmatprep.subr.bf16.mxu0 0
        %1224 = vmatpush1.bf16.msra.mxu0 0
        %1225 = vmatprep.subr.bf16.mxu0 0
        %1226 = vmatpush1.bf16.msra.mxu0 0
        %1227 = vmatprep.subr.bf16.mxu0 0
        %1228 = vmatpush1.bf16.msra.mxu0 0
        %1229 = vmatprep.subr.bf16.mxu0 0
        %1230 = vmatpush1.bf16.msra.mxu0 0
        %1231 = vmatprep.subr.bf16.mxu0 0
        %1232 = vmatpush1.bf16.msra.mxu0 0
        %1233 = vmatprep.subr.bf16.mxu0 0
        %1234 = vmatpush1.bf16.msra.mxu0 0
        %1235 = vmatprep.subr.bf16.mxu0 0
        %1236 = vmatpush1.bf16.msra.mxu0 0
        %1237 = vmatprep.mubr.bf16.mxu0 0
        %1238 = vmatmul.mubr.bf16.gmra.mrb[0].mxu0 %v1200
        %v1239 = vpop.f32.mrb[0].mxu0
        %v1240 = vadd.f32 0.0, %v1239
        %v1241 = vpop.f32.mrb[0].mxu0
        %v1242 = vpop.f32.mrb[0].mxu0
        %v1243 = vpop.f32.mrb[0].mxu0
        %1244 = vdwg.mxu0
        %v1245 = vpack.c.bf16 %v1240, %v1240
        %v1247 = vunpack.c.l.b16 %v1245
        %v1248 = vpack.c.b16 %v1247, %v1247
        %1249 = vrot.lane.b32.xlu0 %v1248, 8
        %v1250 = vpop.permute.xlu0 %1249
        %vm1252 = vcmask 126016
        %1253 = vst.msk [vmem:[#allocation2] sm:$0xf] %vm1252, %v1250
        %1254 = vrot.lane.b32.xlu0 %v1006, 112
        %v1255 = vpop.permute.xlu0 %1254
        %1256 = vrot.lane.b32.xlu0 %v752, 112
        %v1257 = vpop.permute.xlu0 %1256
        %1258 = vrot.lane.b32.xlu0 %v753, 112
        %v1259 = vpop.permute.xlu0 %1258
        %1260 = vrot.lane.b32.xlu0 %v754, 112
        %v1261 = vpop.permute.xlu0 %1260
        %1262 = vrot.lane.b32.xlu0 %v755, 112
        %v1263 = vpop.permute.xlu0 %1262
        %1264 = vrot.lane.b32.xlu0 %v756, 112
        %v1265 = vpop.permute.xlu0 %1264
        %1266 = vrot.lane.b32.xlu0 %v757, 112
        %v1267 = vpop.permute.xlu0 %1266
        %1268 = vrot.lane.b32.xlu0 %v758, 112
        %v1269 = vpop.permute.xlu0 %1268
        %1270 = vrot.lane.b32.xlu0 %v759, 112
        %v1271 = vpop.permute.xlu0 %1270
        %1272 = vrot.lane.b32.xlu0 %v719, 112
        %v1273 = vpop.permute.xlu0 %1272
        %v1275 = vsel %vm768, %v1255, 0
        %v1278 = vsel %vm768, %v1257, 0
        %v1281 = vsel %vm768, %v1259, 0
        %v1284 = vsel %vm768, %v1261, 0
        %v1287 = vsel %vm768, %v1263, 0
        %v1290 = vsel %vm768, %v1265, 0
        %v1293 = vsel %vm768, %v1267, 0
        %v1296 = vsel %vm768, %v1269, 0
        %v1299 = vsel %vm768, %v1271, 0
        %v1302 = vsel %vm768, %v1273, 0
        %1304 = vmatprep.subr.bf16.mxu0 0
        %1305 = vmatpush1.bf16.xpose.msra.mxu0 %v1278
        %1306 = vmatprep.subr.bf16.mxu0 0
        %1307 = vmatpush1.bf16.xpose.msra.mxu0 %v1281
        %1308 = vmatprep.subr.bf16.mxu0 0
        %1309 = vmatpush1.bf16.xpose.msra.mxu0 %v1284
        %1310 = vmatprep.subr.bf16.mxu0 0
        %1311 = vmatpush1.bf16.xpose.msra.mxu0 %v1287
        %1312 = vmatprep.subr.bf16.mxu0 0
        %1313 = vmatpush1.bf16.xpose.msra.mxu0 %v1290
        %1314 = vmatprep.subr.bf16.mxu0 0
        %1315 = vmatpush1.bf16.xpose.msra.mxu0 %v1293
        %1316 = vmatprep.subr.bf16.mxu0 0
        %1317 = vmatpush1.bf16.xpose.msra.mxu0 %v1296
        %1318 = vmatprep.subr.bf16.mxu0 0
        %1319 = vmatpush1.bf16.xpose.msra.mxu0 %v1299
        %1320 = vmatprep.subr.bf16.mxu0 0
        %1321 = vmatpush1.bf16.xpose.msra.mxu0 %v1302
        %1322 = vmatprep.subr.bf16.mxu0 0
        %1323 = vmatpush1.bf16.xpose.msra.mxu0 0
        %1324 = vmatprep.subr.bf16.mxu0 0
        %1325 = vmatpush1.bf16.xpose.msra.mxu0 0
        %1326 = vmatprep.subr.bf16.mxu0 0
        %1327 = vmatpush1.bf16.xpose.msra.mxu0 0
        %1328 = vmatprep.subr.bf16.mxu0 0
        %1329 = vmatpush1.bf16.xpose.msra.mxu0 0
        %1330 = vmatprep.subr.bf16.mxu0 0
        %1331 = vmatpush1.bf16.xpose.msra.mxu0 0
        %1332 = vmatprep.subr.bf16.mxu0 0
        %1333 = vmatpush1.bf16.xpose.msra.mxu0 0
        %1334 = vmatprep.subr.bf16.mxu0 0
        %1335 = vmatpush1.bf16.xpose.msra.mxu0 0
        %1336 = vmatprep.mubr.bf16.mxu0 0
        %1337 = vmatmul.mubr.bf16.gmra.mrb[0].mxu0 %v1275
        %v1338 = vpop.f32.mrb[0].mxu0
        %v1339 = vadd.f32 0.0, %v1338
        %v1340 = vpop.f32.mrb[0].mxu0
        %v1341 = vadd.f32 0.0, %v1340
        %v1342 = vpop.f32.mrb[0].mxu0
        %v1343 = vpop.f32.mrb[0].mxu0
        %1344 = vdwg.mxu0
        %v1347 = vrot.slane %v1339, 1
        %v1348 = vrot.slane %v1341, 1
        %v1351 = vsel %vm766, %v1339, %v1347
        %v1352 = vsel %vm767, %v1341, %v1348
        %v1353 = vlaneseq
        %v1354 = vshrl.u32 %v1353, 7
        %v1355 = vsub.s32 0, %v1354
        %v1356 = vrot.slane %v1351, %v1355
        %v1357 = vlaneseq
        %v1358 = vshrl.u32 %v1357, 7
        %v1359 = vsub.s32 0, %v1358
        %v1360 = vrot.slane %v1352, %v1359
        %1361 = vrot.lane.b32.xlu0 %v717, 112
        %v1362 = vpop.permute.xlu0 %1361
        %v1364 = vsel %vm768, %v1362, 0
        %1366 = vmatprep.subr.bf16.mxu0 0
        %1367 = vmatpush1.bf16.xpose.msra.mxu0 %v1278
        %1368 = vmatprep.subr.bf16.mxu0 0
        %1369 = vmatpush1.bf16.xpose.msra.mxu0 %v1281
        %1370 = vmatprep.subr.bf16.mxu0 0
        %1371 = vmatpush1.bf16.xpose.msra.mxu0 %v1284
        %1372 = vmatprep.subr.bf16.mxu0 0
        %1373 = vmatpush1.bf16.xpose.msra.mxu0 %v1287
        %1374 = vmatprep.subr.bf16.mxu0 0
        %1375 = vmatpush1.bf16.xpose.msra.mxu0 %v1290
        %1376 = vmatprep.subr.bf16.mxu0 0
        %1377 = vmatpush1.bf16.xpose.msra.mxu0 %v1293
        %1378 = vmatprep.subr.bf16.mxu0 0
        %1379 = vmatpush1.bf16.xpose.msra.mxu0 %v1296
        %1380 = vmatprep.subr.bf16.mxu0 0
        %1381 = vmatpush1.bf16.xpose.msra.mxu0 %v1299
        %1382 = vmatprep.subr.bf16.mxu0 0
        %1383 = vmatpush1.bf16.xpose.msra.mxu0 %v1302
        %1384 = vmatprep.subr.bf16.mxu0 0
        %1385 = vmatpush1.bf16.xpose.msra.mxu0 0
        %1386 = vmatprep.subr.bf16.mxu0 0
        %1387 = vmatpush1.bf16.xpose.msra.mxu0 0
        %1388 = vmatprep.subr.bf16.mxu0 0
        %1389 = vmatpush1.bf16.xpose.msra.mxu0 0
        %1390 = vmatprep.subr.bf16.mxu0 0
        %1391 = vmatpush1.bf16.xpose.msra.mxu0 0
        %1392 = vmatprep.subr.bf16.mxu0 0
        %1393 = vmatpush1.bf16.xpose.msra.mxu0 0
        %1394 = vmatprep.subr.bf16.mxu0 0
        %1395 = vmatpush1.bf16.xpose.msra.mxu0 0
        %1396 = vmatprep.subr.bf16.mxu0 0
        %1397 = vmatpush1.bf16.xpose.msra.mxu0 0
        %1398 = vmatprep.mubr.bf16.mxu0 0
        %1399 = vmatmul.mubr.bf16.gmra.mrb[0].mxu0 %v1364
        %v1400 = vpop.f32.mrb[0].mxu0
        %v1401 = vadd.f32 %v1356, %v1400
        %v1402 = vpop.f32.mrb[0].mxu0
        %v1403 = vadd.f32 %v1360, %v1402
        %v1404 = vpop.f32.mrb[0].mxu0
        %v1405 = vpop.f32.mrb[0].mxu0
        %1406 = vdwg.mxu0
        %1408 = vrot.lane.b32.xlu0 %v1401, 121
        %v1409 = vpop.permute.xlu0 %1408
        %1412 = vrot.lane.b32.xlu0 %v1409, 1
        %v1413 = vpop.permute.xlu0 %1412
        %v1415 = vsel %vm907, %v1413, %v1409
        %1417 = vrot.lane.b32.xlu0 %v1415, 2
        %v1418 = vpop.permute.xlu0 %1417
        %v1420 = vsel %vm914, %v1418, %v1415
        %1422 = vrot.lane.b32.xlu0 %v1420, 4
        %v1423 = vpop.permute.xlu0 %1422
        %v1425 = vsel %vm921, %v1423, %v1420
        %v1426 = vadd.f32 %v1403, %v1425
        %v1427 = vmul.f32 %v1426, 0.35355338
        %v1428 = vsel %vm764, -1e+09, %v1427
        %v1429 = vsel %vm768, %v1428, -inf
        %1430 = vmax.xlane.f32.xlu0 %v1429
        %v1431 = vpop.xlane.xlu0 %1430
        %v1432 = vsub.f32 %v1428, %v1431
        %v1433 = vmul.f32 %v1432, 1.442695
        %v1434 = vpow.pop %v1433
        %v1435 = vsel %vm768, %v1434, 0.0
        %1436 = vadd.xlane.f32.xlu0 %v1435
        %v1437 = vpop.xlane.xlu0 %1436
        %v1438 = vrcp.pop %v1437
        %v1439 = vmul.f32 %v1434, %v1438
        %v1440 = vpack.c.bf16 %v1439, %v1439
        %1441 = vrot.lane.b32.xlu0 %v718, 112
        %v1442 = vpop.permute.xlu0 %1441
        %v1444 = vsel %vm768, %v1440, 0
        %v1447 = vsel %vm945, %v1442, 0
        %1449 = vmatprep.subr.bf16.mxu0 0
        %1450 = vmatpush1.bf16.msra.mxu0 %v1447
        %1451 = vmatprep.subr.bf16.mxu0 0
        %1452 = vmatpush1.bf16.msra.mxu0 0
        %1453 = vmatprep.subr.bf16.mxu0 0
        %1454 = vmatpush1.bf16.msra.mxu0 0
        %1455 = vmatprep.subr.bf16.mxu0 0
        %1456 = vmatpush1.bf16.msra.mxu0 0
        %1457 = vmatprep.subr.bf16.mxu0 0
        %1458 = vmatpush1.bf16.msra.mxu0 0
        %1459 = vmatprep.subr.bf16.mxu0 0
        %1460 = vmatpush1.bf16.msra.mxu0 0
        %1461 = vmatprep.subr.bf16.mxu0 0
        %1462 = vmatpush1.bf16.msra.mxu0 0
        %1463 = vmatprep.subr.bf16.mxu0 0
        %1464 = vmatpush1.bf16.msra.mxu0 0
        %1465 = vmatprep.subr.bf16.mxu0 0
        %1466 = vmatpush1.bf16.msra.mxu0 0
        %1467 = vmatprep.subr.bf16.mxu0 0
        %1468 = vmatpush1.bf16.msra.mxu0 0
        %1469 = vmatprep.subr.bf16.mxu0 0
        %1470 = vmatpush1.bf16.msra.mxu0 0
        %1471 = vmatprep.subr.bf16.mxu0 0
        %1472 = vmatpush1.bf16.msra.mxu0 0
        %1473 = vmatprep.subr.bf16.mxu0 0
        %1474 = vmatpush1.bf16.msra.mxu0 0
        %1475 = vmatprep.subr.bf16.mxu0 0
        %1476 = vmatpush1.bf16.msra.mxu0 0
        %1477 = vmatprep.subr.bf16.mxu0 0
        %1478 = vmatpush1.bf16.msra.mxu0 0
        %1479 = vmatprep.subr.bf16.mxu0 0
        %1480 = vmatpush1.bf16.msra.mxu0 0
        %1481 = vmatprep.mubr.bf16.mxu0 0
        %1482 = vmatmul.mubr.bf16.gmra.mrb[0].mxu0 %v1444
        %v1483 = vpop.f32.mrb[0].mxu0
        %v1484 = vadd.f32 0.0, %v1483
        %v1485 = vpop.f32.mrb[0].mxu0
        %v1486 = vpop.f32.mrb[0].mxu0
        %v1487 = vpop.f32.mrb[0].mxu0
        %1488 = vdwg.mxu0
        %v1489 = vpack.c.bf16 %v1484, %v1484
        %v1491 = vunpack.c.l.b16 %v1489
        %v1492 = vpack.c.b16 %v1491, %v1491
        %1493 = vrot.lane.b32.xlu0 %v1492, 16
        %v1494 = vpop.permute.xlu0 %1493
        %vm1496 = vcmask 191616
        %1497 = vst.msk [vmem:[#allocation2] sm:$0xf] %vm1496, %v1494
        %1498 = vrot.lane.b32.xlu0 %v1006, 104
        %v1499 = vpop.permute.xlu0 %1498
        %1500 = vrot.lane.b32.xlu0 %v752, 104
        %v1501 = vpop.permute.xlu0 %1500
        %1502 = vrot.lane.b32.xlu0 %v753, 104
        %v1503 = vpop.permute.xlu0 %1502
        %1504 = vrot.lane.b32.xlu0 %v754, 104
        %v1505 = vpop.permute.xlu0 %1504
        %1506 = vrot.lane.b32.xlu0 %v755, 104
        %v1507 = vpop.permute.xlu0 %1506
        %1508 = vrot.lane.b32.xlu0 %v756, 104
        %v1509 = vpop.permute.xlu0 %1508
        %1510 = vrot.lane.b32.xlu0 %v757, 104
        %v1511 = vpop.permute.xlu0 %1510
        %1512 = vrot.lane.b32.xlu0 %v758, 104
        %v1513 = vpop.permute.xlu0 %1512
        %1514 = vrot.lane.b32.xlu0 %v759, 104
        %v1515 = vpop.permute.xlu0 %1514
        %1516 = vrot.lane.b32.xlu0 %v719, 104
        %v1517 = vpop.permute.xlu0 %1516
        %v1519 = vsel %vm768, %v1499, 0
        %v1522 = vsel %vm768, %v1501, 0
        %v1525 = vsel %vm768, %v1503, 0
        %v1528 = vsel %vm768, %v1505, 0
        %v1531 = vsel %vm768, %v1507, 0
        %v1534 = vsel %vm768, %v1509, 0
        %v1537 = vsel %vm768, %v1511, 0
        %v1540 = vsel %vm768, %v1513, 0
        %v1543 = vsel %vm768, %v1515, 0
        %v1546 = vsel %vm768, %v1517, 0
        %1548 = vmatprep.subr.bf16.mxu0 0
        %1549 = vmatpush1.bf16.xpose.msra.mxu0 %v1522
        %1550 = vmatprep.subr.bf16.mxu0 0
        %1551 = vmatpush1.bf16.xpose.msra.mxu0 %v1525
        %1552 = vmatprep.subr.bf16.mxu0 0
        %1553 = vmatpush1.bf16.xpose.msra.mxu0 %v1528
        %1554 = vmatprep.subr.bf16.mxu0 0
        %1555 = vmatpush1.bf16.xpose.msra.mxu0 %v1531
        %1556 = vmatprep.subr.bf16.mxu0 0
        %1557 = vmatpush1.bf16.xpose.msra.mxu0 %v1534
        %1558 = vmatprep.subr.bf16.mxu0 0
        %1559 = vmatpush1.bf16.xpose.msra.mxu0 %v1537
        %1560 = vmatprep.subr.bf16.mxu0 0
        %1561 = vmatpush1.bf16.xpose.msra.mxu0 %v1540
        %1562 = vmatprep.subr.bf16.mxu0 0
        %1563 = vmatpush1.bf16.xpose.msra.mxu0 %v1543
        %1564 = vmatprep.subr.bf16.mxu0 0
        %1565 = vmatpush1.bf16.xpose.msra.mxu0 %v1546
        %1566 = vmatprep.subr.bf16.mxu0 0
        %1567 = vmatpush1.bf16.xpose.msra.mxu0 0
        %1568 = vmatprep.subr.bf16.mxu0 0
        %1569 = vmatpush1.bf16.xpose.msra.mxu0 0
        %1570 = vmatprep.subr.bf16.mxu0 0
        %1571 = vmatpush1.bf16.xpose.msra.mxu0 0
        %1572 = vmatprep.subr.bf16.mxu0 0
        %1573 = vmatpush1.bf16.xpose.msra.mxu0 0
        %1574 = vmatprep.subr.bf16.mxu0 0
        %1575 = vmatpush1.bf16.xpose.msra.mxu0 0
        %1576 = vmatprep.subr.bf16.mxu0 0
        %1577 = vmatpush1.bf16.xpose.msra.mxu0 0
        %1578 = vmatprep.subr.bf16.mxu0 0
        %1579 = vmatpush1.bf16.xpose.msra.mxu0 0
        %1580 = vmatprep.mubr.bf16.mxu0 0
        %1581 = vmatmul.mubr.bf16.gmra.mrb[0].mxu0 %v1519
        %v1582 = vpop.f32.mrb[0].mxu0
        %v1583 = vadd.f32 0.0, %v1582
        %v1584 = vpop.f32.mrb[0].mxu0
        %v1585 = vadd.f32 0.0, %v1584
        %v1586 = vpop.f32.mrb[0].mxu0
        %v1587 = vpop.f32.mrb[0].mxu0
        %1588 = vdwg.mxu0
        %v1591 = vrot.slane %v1583, 1
        %v1592 = vrot.slane %v1585, 1
        %v1595 = vsel %vm766, %v1583, %v1591
        %v1596 = vsel %vm767, %v1585, %v1592
        %v1597 = vlaneseq
        %v1598 = vshrl.u32 %v1597, 7
        %v1599 = vsub.s32 0, %v1598
        %v1600 = vrot.slane %v1595, %v1599
        %v1601 = vlaneseq
        %v1602 = vshrl.u32 %v1601, 7
        %v1603 = vsub.s32 0, %v1602
        %v1604 = vrot.slane %v1596, %v1603
        %1605 = vrot.lane.b32.xlu0 %v717, 104
        %v1606 = vpop.permute.xlu0 %1605
        %v1608 = vsel %vm768, %v1606, 0
        %1610 = vmatprep.subr.bf16.mxu0 0
        %1611 = vmatpush1.bf16.xpose.msra.mxu0 %v1522
        %1612 = vmatprep.subr.bf16.mxu0 0
        %1613 = vmatpush1.bf16.xpose.msra.mxu0 %v1525
        %1614 = vmatprep.subr.bf16.mxu0 0
        %1615 = vmatpush1.bf16.xpose.msra.mxu0 %v1528
        %1616 = vmatprep.subr.bf16.mxu0 0
        %1617 = vmatpush1.bf16.xpose.msra.mxu0 %v1531
        %1618 = vmatprep.subr.bf16.mxu0 0
        %1619 = vmatpush1.bf16.xpose.msra.mxu0 %v1534
        %1620 = vmatprep.subr.bf16.mxu0 0
        %1621 = vmatpush1.bf16.xpose.msra.mxu0 %v1537
        %1622 = vmatprep.subr.bf16.mxu0 0
        %1623 = vmatpush1.bf16.xpose.msra.mxu0 %v1540
        %1624 = vmatprep.subr.bf16.mxu0 0
        %1625 = vmatpush1.bf16.xpose.msra.mxu0 %v1543
        %1626 = vmatprep.subr.bf16.mxu0 0
        %1627 = vmatpush1.bf16.xpose.msra.mxu0 %v1546
        %1628 = vmatprep.subr.bf16.mxu0 0
        %1629 = vmatpush1.bf16.xpose.msra.mxu0 0
        %1630 = vmatprep.subr.bf16.mxu0 0
        %1631 = vmatpush1.bf16.xpose.msra.mxu0 0
        %1632 = vmatprep.subr.bf16.mxu0 0
        %1633 = vmatpush1.bf16.xpose.msra.mxu0 0
        %1634 = vmatprep.subr.bf16.mxu0 0
        %1635 = vmatpush1.bf16.xpose.msra.mxu0 0
        %1636 = vmatprep.subr.bf16.mxu0 0
        %1637 = vmatpush1.bf16.xpose.msra.mxu0 0
        %1638 = vmatprep.subr.bf16.mxu0 0
        %1639 = vmatpush1.bf16.xpose.msra.mxu0 0
        %1640 = vmatprep.subr.bf16.mxu0 0
        %1641 = vmatpush1.bf16.xpose.msra.mxu0 0
        %1642 = vmatprep.mubr.bf16.mxu0 0
        %1643 = vmatmul.mubr.bf16.gmra.mrb[0].mxu0 %v1608
        %v1644 = vpop.f32.mrb[0].mxu0
        %v1645 = vadd.f32 %v1600, %v1644
        %v1646 = vpop.f32.mrb[0].mxu0
        %v1647 = vadd.f32 %v1604, %v1646
        %v1648 = vpop.f32.mrb[0].mxu0
        %v1649 = vpop.f32.mrb[0].mxu0
        %1650 = vdwg.mxu0
        %1652 = vrot.lane.b32.xlu0 %v1645, 121
        %v1653 = vpop.permute.xlu0 %1652
        %1656 = vrot.lane.b32.xlu0 %v1653, 1
        %v1657 = vpop.permute.xlu0 %1656
        %v1659 = vsel %vm907, %v1657, %v1653
        %1661 = vrot.lane.b32.xlu0 %v1659, 2
        %v1662 = vpop.permute.xlu0 %1661
        %v1664 = vsel %vm914, %v1662, %v1659
        %1666 = vrot.lane.b32.xlu0 %v1664, 4
        %v1667 = vpop.permute.xlu0 %1666
        %v1669 = vsel %vm921, %v1667, %v1664
        %v1670 = vadd.f32 %v1647, %v1669
        %v1671 = vmul.f32 %v1670, 0.35355338
        %v1672 = vsel %vm764, -1e+09, %v1671
        %v1673 = vsel %vm768, %v1672, -inf
        %1674 = vmax.xlane.f32.xlu0 %v1673
        %v1675 = vpop.xlane.xlu0 %1674
        %v1676 = vsub.f32 %v1672, %v1675
        %v1677 = vmul.f32 %v1676, 1.442695
        %v1678 = vpow.pop %v1677
        %v1679 = vsel %vm768, %v1678, 0.0
        %1680 = vadd.xlane.f32.xlu0 %v1679
        %v1681 = vpop.xlane.xlu0 %1680
        %v1682 = vrcp.pop %v1681
        %v1683 = vmul.f32 %v1678, %v1682
        %v1684 = vpack.c.bf16 %v1683, %v1683
        %1685 = vrot.lane.b32.xlu0 %v718, 104
        %v1686 = vpop.permute.xlu0 %1685
        %v1688 = vsel %vm768, %v1684, 0
        %v1691 = vsel %vm945, %v1686, 0
        %1693 = vmatprep.subr.bf16.mxu0 0
        %1694 = vmatpush1.bf16.msra.mxu0 %v1691
        %1695 = vmatprep.subr.bf16.mxu0 0
        %1696 = vmatpush1.bf16.msra.mxu0 0
        %1697 = vmatprep.subr.bf16.mxu0 0
        %1698 = vmatpush1.bf16.msra.mxu0 0
        %1699 = vmatprep.subr.bf16.mxu0 0
        %1700 = vmatpush1.bf16.msra.mxu0 0
        %1701 = vmatprep.subr.bf16.mxu0 0
        %1702 = vmatpush1.bf16.msra.mxu0 0
        %1703 = vmatprep.subr.bf16.mxu0 0
        %1704 = vmatpush1.bf16.msra.mxu0 0
        %1705 = vmatprep.subr.bf16.mxu0 0
        %1706 = vmatpush1.bf16.msra.mxu0 0
        %1707 = vmatprep.subr.bf16.mxu0 0
        %1708 = vmatpush1.bf16.msra.mxu0 0
        %1709 = vmatprep.subr.bf16.mxu0 0
        %1710 = vmatpush1.bf16.msra.mxu0 0
        %1711 = vmatprep.subr.bf16.mxu0 0
        %1712 = vmatpush1.bf16.msra.mxu0 0
        %1713 = vmatprep.subr.bf16.mxu0 0
        %1714 = vmatpush1.bf16.msra.mxu0 0
        %1715 = vmatprep.subr.bf16.mxu0 0
        %1716 = vmatpush1.bf16.msra.mxu0 0
        %1717 = vmatprep.subr.bf16.mxu0 0
        %1718 = vmatpush1.bf16.msra.mxu0 0
        %1719 = vmatprep.subr.bf16.mxu0 0
        %1720 = vmatpush1.bf16.msra.mxu0 0
        %1721 = vmatprep.subr.bf16.mxu0 0
        %1722 = vmatpush1.bf16.msra.mxu0 0
        %1723 = vmatprep.subr.bf16.mxu0 0
        %1724 = vmatpush1.bf16.msra.mxu0 0
        %1725 = vmatprep.mubr.bf16.mxu0 0
        %1726 = vmatmul.mubr.bf16.gmra.mrb[0].mxu0 %v1688
        %v1727 = vpop.f32.mrb[0].mxu0
        %v1728 = vadd.f32 0.0, %v1727
        %v1729 = vpop.f32.mrb[0].mxu0
        %v1730 = vpop.f32.mrb[0].mxu0
        %v1731 = vpop.f32.mrb[0].mxu0
        %1732 = vdwg.mxu0
        %v1733 = vpack.c.bf16 %v1728, %v1728
        %v1735 = vunpack.c.l.b16 %v1733
        %v1736 = vpack.c.b16 %v1735, %v1735
        %1737 = vrot.lane.b32.xlu0 %v1736, 24
        %v1738 = vpop.permute.xlu0 %1737
        %vm1740 = vcmask 257216
        %1741 = vst.msk [vmem:[#allocation2] sm:$0xf] %vm1740, %v1738
        %v1742 = vld [vmem:[#allocation2] sm:$0xf]
        %v1743 = vld [vmem:[%s12] sm:$0xf]
        %v1744 = vld [vmem:[%s12 + $0x4] sm:$0xf]
        %v1745 = vld [vmem:[%s12 + $0x8] sm:$0xf]
        %v1746 = vld [vmem:[%s12 + $0xc] sm:$0xf]
        %v1747 = vld [vmem:[%s13] sm:$0x1]
        %v1749 = vlaneseq
        %v1750 = vshrl.u32 %v1749, 7
        %v1751 = vsub.s32 0, %v1750
        %v1752 = vrot.slane %v1747, %v1751
        %v1758 = vunpack.c.l.b16 %v1743
        %v1759 = vunpack.c.l.b16 %v1744
        %v1760 = vunpack.c.l.b16 %v1745
        %v1761 = vunpack.c.l.b16 %v1746
        %v1762 = vpack.c.b16 %v1759, %v1758
        %v1763 = vpack.c.b16 %v1761, %v1760
        %v1767 = vsel %vm541, %v1742, 0
        %1769 = vmatprep.subr.bf16.mxu0 0
        %1770 = vmatpush1.bf16.msra.mxu0 %v1762
        %1771 = vmatprep.subr.bf16.mxu0 0
        %1772 = vmatpush1.bf16.msra.mxu0 %v1763
        %1773 = vmatprep.subr.bf16.mxu0 0
        %1774 = vmatpush1.bf16.msra.mxu0 0
        %1775 = vmatprep.subr.bf16.mxu0 0
        %1776 = vmatpush1.bf16.msra.mxu0 0
        %1777 = vmatprep.subr.bf16.mxu0 0
        %1778 = vmatpush1.bf16.msra.mxu0 0
        %1779 = vmatprep.subr.bf16.mxu0 0
        %1780 = vmatpush1.bf16.msra.mxu0 0
        %1781 = vmatprep.subr.bf16.mxu0 0
        %1782 = vmatpush1.bf16.msra.mxu0 0
        %1783 = vmatprep.subr.bf16.mxu0 0
        %1784 = vmatpush1.bf16.msra.mxu0 0
        %1785 = vmatprep.subr.bf16.mxu0 0
        %1786 = vmatpush1.bf16.msra.mxu0 0
        %1787 = vmatprep.subr.bf16.mxu0 0
        %1788 = vmatpush1.bf16.msra.mxu0 0
        %1789 = vmatprep.subr.bf16.mxu0 0
        %1790 = vmatpush1.bf16.msra.mxu0 0
        %1791 = vmatprep.subr.bf16.mxu0 0
        %1792 = vmatpush1.bf16.msra.mxu0 0
        %1793 = vmatprep.subr.bf16.mxu0 0
        %1794 = vmatpush1.bf16.msra.mxu0 0
        %1795 = vmatprep.subr.bf16.mxu0 0
        %1796 = vmatpush1.bf16.msra.mxu0 0
        %1797 = vmatprep.subr.bf16.mxu0 0
        %1798 = vmatpush1.bf16.msra.mxu0 0
        %1799 = vmatprep.subr.bf16.mxu0 0
        %1800 = vmatpush1.bf16.msra.mxu0 0
        %1801 = vmatprep.mubr.bf16.mxu0 0
        %1802 = vmatmul.mubr.bf16.gmra.mrb[0].mxu0 %v1767
        %v1803 = vpop.f32.mrb[0].mxu0
        %v1804 = vadd.f32 %v1752, %v1803
        %v1805 = vpop.f32.mrb[0].mxu0
        %v1806 = vpop.f32.mrb[0].mxu0
        %v1807 = vpop.f32.mrb[0].mxu0
        %1808 = vdwg.mxu0
        %1809 = vst.msk [vmem:[%s479] sm:$0xff] %vm541, %v1804
        %s1810 = sand.u32 %s335, 1
        %s1811 = scalar_lea.sflag [#allocation6], %s1810
        %s1812 = sand.u32 %s335, 1
        %s1813 = smul.addr %s1812, 8
        %s1814 = scalar_lea.vmem [#allocation5], %s1813
        // Predicated region
        $region73: #{tpu_custom_call.1} parent=71 // pred_check
          %p1815 = pneg %p345
        $region74: #{tpu_custom_call.1} parent=71 // pred_check_branch
          %1817 = sbr.rel (%p1815) target = $region76
        $region75: #{tpu_custom_call.1} parent=71 // pred_region
          %s1819 = ssub.s32 128, 128
          %1820 = vsyncadd %s1811, %s1819
          %s1821 = smul.addr %s34, 128
          %s1822 = scalar_lea.hbm %s14, %s1821
          %s1824 = sshll.u32 %s1814, 4
          %s1825 = int_to_ptr.vmem [resolvable:$true] %s1824
          %1827 = dma.vmem_to_hbm [thread:$0]  %s1825, 128, %s1822, %s1811
        $region76: #{tpu_custom_call.1} parent=71 // pred_fallthru
          _
      $region72: #{tpu_custom_call.1} parent=5 // pred_fallthru
        _
      %p1828 = scmp.le.s32.totalorder 2, %s29
      // Predicated region
      $region77: #{tpu_custom_call.1} parent=5 // pred_check
        %p1829 = pneg %p1828
      $region78: #{tpu_custom_call.1} parent=5 // pred_check_branch
        %1831 = sbr.rel (%p1829) target = $region80
      $region79: #{tpu_custom_call.1} parent=5 // pred_region
        %s1832 = ssub.s32 %s29, 2
        // Predicated region
        $region81: #{tpu_custom_call.1} parent=79 // pred_check
          %p1833 = pneg %p351
        $region82: #{tpu_custom_call.1} parent=79 // pred_check_branch
          %1835 = sbr.rel (%p1833) target = $region84
        $region83: #{tpu_custom_call.1} parent=79 // pred_region
          %s1836 = sand.u32 %s336, 1
          %s1837 = scalar_lea.sflag [#allocation6], %s1836
          %s1838 = sand.u32 %s336, 1
          %s1839 = smul.addr %s1838, 8
          %s1840 = scalar_lea.vmem [#allocation5], %s1839
          %1841 = dma.done %s1837, 128
        $region84: #{tpu_custom_call.1} parent=79 // pred_fallthru
          _
      $region80: #{tpu_custom_call.1} parent=5 // pred_fallthru
        _
    $region6: #{tpu_custom_call.1} parent=1 // loop_footer
      %s33 = sadd.s32 1, %s29
    $region7: #{tpu_custom_call.1} parent=1 // loop_footer_branch
      %28 = sbr.rel target = $region3
    $region8: #{tpu_custom_call.1} parent=1 // loop_exit
      _
    %1842 = vsyncpa [#allocation6], 1
    %s1843 = scalar_lea.sflag [#allocation6], 1
    %1844 = vsyncpa %s1843, 1

</llo_original>
